<compile_context>
chip_gen: v7x
topology: tpu7x:2x2x1
jax: 0.10.0
libtpu: 0.0.40
codegen_flags: <defaults>
</compile_context>

<pallas_src>
import functools

import jax
import jax.numpy as jnp
from jax import lax
from jax.experimental import pallas as pl
from jax.experimental.pallas import tpu as pltpu


_LANE = 128
_TM_CAP = 512                       # row tile cap (85%+ of HBM roofline)
_VMEM_LIMIT = 48 * 1024 * 1024      # headroom-safe on v7x's 64 MiB VMEM


def _round_up(v, m):
    return (v + m - 1) // m * m


def _pad_last(a, target):
    pad = target - a.shape[-1]
    if pad == 0:
        return a
    widths = [(0, 0)] * (a.ndim - 1) + [(0, pad)]
    return jnp.pad(a, widths)


def _compiler_params():
    return pltpu.CompilerParams(
        dimension_semantics=("parallel",),
        vmem_limit_bytes=_VMEM_LIMIT)


# ----------------------------- Pallas kernels ------------------------------

def _matmul_bn_kernel(x_ref, w_ref, scale_ref, bias_ref, o_ref, *, relu):
    # out = maybe_relu((x @ w) * scale + bias); bf16 MXU inputs, f32 accum.
    acc = jnp.dot(x_ref[...], w_ref[...], preferred_element_type=jnp.float32)
    y = acc * scale_ref[...] + bias_ref[...]
    if relu:
        y = jnp.maximum(y, 0.0)
    o_ref[...] = y.astype(o_ref.dtype)


def _dual_matmul_bn_add_relu_kernel(a_ref, b_ref, wa_ref, wb_ref,
                                    sa_ref, sb_ref, bias_ref, o_ref):
    # out = relu((a @ wa) * sa + (b @ wb) * sb + bias)
    # (conv3+bn3 fused with downsample conv+bn and the residual add.)
    acc_a = jnp.dot(a_ref[...], wa_ref[...], preferred_element_type=jnp.float32)
    acc_b = jnp.dot(b_ref[...], wb_ref[...], preferred_element_type=jnp.float32)
    y = acc_a * sa_ref[...] + acc_b * sb_ref[...] + bias_ref[...]
    o_ref[...] = jnp.maximum(y, 0.0).astype(o_ref.dtype)


def _conv3x3_bn_relu_kernel(x_ref, w_ref, scale_ref, bias_ref, o_ref, *,
                            stride, n_kq, Ho, Wo):
    # x_ref: (1, Hp//s, s, Wp//s, s*C)  stride-packed, spatially padded tile
    # w_ref: (3, n_kq, s*C, Cout)       zero-padded "effective" 3x3 weights
    # The 3x3 conv is 3*n_kq accumulating matmuls over contiguous tap windows
    # of the VMEM-resident tile (no im2col in HBM, no strided loads).
    cout = o_ref.shape[-1]
    acc = jnp.zeros((Ho * Wo, cout), jnp.float32)
    for ky in range(3):
        a0, b = ky // stride, ky % stride
        for kq in range(n_kq):
            tap = x_ref[0, a0:a0 + Ho, b, kq:kq + Wo, :]       # (Ho, Wo, s*C)
            tap = tap.reshape(Ho * Wo, tap.shape[-1])
            acc = acc + jnp.dot(tap, w_ref[ky, kq],
                                preferred_element_type=jnp.float32)
    y = acc * scale_ref[...] + bias_ref[...]
    o_ref[...] = jnp.maximum(y, 0.0).astype(o_ref.dtype)


# ------------------------------ Pallas wrappers ------------------------------

def fused_matmul_bn(x, w, scale, bias, *, relu, out_dtype):
    """maybe_relu((x @ w) * scale + bias), row-tiled fused Pallas matmul."""
    M, K = x.shape
    N = w.shape[1]
    TM = min(_TM_CAP, M)
    grid = (pl.cdiv(M, TM),)
    scale2 = scale.reshape(1, N).astype(jnp.float32)
    bias2 = bias.reshape(1, N).astype(jnp.float32)
    return pl.pallas_call(
        functools.partial(_matmul_bn_kernel, relu=relu),
        out_shape=jax.ShapeDtypeStruct((M, N), out_dtype),
        grid=grid,
        in_specs=[
            pl.BlockSpec((TM, K), lambda i: (i, 0)),
            pl.BlockSpec((K, N), lambda i: (0, 0)),
            pl.BlockSpec((1, N), lambda i: (0, 0)),
            pl.BlockSpec((1, N), lambda i: (0, 0)),
        ],
        out_specs=pl.BlockSpec((TM, N), lambda i: (i, 0)),
        compiler_params=_compiler_params(),
    )(x.astype(jnp.bfloat16), w.astype(jnp.bfloat16), scale2, bias2)


def fused_dual_matmul_bn_add_relu(a, b, wa, wb, sa, sb, bias, *, out_dtype):
    """relu((a @ wa) * sa + (b @ wb) * sb + bias)."""
    M, Ka = a.shape
    Kb = b.shape[1]
    N = wa.shape[1]
    TM = min(_TM_CAP, M)
    grid = (pl.cdiv(M, TM),)
    sa2 = sa.reshape(1, N).astype(jnp.float32)
    sb2 = sb.reshape(1, N).astype(jnp.float32)
    bias2 = bias.reshape(1, N).astype(jnp.float32)
    return pl.pallas_call(
        _dual_matmul_bn_add_relu_kernel,
        out_shape=jax.ShapeDtypeStruct((M, N), out_dtype),
        grid=grid,
        in_specs=[
            pl.BlockSpec((TM, Ka), lambda i: (i, 0)),
            pl.BlockSpec((TM, Kb), lambda i: (i, 0)),
            pl.BlockSpec((Ka, N), lambda i: (0, 0)),
            pl.BlockSpec((Kb, N), lambda i: (0, 0)),
            pl.BlockSpec((1, N), lambda i: (0, 0)),
            pl.BlockSpec((1, N), lambda i: (0, 0)),
            pl.BlockSpec((1, N), lambda i: (0, 0)),
        ],
        out_specs=pl.BlockSpec((TM, N), lambda i: (i, 0)),
        compiler_params=_compiler_params(),
    )(a.astype(jnp.bfloat16), b.astype(jnp.bfloat16),
      wa.astype(jnp.bfloat16), wb.astype(jnp.bfloat16), sa2, sb2, bias2)


def fused_conv3x3_bn_relu(xr, w_eff, scale, bias, *, stride, n_kq, Ho, Wo):
    """3x3 conv (stride; spatial pad already applied) + BN + ReLU."""
    N, HpS, sp, WqS, sC = xr.shape
    cout = w_eff.shape[-1]
    scale2 = scale.reshape(1, cout).astype(jnp.float32)
    bias2 = bias.reshape(1, cout).astype(jnp.float32)
    kernel = functools.partial(_conv3x3_bn_relu_kernel, stride=stride,
                               n_kq=n_kq, Ho=Ho, Wo=Wo)
    return pl.pallas_call(
        kernel,
        out_shape=jax.ShapeDtypeStruct((N * Ho * Wo, cout), jnp.bfloat16),
        grid=(N,),
        in_specs=[
            pl.BlockSpec((1, HpS, sp, WqS, sC), lambda n: (n, 0, 0, 0, 0)),
            pl.BlockSpec((3, n_kq, sC, cout), lambda n: (0, 0, 0, 0)),
            pl.BlockSpec((1, cout), lambda n: (0, 0)),
            pl.BlockSpec((1, cout), lambda n: (0, 0)),
        ],
        out_specs=pl.BlockSpec((Ho * Wo, cout), lambda n: (n, 0)),
        compiler_params=_compiler_params(),
    )(xr.astype(jnp.bfloat16), w_eff.astype(jnp.bfloat16), scale2, bias2)


# ------------------------------ glue helpers -------------------------------

def _fold_bn(bn, eps=1e-5):
    gamma, beta, mean, var = bn
    scale = gamma / jnp.sqrt(var + eps)
    return scale, beta - mean * scale


# --------------------------- bottleneck forward -----------------------------

def bottleneck_forward(x_nchw, params, stride):
    s = int(stride)
    x = jnp.transpose(x_nchw, (0, 2, 3, 1)).astype(jnp.float32)     # -> NHWC
    N, H, W, Cin = x.shape
    Cmid = params["w1"].shape[1]
    Cout = params["w3"].shape[1]
    CmidP = _round_up(Cmid, _LANE)          # lane-dense output channel counts
    CoutP = _round_up(Cout, _LANE)

    s1, b1 = _fold_bn(params["bn1"])
    s2, b2 = _fold_bn(params["bn2"])
    s3, b3 = _fold_bn(params["bn3"])
    sd, bd = _fold_bn(params["bnd"])

    # ---- conv1 (1x1) + bn1 + relu : fused Pallas matmul (bf16 out) ---------
    w1p = _pad_last(params["w1"], CmidP)
    out1 = fused_matmul_bn(x.reshape(-1, Cin), w1p,
                           _pad_last(s1, CmidP), _pad_last(b1, CmidP),
                           relu=True, out_dtype=jnp.bfloat16)
    out1 = out1.reshape(N, H, W, CmidP)

    # ---- conv2 (3x3, stride, pad=1) + bn2 + relu : in-kernel tap gather ----
    Ho = (H - 1) // s + 1
    Wo = (W - 1) // s + 1
    Hp, Wp = H + 2, W + 2
    ph, pw = (-Hp) % s, (-Wp) % s            # round padded dims up to stride
    xpad = jnp.pad(out1, ((0, 0), (1, 1 + ph), (1, 1 + pw), (0, 0)))
    Hp, Wp = Hp + ph, Wp + pw
    # Free (metadata-only) reinterpretation into a stride-packed layout:
    #   (N, Hp, Wp, C) -> (N, Hp/s, s, Wp/s, s*C)
    xr = xpad.reshape(N, Hp // s, s, Wp // s, s * CmidP)
    # Effective weights: tap (ky, kx) lives at [ky, kx//s, (kx%s)*CmidP + ci].
    n_kq = 2 // s + 1
    w_eff = jnp.zeros((3, n_kq, s * CmidP, CmidP), jnp.float32)
    for kx in range(3):
        r0 = (kx % s) * CmidP
        w_eff = w_eff.at[:, kx // s, r0:r0 + Cmid, :Cmid].set(
            params["w2"][:, kx])
    out2 = fused_conv3x3_bn_relu(xr, w_eff,
                                 _pad_last(s2, CmidP), _pad_last(b2, CmidP),
                                 stride=s, n_kq=n_kq, Ho=Ho, Wo=Wo)

    # ---- conv3 (1x1) + bn3 + downsample (1x1, stride) + bnd + add + relu ---
    xs = x[:, ::s, ::s, :].reshape(-1, Cin)                  # residual branch
    w3p = jnp.pad(params["w3"], ((0, CmidP - Cmid), (0, CoutP - Cout)))
    wdp = jnp.pad(params["wd"], ((0, 0), (0, CoutP - Cout)))
    out3 = fused_dual_matmul_bn_add_relu(
        out2, xs, w3p, wdp,
        _pad_last(s3, CoutP), _pad_last(sd, CoutP),
        _pad_last(b3 + bd, CoutP), out_dtype=jnp.float32)

    out3 = out3.reshape(N, Ho, Wo, CoutP)[..., :Cout]
    return jnp.transpose(out3, (0, 3, 1, 2))                 # -> NCHW


# ------------------------------ reference path ------------------------------

def ref_forward(x_nchw, params, stride, eps=1e-5):
    x = jnp.transpose(x_nchw, (0, 2, 3, 1)).astype(jnp.float32)

    def conv(y, w, s=1, p=0):
        return lax.conv_general_dilated(
            y, w, (s, s), [(p, p), (p, p)],
            dimension_numbers=("NHWC", "HWIO", "NHWC"))

    def bn(y, pr):
        g, b, m, v = pr
        return (y - m) / jnp.sqrt(v + eps) * g + b

    Cin = x.shape[-1]
    Cmid = params["w1"].shape[1]
    Cout = params["w3"].shape[1]
    out = jax.nn.relu(bn(conv(x, params["w1"].reshape(1, 1, Cin, Cmid)),
                         params["bn1"]))
    out = jax.nn.relu(bn(conv(out, params["w2"], stride, 1), params["bn2"]))
    out = bn(conv(out, params["w3"].reshape(1, 1, Cmid, Cout)), params["bn3"])
    res = bn(conv(x, params["wd"].reshape(1, 1, Cin, Cout), stride, 0),
             params["bnd"])
    out = jax.nn.relu(out + res)
    return jnp.transpose(out, (0, 3, 1, 2))


# --------------------------------- params -----------------------------------

def make_params(key, cin, cmid, expansion=4):
    cout = cmid * expansion
    ks = jax.random.split(key, 8)

    def bn_params(k, c):
        k1, k2, k3, k4 = jax.random.split(k, 4)
        gamma = 1.0 + 0.1 * jax.random.normal(k1, (c,), jnp.float32)
        beta = 0.1 * jax.random.normal(k2, (c,), jnp.float32)
        mean = 0.05 * jax.random.normal(k3, (c,), jnp.float32)
        var = 0.5 + jnp.abs(jax.random.normal(k4, (c,), jnp.float32))
        return gamma, beta, mean, var

    return dict(
        w1=0.2 * jax.random.normal(ks[0], (cin, cmid), jnp.float32),
        w2=0.2 * jax.random.normal(ks[1], (3, 3, cmid, cmid), jnp.float32),
        w3=0.2 * jax.random.normal(ks[2], (cmid, cout), jnp.float32),
        wd=0.2 * jax.random.normal(ks[3], (cin, cout), jnp.float32),
        bn1=bn_params(ks[4], cmid),
        bn2=bn_params(ks[5], cmid),
        bn3=bn_params(ks[6], cout),
        bnd=bn_params(ks[7], cout),
    )


# ----------------------------------- main ------------------------------------

if __name__ == "__main__":
    N, Cin, H, W = 2, 16, 16, 16
    Cmid, stride = 8, 2          # expansion = 4  ->  Cout = 32

    key = jax.random.PRNGKey(0)
    kp, kx = jax.random.split(key)
    params = make_params(kp, Cin, Cmid)
    x = jax.random.normal(kx, (N, Cin, H, W), jnp.float32)   # NCHW, like PyTorch

    fwd = jax.jit(functools.partial(bottleneck_forward, stride=stride))
    out = jax.block_until_ready(fwd(x, params))
    ref = jax.block_until_ready(ref_forward(x, params, stride))

    assert out.shape == (N, 4 * Cmid, H // stride, W // stride), out.shape
    # bf16 MXU inputs -> compare against the f32 reference with a loose bound.
    err = float(jnp.max(jnp.abs(out - ref)))
    assert err < 0.2, err
    print("KERNEL_OK")
</pallas_src>

<mosaic_0001>
module attributes {stable_mosaic.version = 11 : i64} {
  func.func @_matmul_bn_kernel(%arg0: i32, %arg1: memref<512x16xbf16, #tpu.memory_space<vmem>>, %arg2: memref<16x128xbf16, #tpu.memory_space<vmem>>, %arg3: memref<1x128xf32, #tpu.memory_space<vmem>>, %arg4: memref<1x128xf32, #tpu.memory_space<vmem>>, %arg5: memref<512x128xbf16, #tpu.memory_space<vmem>>) attributes {dimension_semantics = [#tpu.dimension_semantics<parallel>], iteration_bounds = array<i64: 1>, scalar_prefetch = 0 : i64, scratch_operands = 0 : i64, tpu.core_type = #tpu.core_type<tc>, window_params = [{transform_indices = @transform_0, window_bounds = array<i64: 512, 16>}, {pipeline_mode = #tpu.pipeline_mode<synchronous>, transform_indices = @transform_1, window_bounds = array<i64: 16, 128>}, {pipeline_mode = #tpu.pipeline_mode<synchronous>, transform_indices = @transform_2, window_bounds = array<i64: 1, 128>}, {pipeline_mode = #tpu.pipeline_mode<synchronous>, transform_indices = @transform_3, window_bounds = array<i64: 1, 128>}, {transform_indices = @transform_4, window_bounds = array<i64: 512, 128>}]} {
    %c0 = arith.constant 0 : index
    %c0_0 = arith.constant 0 : index
    %0 = vector.load %arg1[%c0, %c0_0] : memref<512x16xbf16, #tpu.memory_space<vmem>>, vector<512x16xbf16>
    %c0_1 = arith.constant 0 : index
    %c0_2 = arith.constant 0 : index
    %1 = vector.load %arg2[%c0_1, %c0_2] : memref<16x128xbf16, #tpu.memory_space<vmem>>, vector<16x128xbf16>
    %cst = arith.constant dense<0.000000e+00> : vector<512x128xf32>
    %2 = tpu.matmul %0, %1, %cst {dimension_numbers = #tpu.dot_dimension_numbers<[1], [0], [0], [1], [0, 0, 1, 1], [], []>} : vector<512x16xbf16>, vector<16x128xbf16>, vector<512x128xf32> -> vector<512x128xf32>
    %c0_3 = arith.constant 0 : index
    %c0_4 = arith.constant 0 : index
    %3 = vector.load %arg3[%c0_3, %c0_4] : memref<1x128xf32, #tpu.memory_space<vmem>>, vector<1x128xf32>
    %4 = vector.broadcast %3 : vector<1x128xf32> to vector<512x128xf32>
    %5 = arith.mulf %2, %4 : vector<512x128xf32>
    %c0_5 = arith.constant 0 : index
    %c0_6 = arith.constant 0 : index
    %6 = vector.load %arg4[%c0_5, %c0_6] : memref<1x128xf32, #tpu.memory_space<vmem>>, vector<1x128xf32>
    %7 = vector.broadcast %6 : vector<1x128xf32> to vector<512x128xf32>
    %8 = arith.addf %5, %7 : vector<512x128xf32>
    %cst_7 = arith.constant 0.000000e+00 : f32
    %9 = vector.broadcast %cst_7 : f32 to vector<512x128xf32>
    %10 = arith.maximumf %8, %9 : vector<512x128xf32>
    %11 = arith.truncf %10 : vector<512x128xf32> to vector<512x128xbf16>
    %c0_8 = arith.constant 0 : index
    %c0_9 = arith.constant 0 : index
    %12 = vector.load %arg5[%c0_8, %c0_9] : memref<512x128xbf16, #tpu.memory_space<vmem>>, vector<512x128xbf16>
    tpu.vector_store %arg5[%c0_8, %c0_9], %11 {strides = array<i32>} : memref<512x128xbf16, #tpu.memory_space<vmem>>, vector<512x128xbf16>,
    return
  }
  func.func @transform_0(%arg0: i32) -> (i32, i32) {
    %c0_i32 = arith.constant 0 : i32
    %c0_i32_0 = arith.constant 0 : i32
    return %arg0, %c0_i32 : i32, i32
  }
  func.func @transform_1(%arg0: i32) -> (i32, i32) {
    %c0_i32 = arith.constant 0 : i32
    %c0_i32_0 = arith.constant 0 : i32
    %c0_i32_1 = arith.constant 0 : i32
    return %c0_i32, %c0_i32_0 : i32, i32
  }
  func.func @transform_2(%arg0: i32) -> (i32, i32) {
    %c0_i32 = arith.constant 0 : i32
    %c0_i32_0 = arith.constant 0 : i32
    %c0_i32_1 = arith.constant 0 : i32
    return %c0_i32, %c0_i32_0 : i32, i32
  }
  func.func @transform_3(%arg0: i32) -> (i32, i32) {
    %c0_i32 = arith.constant 0 : i32
    %c0_i32_0 = arith.constant 0 : i32
    %c0_i32_1 = arith.constant 0 : i32
    return %c0_i32, %c0_i32_0 : i32, i32
  }
  func.func @transform_4(%arg0: i32) -> (i32, i32) {
    %c0_i32 = arith.constant 0 : i32
    %c0_i32_0 = arith.constant 0 : i32
    return %arg0, %c0_i32 : i32, i32
  }
}

module attributes {stable_mosaic.version = 11 : i64} {
  func.func @_conv3x3_bn_relu_kernel(%arg0: i32, %arg1: memref<1x9x2x9x256xbf16, #tpu.memory_space<vmem>>, %arg2: memref<3x2x256x128xbf16, #tpu.memory_space<vmem>>, %arg3: memref<1x128xf32, #tpu.memory_space<vmem>>, %arg4: memref<1x128xf32, #tpu.memory_space<vmem>>, %arg5: memref<64x128xbf16, #tpu.memory_space<vmem>>) attributes {dimension_semantics = [#tpu.dimension_semantics<parallel>], iteration_bounds = array<i64: 2>, scalar_prefetch = 0 : i64, scratch_operands = 0 : i64, tpu.core_type = #tpu.core_type<tc>, window_params = [{transform_indices = @transform_0, window_bounds = array<i64: 1, 9, 2, 9, 256>}, {pipeline_mode = #tpu.pipeline_mode<synchronous>, transform_indices = @transform_1, window_bounds = array<i64: 3, 2, 256, 128>}, {pipeline_mode = #tpu.pipeline_mode<synchronous>, transform_indices = @transform_2, window_bounds = array<i64: 1, 128>}, {pipeline_mode = #tpu.pipeline_mode<synchronous>, transform_indices = @transform_3, window_bounds = array<i64: 1, 128>}, {transform_indices = @transform_4, window_bounds = array<i64: 64, 128>}]} {
    %cst = arith.constant 0.000000e+00 : f32
    %0 = vector.broadcast %cst : f32 to vector<64x128xf32>
    %c0 = arith.constant 0 : index
    %c0_0 = arith.constant 0 : index
    %c0_1 = arith.constant 0 : index
    %c0_2 = arith.constant 0 : index
    %c0_3 = arith.constant 0 : index
    %1 = vector.load %arg1[%c0, %c0_0, %c0_1, %c0_2, %c0_3] : memref<1x9x2x9x256xbf16, #tpu.memory_space<vmem>>, vector<1x8x1x8x256xbf16>
    %2 = vector.shape_cast %1 : vector<1x8x1x8x256xbf16> to vector<8x8x256xbf16>
    %3 = vector.shape_cast %2 : vector<8x8x256xbf16> to vector<64x256xbf16>
    %c0_4 = arith.constant 0 : index
    %c0_5 = arith.constant 0 : index
    %c0_6 = arith.constant 0 : index
    %c0_7 = arith.constant 0 : index
    %4 = vector.load %arg2[%c0_4, %c0_5, %c0_6, %c0_7] : memref<3x2x256x128xbf16, #tpu.memory_space<vmem>>, vector<1x1x256x128xbf16>
    %5 = vector.shape_cast %4 : vector<1x1x256x128xbf16> to vector<256x128xbf16>
    %cst_8 = arith.constant dense<0.000000e+00> : vector<64x128xf32>
    %6 = tpu.matmul %3, %5, %cst_8 {dimension_numbers = #tpu.dot_dimension_numbers<[1], [0], [0], [1], [0, 0, 1, 1], [], []>} : vector<64x256xbf16>, vector<256x128xbf16>, vector<64x128xf32> -> vector<64x128xf32>
    %7 = arith.addf %0, %6 : vector<64x128xf32>
    %c0_9 = arith.constant 0 : index
    %c0_10 = arith.constant 0 : index
    %c0_11 = arith.constant 0 : index
    %c1 = arith.constant 1 : index
    %c0_12 = arith.constant 0 : index
    %8 = vector.load %arg1[%c0_9, %c0_10, %c0_11, %c1, %c0_12] : memref<1x9x2x9x256xbf16, #tpu.memory_space<vmem>>, vector<1x8x1x8x256xbf16>
    %9 = vector.shape_cast %8 : vector<1x8x1x8x256xbf16> to vector<8x8x256xbf16>
    %10 = vector.shape_cast %9 : vector<8x8x256xbf16> to vector<64x256xbf16>
    %c0_13 = arith.constant 0 : index
    %c1_14 = arith.constant 1 : index
    %c0_15 = arith.constant 0 : index
    %c0_16 = arith.constant 0 : index
    %11 = vector.load %arg2[%c0_13, %c1_14, %c0_15, %c0_16] : memref<3x2x256x128xbf16, #tpu.memory_space<vmem>>, vector<1x1x256x128xbf16>
    %12 = vector.shape_cast %11 : vector<1x1x256x128xbf16> to vector<256x128xbf16>
    %cst_17 = arith.constant dense<0.000000e+00> : vector<64x128xf32>
    %13 = tpu.matmul %10, %12, %cst_17 {dimension_numbers = #tpu.dot_dimension_numbers<[1], [0], [0], [1], [0, 0, 1, 1], [], []>} : vector<64x256xbf16>, vector<256x128xbf16>, vector<64x128xf32> -> vector<64x128xf32>
    %14 = arith.addf %7, %13 : vector<64x128xf32>
    %c0_18 = arith.constant 0 : index
    %c0_19 = arith.constant 0 : index
    %c1_20 = arith.constant 1 : index
    %c0_21 = arith.constant 0 : index
    %c0_22 = arith.constant 0 : index
    %15 = vector.load %arg1[%c0_18, %c0_19, %c1_20, %c0_21, %c0_22] : memref<1x9x2x9x256xbf16, #tpu.memory_space<vmem>>, vector<1x8x1x8x256xbf16>
    %16 = vector.shape_cast %15 : vector<1x8x1x8x256xbf16> to vector<8x8x256xbf16>
    %17 = vector.shape_cast %16 : vector<8x8x256xbf16> to vector<64x256xbf16>
    %c1_23 = arith.constant 1 : index
    %c0_24 = arith.constant 0 : index
    %c0_25 = arith.constant 0 : index
    %c0_26 = arith.constant 0 : index
    %18 = vector.load %arg2[%c1_23, %c0_24, %c0_25, %c0_26] : memref<3x2x256x128xbf16, #tpu.memory_space<vmem>>, vector<1x1x256x128xbf16>
    %19 = vector.shape_cast %18 : vector<1x1x256x128xbf16> to vector<256x128xbf16>
    %cst_27 = arith.constant dense<0.000000e+00> : vector<64x128xf32>
    %20 = tpu.matmul %17, %19, %cst_27 {dimension_numbers = #tpu.dot_dimension_numbers<[1], [0], [0], [1], [0, 0, 1, 1], [], []>} : vector<64x256xbf16>, vector<256x128xbf16>, vector<64x128xf32> -> vector<64x128xf32>
    %21 = arith.addf %14, %20 : vector<64x128xf32>
    %c0_28 = arith.constant 0 : index
    %c0_29 = arith.constant 0 : index
    %c1_30 = arith.constant 1 : index
    %c1_31 = arith.constant 1 : index
    %c0_32 = arith.constant 0 : index
    %22 = vector.load %arg1[%c0_28, %c0_29, %c1_30, %c1_31, %c0_32] : memref<1x9x2x9x256xbf16, #tpu.memory_space<vmem>>, vector<1x8x1x8x256xbf16>
    %23 = vector.shape_cast %22 : vector<1x8x1x8x256xbf16> to vector<8x8x256xbf16>
    %24 = vector.shape_cast %23 : vector<8x8x256xbf16> to vector<64x256xbf16>
    %c1_33 = arith.constant 1 : index
    %c1_34 = arith.constant 1 : index
    %c0_35 = arith.constant 0 : index
    %c0_36 = arith.constant 0 : index
    %25 = vector.load %arg2[%c1_33, %c1_34, %c0_35, %c0_36] : memref<3x2x256x128xbf16, #tpu.memory_space<vmem>>, vector<1x1x256x128xbf16>
    %26 = vector.shape_cast %25 : vector<1x1x256x128xbf16> to vector<256x128xbf16>
    %cst_37 = arith.constant dense<0.000000e+00> : vector<64x128xf32>
    %27 = tpu.matmul %24, %26, %cst_37 {dimension_numbers = #tpu.dot_dimension_numbers<[1], [0], [0], [1], [0, 0, 1, 1], [], []>} : vector<64x256xbf16>, vector<256x128xbf16>, vector<64x128xf32> -> vector<64x128xf32>
    %28 = arith.addf %21, %27 : vector<64x128xf32>
    %c0_38 = arith.constant 0 : index
    %c1_39 = arith.constant 1 : index
    %c0_40 = arith.constant 0 : index
    %c0_41 = arith.constant 0 : index
    %c0_42 = arith.constant 0 : index
    %29 = vector.load %arg1[%c0_38, %c1_39, %c0_40, %c0_41, %c0_42] : memref<1x9x2x9x256xbf16, #tpu.memory_space<vmem>>, vector<1x8x1x8x256xbf16>
    %30 = vector.shape_cast %29 : vector<1x8x1x8x256xbf16> to vector<8x8x256xbf16>
    %31 = vector.shape_cast %30 : vector<8x8x256xbf16> to vector<64x256xbf16>
    %c2 = arith.constant 2 : index
    %c0_43 = arith.constant 0 : index
    %c0_44 = arith.constant 0 : index
    %c0_45 = arith.constant 0 : index
    %32 = vector.load %arg2[%c2, %c0_43, %c0_44, %c0_45] : memref<3x2x256x128xbf16, #tpu.memory_space<vmem>>, vector<1x1x256x128xbf16>
    %33 = vector.shape_cast %32 : vector<1x1x256x128xbf16> to vector<256x128xbf16>
    %cst_46 = arith.constant dense<0.000000e+00> : vector<64x128xf32>
    %34 = tpu.matmul %31, %33, %cst_46 {dimension_numbers = #tpu.dot_dimension_numbers<[1], [0], [0], [1], [0, 0, 1, 1], [], []>} : vector<64x256xbf16>, vector<256x128xbf16>, vector<64x128xf32> -> vector<64x128xf32>
    %35 = arith.addf %28, %34 : vector<64x128xf32>
    %c0_47 = arith.constant 0 : index
    %c1_48 = arith.constant 1 : index
    %c0_49 = arith.constant 0 : index
    %c1_50 = arith.constant 1 : index
    %c0_51 = arith.constant 0 : index
    %36 = vector.load %arg1[%c0_47, %c1_48, %c0_49, %c1_50, %c0_51] : memref<1x9x2x9x256xbf16, #tpu.memory_space<vmem>>, vector<1x8x1x8x256xbf16>
    %37 = vector.shape_cast %36 : vector<1x8x1x8x256xbf16> to vector<8x8x256xbf16>
    %38 = vector.shape_cast %37 : vector<8x8x256xbf16> to vector<64x256xbf16>
    %c2_52 = arith.constant 2 : index
    %c1_53 = arith.constant 1 : index
    %c0_54 = arith.constant 0 : index
    %c0_55 = arith.constant 0 : index
    %39 = vector.load %arg2[%c2_52, %c1_53, %c0_54, %c0_55] : memref<3x2x256x128xbf16, #tpu.memory_space<vmem>>, vector<1x1x256x128xbf16>
    %40 = vector.shape_cast %39 : vector<1x1x256x128xbf16> to vector<256x128xbf16>
    %cst_56 = arith.constant dense<0.000000e+00> : vector<64x128xf32>
    %41 = tpu.matmul %38, %40, %cst_56 {dimension_numbers = #tpu.dot_dimension_numbers<[1], [0], [0], [1], [0, 0, 1, 1], [], []>} : vector<64x256xbf16>, vector<256x128xbf16>, vector<64x128xf32> -> vector<64x128xf32>
    %42 = arith.addf %35, %41 : vector<64x128xf32>
    %c0_57 = arith.constant 0 : index
    %c0_58 = arith.constant 0 : index
    %43 = vector.load %arg3[%c0_57, %c0_58] : memref<1x128xf32, #tpu.memory_space<vmem>>, vector<1x128xf32>
    %44 = vector.broadcast %43 : vector<1x128xf32> to vector<64x128xf32>
    %45 = arith.mulf %42, %44 : vector<64x128xf32>
    %c0_59 = arith.constant 0 : index
    %c0_60 = arith.constant 0 : index
    %46 = vector.load %arg4[%c0_59, %c0_60] : memref<1x128xf32, #tpu.memory_space<vmem>>, vector<1x128xf32>
    %47 = vector.broadcast %46 : vector<1x128xf32> to vector<64x128xf32>
    %48 = arith.addf %45, %47 : vector<64x128xf32>
    %cst_61 = arith.constant 0.000000e+00 : f32
    %49 = vector.broadcast %cst_61 : f32 to vector<64x128xf32>
    %50 = arith.maximumf %48, %49 : vector<64x128xf32>
    %51 = arith.truncf %50 : vector<64x128xf32> to vector<64x128xbf16>
    %c0_62 = arith.constant 0 : index
    %c0_63 = arith.constant 0 : index
    %52 = vector.load %arg5[%c0_62, %c0_63] : memref<64x128xbf16, #tpu.memory_space<vmem>>, vector<64x128xbf16>
    tpu.vector_store %arg5[%c0_62, %c0_63], %51 {strides = array<i32>} : memref<64x128xbf16, #tpu.memory_space<vmem>>, vector<64x128xbf16>,
    return
  }
  func.func @transform_0(%arg0: i32) -> (i32, i32, i32, i32, i32) {
    %c0_i32 = arith.constant 0 : i32
    %c0_i32_0 = arith.constant 0 : i32
    %c0_i32_1 = arith.constant 0 : i32
    %c0_i32_2 = arith.constant 0 : i32
    %c0_i32_3 = arith.constant 0 : i32
    return %arg0, %c0_i32, %c0_i32_0, %c0_i32_1, %c0_i32_2 : i32, i32, i32, i32, i32
  }
  func.func @transform_1(%arg0: i32) -> (i32, i32, i32, i32) {
    %c0_i32 = arith.constant 0 : i32
    %c0_i32_0 = arith.constant 0 : i32
    %c0_i32_1 = arith.constant 0 : i32
    %c0_i32_2 = arith.constant 0 : i32
    %c0_i32_3 = arith.constant 0 : i32
    return %c0_i32, %c0_i32_0, %c0_i32_1, %c0_i32_2 : i32, i32, i32, i32
  }
  func.func @transform_2(%arg0: i32) -> (i32, i32) {
    %c0_i32 = arith.constant 0 : i32
    %c0_i32_0 = arith.constant 0 : i32
    %c0_i32_1 = arith.constant 0 : i32
    return %c0_i32, %c0_i32_0 : i32, i32
  }
  func.func @transform_3(%arg0: i32) -> (i32, i32) {
    %c0_i32 = arith.constant 0 : i32
    %c0_i32_0 = arith.constant 0 : i32
    %c0_i32_1 = arith.constant 0 : i32
    return %c0_i32, %c0_i32_0 : i32, i32
  }
  func.func @transform_4(%arg0: i32) -> (i32, i32) {
    %c0_i32 = arith.constant 0 : i32
    %c0_i32_0 = arith.constant 0 : i32
    return %arg0, %c0_i32 : i32, i32
  }
}

module attributes {stable_mosaic.version = 11 : i64} {
  func.func @_dual_matmul_bn_add_relu_kernel(%arg0: i32, %arg1: memref<128x128xbf16, #tpu.memory_space<vmem>>, %arg2: memref<128x16xbf16, #tpu.memory_space<vmem>>, %arg3: memref<128x128xbf16, #tpu.memory_space<vmem>>, %arg4: memref<16x128xbf16, #tpu.memory_space<vmem>>, %arg5: memref<1x128xf32, #tpu.memory_space<vmem>>, %arg6: memref<1x128xf32, #tpu.memory_space<vmem>>, %arg7: memref<1x128xf32, #tpu.memory_space<vmem>>, %arg8: memref<128x128xf32, #tpu.memory_space<vmem>>) attributes {dimension_semantics = [#tpu.dimension_semantics<parallel>], iteration_bounds = array<i64: 1>, scalar_prefetch = 0 : i64, scratch_operands = 0 : i64, tpu.core_type = #tpu.core_type<tc>, window_params = [{transform_indices = @transform_0, window_bounds = array<i64: 128, 128>}, {transform_indices = @transform_1, window_bounds = array<i64: 128, 16>}, {pipeline_mode = #tpu.pipeline_mode<synchronous>, transform_indices = @transform_2, window_bounds = array<i64: 128, 128>}, {pipeline_mode = #tpu.pipeline_mode<synchronous>, transform_indices = @transform_3, window_bounds = array<i64: 16, 128>}, {pipeline_mode = #tpu.pipeline_mode<synchronous>, transform_indices = @transform_4, window_bounds = array<i64: 1, 128>}, {pipeline_mode = #tpu.pipeline_mode<synchronous>, transform_indices = @transform_5, window_bounds = array<i64: 1, 128>}, {pipeline_mode = #tpu.pipeline_mode<synchronous>, transform_indices = @transform_6, window_bounds = array<i64: 1, 128>}, {transform_indices = @transform_7, window_bounds = array<i64: 128, 128>}]} {
    %c0 = arith.constant 0 : index
    %c0_0 = arith.constant 0 : index
    %0 = vector.load %arg1[%c0, %c0_0] : memref<128x128xbf16, #tpu.memory_space<vmem>>, vector<128x128xbf16>
    %c0_1 = arith.constant 0 : index
    %c0_2 = arith.constant 0 : index
    %1 = vector.load %arg3[%c0_1, %c0_2] : memref<128x128xbf16, #tpu.memory_space<vmem>>, vector<128x128xbf16>
    %cst = arith.constant dense<0.000000e+00> : vector<128x128xf32>
    %2 = tpu.matmul %0, %1, %cst {dimension_numbers = #tpu.dot_dimension_numbers<[1], [0], [0], [1], [0, 0, 1, 1], [], []>} : vector<128x128xbf16>, vector<128x128xbf16>, vector<128x128xf32> -> vector<128x128xf32>
    %c0_3 = arith.constant 0 : index
    %c0_4 = arith.constant 0 : index
    %3 = vector.load %arg2[%c0_3, %c0_4] : memref<128x16xbf16, #tpu.memory_space<vmem>>, vector<128x16xbf16>
    %c0_5 = arith.constant 0 : index
    %c0_6 = arith.constant 0 : index
    %4 = vector.load %arg4[%c0_5, %c0_6] : memref<16x128xbf16, #tpu.memory_space<vmem>>, vector<16x128xbf16>
    %cst_7 = arith.constant dense<0.000000e+00> : vector<128x128xf32>
    %5 = tpu.matmul %3, %4, %cst_7 {dimension_numbers = #tpu.dot_dimension_numbers<[1], [0], [0], [1], [0, 0, 1, 1], [], []>} : vector<128x16xbf16>, vector<16x128xbf16>, vector<128x128xf32> -> vector<128x128xf32>
    %c0_8 = arith.constant 0 : index
    %c0_9 = arith.constant 0 : index
    %6 = vector.load %arg5[%c0_8, %c0_9] : memref<1x128xf32, #tpu.memory_space<vmem>>, vector<1x128xf32>
    %7 = vector.broadcast %6 : vector<1x128xf32> to vector<128x128xf32>
    %8 = arith.mulf %2, %7 : vector<128x128xf32>
    %c0_10 = arith.constant 0 : index
    %c0_11 = arith.constant 0 : index
    %9 = vector.load %arg6[%c0_10, %c0_11] : memref<1x128xf32, #tpu.memory_space<vmem>>, vector<1x128xf32>
    %10 = vector.broadcast %9 : vector<1x128xf32> to vector<128x128xf32>
    %11 = arith.mulf %5, %10 : vector<128x128xf32>
    %12 = arith.addf %8, %11 : vector<128x128xf32>
    %c0_12 = arith.constant 0 : index
    %c0_13 = arith.constant 0 : index
    %13 = vector.load %arg7[%c0_12, %c0_13] : memref<1x128xf32, #tpu.memory_space<vmem>>, vector<1x128xf32>
    %14 = vector.broadcast %13 : vector<1x128xf32> to vector<128x128xf32>
    %15 = arith.addf %12, %14 : vector<128x128xf32>
    %cst_14 = arith.constant 0.000000e+00 : f32
    %16 = vector.broadcast %cst_14 : f32 to vector<128x128xf32>
    %17 = arith.maximumf %15, %16 : vector<128x128xf32>
    %c0_15 = arith.constant 0 : index
    %c0_16 = arith.constant 0 : index
    %18 = vector.load %arg8[%c0_15, %c0_16] : memref<128x128xf32, #tpu.memory_space<vmem>>, vector<128x128xf32>
    tpu.vector_store %arg8[%c0_15, %c0_16], %17 {strides = array<i32>} : memref<128x128xf32, #tpu.memory_space<vmem>>, vector<128x128xf32>,
    return
  }
  func.func @transform_0(%arg0: i32) -> (i32, i32) {
    %c0_i32 = arith.constant 0 : i32
    %c0_i32_0 = arith.constant 0 : i32
    return %arg0, %c0_i32 : i32, i32
  }
  func.func @transform_1(%arg0: i32) -> (i32, i32) {
    %c0_i32 = arith.constant 0 : i32
    %c0_i32_0 = arith.constant 0 : i32
    return %arg0, %c0_i32 : i32, i32
  }
  func.func @transform_2(%arg0: i32) -> (i32, i32) {
    %c0_i32 = arith.constant 0 : i32
    %c0_i32_0 = arith.constant 0 : i32
    %c0_i32_1 = arith.constant 0 : i32
    return %c0_i32, %c0_i32_0 : i32, i32
  }
  func.func @transform_3(%arg0: i32) -> (i32, i32) {
    %c0_i32 = arith.constant 0 : i32
    %c0_i32_0 = arith.constant 0 : i32
    %c0_i32_1 = arith.constant 0 : i32
    return %c0_i32, %c0_i32_0 : i32, i32
  }
  func.func @transform_4(%arg0: i32) -> (i32, i32) {
    %c0_i32 = arith.constant 0 : i32
    %c0_i32_0 = arith.constant 0 : i32
    %c0_i32_1 = arith.constant 0 : i32
    return %c0_i32, %c0_i32_0 : i32, i32
  }
  func.func @transform_5(%arg0: i32) -> (i32, i32) {
    %c0_i32 = arith.constant 0 : i32
    %c0_i32_0 = arith.constant 0 : i32
    %c0_i32_1 = arith.constant 0 : i32
    return %c0_i32, %c0_i32_0 : i32, i32
  }
  func.func @transform_6(%arg0: i32) -> (i32, i32) {
    %c0_i32 = arith.constant 0 : i32
    %c0_i32_0 = arith.constant 0 : i32
    %c0_i32_1 = arith.constant 0 : i32
    return %c0_i32, %c0_i32_0 : i32, i32
  }
  func.func @transform_7(%arg0: i32) -> (i32, i32) {
    %c0_i32 = arith.constant 0 : i32
    %c0_i32_0 = arith.constant 0 : i32
    return %arg0, %c0_i32 : i32, i32
  }
}

</mosaic_0001>

<llo_original>
// kernel: bottleneck_forward.3
$region0: #{bottleneck_forward.3}
  #allocation0 [shape = 'u32[]', space=smem, size = 0x4, offset = 0x4, fixed_abs, tag = 'smem constant byte address 0x4 - core index']
  #allocation1 [shape = 'u32[144,128]{1,0:T(1,128)}', space=vmem, size = 0x12000, scoped, tag = 'internal scratch']
  %s0 = inlined_call_operand.vmem [shape: bf16[512,16], index: 0, kind: input, shape index: {}]
  %s1 = inlined_call_operand.vmem [shape: bf16[16,128], index: 1, kind: input, shape index: {}]
  %s2 = inlined_call_operand.vmem [shape: f32[1,128], index: 2, kind: input, shape index: {}]
  %s3 = inlined_call_operand.vmem [shape: f32[1,128], index: 3, kind: input, shape index: {}]
  %s4 = inlined_call_operand.vmem [shape: bf16[512,128], index: 4, kind: output, shape index: {}]
  %s5 = sld [smem:[#allocation0]]
  $region26: #{bottleneck_forward.3} parent=0
    _
  %s7 = ssub.s32 1, %s5
  %s8 = scalar_select 0, %s7, %s5
  // Predicated region
  $region2: #{bottleneck_forward.3} parent=0 // pred_check
    _
  $region3: #{bottleneck_forward.3} parent=0 // pred_check_branch
    %10 = sbr.rel (0) target = $region5
  $region4: #{bottleneck_forward.3} parent=0 // pred_region
    _
  $region5: #{bottleneck_forward.3} parent=0 // pred_fallthru
    _
  // Predicated region
  $region6: #{bottleneck_forward.3} parent=0 // pred_check
    _
  $region7: #{bottleneck_forward.3} parent=0 // pred_check_branch
    %12 = sbr.rel (0) target = $region9
  $region8: #{bottleneck_forward.3} parent=0 // pred_region
    _
  $region9: #{bottleneck_forward.3} parent=0 // pred_fallthru
    _
  // Predicated region
  $region10: #{bottleneck_forward.3} parent=0 // pred_check
    _
  $region11: #{bottleneck_forward.3} parent=0 // pred_check_branch
    %14 = sbr.rel (0) target = $region13
  $region12: #{bottleneck_forward.3} parent=0 // pred_region
    _
  $region13: #{bottleneck_forward.3} parent=0 // pred_fallthru
    _
  // Predicated region
  $region14: #{bottleneck_forward.3} parent=0 // pred_check
    _
  $region15: #{bottleneck_forward.3} parent=0 // pred_check_branch
    %16 = sbr.rel (0) target = $region17
  $region16: #{bottleneck_forward.3} parent=0 // pred_region
    _
  $region17: #{bottleneck_forward.3} parent=0 // pred_fallthru
    _
  %v18 = vld [vmem:[%s0] sm:$0xf]
  %v19 = vld [vmem:[%s0 + $0x4] sm:$0xf]
  %v20 = vld [vmem:[%s0 + $0x8] sm:$0xf]
  %v21 = vld [vmem:[%s0 + $0xc] sm:$0xf]
  %v22 = vld [vmem:[%s0 + $0x10] sm:$0xf]
  %v23 = vld [vmem:[%s0 + $0x14] sm:$0xf]
  %v24 = vld [vmem:[%s0 + $0x18] sm:$0xf]
  %v25 = vld [vmem:[%s0 + $0x1c] sm:$0xf]
  %v26 = vld [vmem:[%s0 + $0x20] sm:$0xf]
  %v27 = vld [vmem:[%s0 + $0x24] sm:$0xf]
  %v28 = vld [vmem:[%s0 + $0x28] sm:$0xf]
  %v29 = vld [vmem:[%s0 + $0x2c] sm:$0xf]
  %v30 = vld [vmem:[%s0 + $0x30] sm:$0xf]
  %v31 = vld [vmem:[%s0 + $0x34] sm:$0xf]
  %v32 = vld [vmem:[%s0 + $0x38] sm:$0xf]
  %v33 = vld [vmem:[%s0 + $0x3c] sm:$0xf]
  %v34 = vld [vmem:[%s0 + $0x40] sm:$0xf]
  %v35 = vld [vmem:[%s0 + $0x44] sm:$0xf]
  %v36 = vld [vmem:[%s0 + $0x48] sm:$0xf]
  %v37 = vld [vmem:[%s0 + $0x4c] sm:$0xf]
  %v38 = vld [vmem:[%s0 + $0x50] sm:$0xf]
  %v39 = vld [vmem:[%s0 + $0x54] sm:$0xf]
  %v40 = vld [vmem:[%s0 + $0x58] sm:$0xf]
  %v41 = vld [vmem:[%s0 + $0x5c] sm:$0xf]
  %v42 = vld [vmem:[%s0 + $0x60] sm:$0xf]
  %v43 = vld [vmem:[%s0 + $0x64] sm:$0xf]
  %v44 = vld [vmem:[%s0 + $0x68] sm:$0xf]
  %v45 = vld [vmem:[%s0 + $0x6c] sm:$0xf]
  %v46 = vld [vmem:[%s0 + $0x70] sm:$0xf]
  %v47 = vld [vmem:[%s0 + $0x74] sm:$0xf]
  %v48 = vld [vmem:[%s0 + $0x78] sm:$0xf]
  %v49 = vld [vmem:[%s0 + $0x7c] sm:$0xf]
  %v50 = vld [vmem:[%s0 + $0x80] sm:$0xf]
  %v51 = vld [vmem:[%s0 + $0x84] sm:$0xf]
  %v52 = vld [vmem:[%s0 + $0x88] sm:$0xf]
  %v53 = vld [vmem:[%s0 + $0x8c] sm:$0xf]
  %v54 = vld [vmem:[%s0 + $0x90] sm:$0xf]
  %v55 = vld [vmem:[%s0 + $0x94] sm:$0xf]
  %v56 = vld [vmem:[%s0 + $0x98] sm:$0xf]
  %v57 = vld [vmem:[%s0 + $0x9c] sm:$0xf]
  %v58 = vld [vmem:[%s0 + $0xa0] sm:$0xf]
  %v59 = vld [vmem:[%s0 + $0xa4] sm:$0xf]
  %v60 = vld [vmem:[%s0 + $0xa8] sm:$0xf]
  %v61 = vld [vmem:[%s0 + $0xac] sm:$0xf]
  %v62 = vld [vmem:[%s0 + $0xb0] sm:$0xf]
  %v63 = vld [vmem:[%s0 + $0xb4] sm:$0xf]
  %v64 = vld [vmem:[%s0 + $0xb8] sm:$0xf]
  %v65 = vld [vmem:[%s0 + $0xbc] sm:$0xf]
  %v66 = vld [vmem:[%s0 + $0xc0] sm:$0xf]
  %v67 = vld [vmem:[%s0 + $0xc4] sm:$0xf]
  %v68 = vld [vmem:[%s0 + $0xc8] sm:$0xf]
  %v69 = vld [vmem:[%s0 + $0xcc] sm:$0xf]
  %v70 = vld [vmem:[%s0 + $0xd0] sm:$0xf]
  %v71 = vld [vmem:[%s0 + $0xd4] sm:$0xf]
  %v72 = vld [vmem:[%s0 + $0xd8] sm:$0xf]
  %v73 = vld [vmem:[%s0 + $0xdc] sm:$0xf]
  %v74 = vld [vmem:[%s0 + $0xe0] sm:$0xf]
  %v75 = vld [vmem:[%s0 + $0xe4] sm:$0xf]
  %v76 = vld [vmem:[%s0 + $0xe8] sm:$0xf]
  %v77 = vld [vmem:[%s0 + $0xec] sm:$0xf]
  %v78 = vld [vmem:[%s0 + $0xf0] sm:$0xf]
  %v79 = vld [vmem:[%s0 + $0xf4] sm:$0xf]
  %v80 = vld [vmem:[%s0 + $0xf8] sm:$0xf]
  %v81 = vld [vmem:[%s0 + $0xfc] sm:$0xf]
  %v82 = vld [vmem:[%s1] sm:$0xf]
  %v83 = vld [vmem:[%s1 + $0x4] sm:$0xf]
  %v148 = vunpack.c.l.b16 %v18
  %v149 = vunpack.c.l.b16 %v19
  %v150 = vunpack.c.l.b16 %v20
  %v151 = vunpack.c.l.b16 %v21
  %v152 = vunpack.c.l.b16 %v22
  %v153 = vunpack.c.l.b16 %v23
  %v154 = vunpack.c.l.b16 %v24
  %v155 = vunpack.c.l.b16 %v25
  %v156 = vunpack.c.l.b16 %v26
  %v157 = vunpack.c.l.b16 %v27
  %v158 = vunpack.c.l.b16 %v28
  %v159 = vunpack.c.l.b16 %v29
  %v160 = vunpack.c.l.b16 %v30
  %v161 = vunpack.c.l.b16 %v31
  %v162 = vunpack.c.l.b16 %v32
  %v163 = vunpack.c.l.b16 %v33
  %v164 = vunpack.c.l.b16 %v34
  %v165 = vunpack.c.l.b16 %v35
  %v166 = vunpack.c.l.b16 %v36
  %v167 = vunpack.c.l.b16 %v37
  %v168 = vunpack.c.l.b16 %v38
  %v169 = vunpack.c.l.b16 %v39
  %v170 = vunpack.c.l.b16 %v40
  %v171 = vunpack.c.l.b16 %v41
  %v172 = vunpack.c.l.b16 %v42
  %v173 = vunpack.c.l.b16 %v43
  %v174 = vunpack.c.l.b16 %v44
  %v175 = vunpack.c.l.b16 %v45
  %v176 = vunpack.c.l.b16 %v46
  %v177 = vunpack.c.l.b16 %v47
  %v178 = vunpack.c.l.b16 %v48
  %v179 = vunpack.c.l.b16 %v49
  %v180 = vunpack.c.l.b16 %v50
  %v181 = vunpack.c.l.b16 %v51
  %v182 = vunpack.c.l.b16 %v52
  %v183 = vunpack.c.l.b16 %v53
  %v184 = vunpack.c.l.b16 %v54
  %v185 = vunpack.c.l.b16 %v55
  %v186 = vunpack.c.l.b16 %v56
  %v187 = vunpack.c.l.b16 %v57
  %v188 = vunpack.c.l.b16 %v58
  %v189 = vunpack.c.l.b16 %v59
  %v190 = vunpack.c.l.b16 %v60
  %v191 = vunpack.c.l.b16 %v61
  %v192 = vunpack.c.l.b16 %v62
  %v193 = vunpack.c.l.b16 %v63
  %v194 = vunpack.c.l.b16 %v64
  %v195 = vunpack.c.l.b16 %v65
  %v196 = vunpack.c.l.b16 %v66
  %v197 = vunpack.c.l.b16 %v67
  %v198 = vunpack.c.l.b16 %v68
  %v199 = vunpack.c.l.b16 %v69
  %v200 = vunpack.c.l.b16 %v70
  %v201 = vunpack.c.l.b16 %v71
  %v202 = vunpack.c.l.b16 %v72
  %v203 = vunpack.c.l.b16 %v73
  %v204 = vunpack.c.l.b16 %v74
  %v205 = vunpack.c.l.b16 %v75
  %v206 = vunpack.c.l.b16 %v76
  %v207 = vunpack.c.l.b16 %v77
  %v208 = vunpack.c.l.b16 %v78
  %v209 = vunpack.c.l.b16 %v79
  %v210 = vunpack.c.l.b16 %v80
  %v211 = vunpack.c.l.b16 %v81
  %v212 = vpack.c.b16 %v149, %v148
  %v213 = vpack.c.b16 %v151, %v150
  %v214 = vpack.c.b16 %v153, %v152
  %v215 = vpack.c.b16 %v155, %v154
  %v216 = vpack.c.b16 %v157, %v156
  %v217 = vpack.c.b16 %v159, %v158
  %v218 = vpack.c.b16 %v161, %v160
  %v219 = vpack.c.b16 %v163, %v162
  %v220 = vpack.c.b16 %v165, %v164
  %v221 = vpack.c.b16 %v167, %v166
  %v222 = vpack.c.b16 %v169, %v168
  %v223 = vpack.c.b16 %v171, %v170
  %v224 = vpack.c.b16 %v173, %v172
  %v225 = vpack.c.b16 %v175, %v174
  %v226 = vpack.c.b16 %v177, %v176
  %v227 = vpack.c.b16 %v179, %v178
  %v228 = vpack.c.b16 %v181, %v180
  %v229 = vpack.c.b16 %v183, %v182
  %v230 = vpack.c.b16 %v185, %v184
  %v231 = vpack.c.b16 %v187, %v186
  %v232 = vpack.c.b16 %v189, %v188
  %v233 = vpack.c.b16 %v191, %v190
  %v234 = vpack.c.b16 %v193, %v192
  %v235 = vpack.c.b16 %v195, %v194
  %v236 = vpack.c.b16 %v197, %v196
  %v237 = vpack.c.b16 %v199, %v198
  %v238 = vpack.c.b16 %v201, %v200
  %v239 = vpack.c.b16 %v203, %v202
  %v240 = vpack.c.b16 %v205, %v204
  %v241 = vpack.c.b16 %v207, %v206
  %v242 = vpack.c.b16 %v209, %v208
  %v243 = vpack.c.b16 %v211, %v210
  %v246 = vunpack.c.l.b16 %v82
  %v247 = vunpack.c.l.b16 %v83
  %v248 = vpack.c.b16 %v247, %v246
  %vm250 = vcmask 130048
  %v252 = vsel %vm250, %v212, 0
  %v255 = vsel %vm250, %v213, 0
  %v258 = vsel %vm250, %v214, 0
  %v261 = vsel %vm250, %v215, 0
  %v264 = vsel %vm250, %v216, 0
  %v267 = vsel %vm250, %v217, 0
  %v270 = vsel %vm250, %v218, 0
  %v273 = vsel %vm250, %v219, 0
  %v276 = vsel %vm250, %v220, 0
  %v279 = vsel %vm250, %v221, 0
  %v282 = vsel %vm250, %v222, 0
  %v285 = vsel %vm250, %v223, 0
  %v288 = vsel %vm250, %v224, 0
  %v291 = vsel %vm250, %v225, 0
  %v294 = vsel %vm250, %v226, 0
  %v297 = vsel %vm250, %v227, 0
  %v300 = vsel %vm250, %v228, 0
  %v303 = vsel %vm250, %v229, 0
  %v306 = vsel %vm250, %v230, 0
  %v309 = vsel %vm250, %v231, 0
  %v312 = vsel %vm250, %v232, 0
  %v315 = vsel %vm250, %v233, 0
  %v318 = vsel %vm250, %v234, 0
  %v321 = vsel %vm250, %v235, 0
  %v324 = vsel %vm250, %v236, 0
  %v327 = vsel %vm250, %v237, 0
  %v330 = vsel %vm250, %v238, 0
  %v333 = vsel %vm250, %v239, 0
  %v336 = vsel %vm250, %v240, 0
  %v339 = vsel %vm250, %v241, 0
  %v342 = vsel %vm250, %v242, 0
  %v345 = vsel %vm250, %v243, 0
  %347 = vmatprep.subr.bf16.mxu0 0
  %348 = vmatpush1.bf16.msra.mxu0 %v248
  %349 = vmatprep.subr.bf16.mxu0 0
  %350 = vmatpush1.bf16.msra.mxu0 0
  %351 = vmatprep.subr.bf16.mxu0 0
  %352 = vmatpush1.bf16.msra.mxu0 0
  %353 = vmatprep.subr.bf16.mxu0 0
  %354 = vmatpush1.bf16.msra.mxu0 0
  %355 = vmatprep.subr.bf16.mxu0 0
  %356 = vmatpush1.bf16.msra.mxu0 0
  %357 = vmatprep.subr.bf16.mxu0 0
  %358 = vmatpush1.bf16.msra.mxu0 0
  %359 = vmatprep.subr.bf16.mxu0 0
  %360 = vmatpush1.bf16.msra.mxu0 0
  %361 = vmatprep.subr.bf16.mxu0 0
  %362 = vmatpush1.bf16.msra.mxu0 0
  %363 = vmatprep.subr.bf16.mxu0 0
  %364 = vmatpush1.bf16.msra.mxu0 0
  %365 = vmatprep.subr.bf16.mxu0 0
  %366 = vmatpush1.bf16.msra.mxu0 0
  %367 = vmatprep.subr.bf16.mxu0 0
  %368 = vmatpush1.bf16.msra.mxu0 0
  %369 = vmatprep.subr.bf16.mxu0 0
  %370 = vmatpush1.bf16.msra.mxu0 0
  %371 = vmatprep.subr.bf16.mxu0 0
  %372 = vmatpush1.bf16.msra.mxu0 0
  %373 = vmatprep.subr.bf16.mxu0 0
  %374 = vmatpush1.bf16.msra.mxu0 0
  %375 = vmatprep.subr.bf16.mxu0 0
  %376 = vmatpush1.bf16.msra.mxu0 0
  %377 = vmatprep.subr.bf16.mxu0 0
  %378 = vmatpush1.bf16.msra.mxu0 0
  %379 = vmatprep.mubr.bf16.mxu0 0
  %380 = vmatmul.mubr.bf16.gmra.mrb[0].mxu0 %v252
  %v381 = vpop.f32.mrb[0].mxu0
  %v382 = vadd.f32 0.0, %v381
  %v383 = vpop.f32.mrb[0].mxu0
  %v384 = vpop.f32.mrb[0].mxu0
  %v385 = vadd.f32 0.0, %v384
  %v386 = vpop.f32.mrb[0].mxu0
  %387 = vmatprep.mubr.bf16.mxu0 0
  %388 = vmatmul.mubr.bf16.gmra.mrb[0].mxu0 %v255
  %v389 = vpop.f32.mrb[0].mxu0
  %v390 = vadd.f32 0.0, %v389
  %v391 = vpop.f32.mrb[0].mxu0
  %v392 = vpop.f32.mrb[0].mxu0
  %v393 = vadd.f32 0.0, %v392
  %v394 = vpop.f32.mrb[0].mxu0
  %395 = vmatprep.mubr.bf16.mxu0 0
  %396 = vmatmul.mubr.bf16.gmra.mrb[0].mxu0 %v258
  %v397 = vpop.f32.mrb[0].mxu0
  %v398 = vadd.f32 0.0, %v397
  %v399 = vpop.f32.mrb[0].mxu0
  %v400 = vpop.f32.mrb[0].mxu0
  %v401 = vadd.f32 0.0, %v400
  %v402 = vpop.f32.mrb[0].mxu0
  %403 = vmatprep.mubr.bf16.mxu0 0
  %404 = vmatmul.mubr.bf16.gmra.mrb[0].mxu0 %v261
  %v405 = vpop.f32.mrb[0].mxu0
  %v406 = vadd.f32 0.0, %v405
  %v407 = vpop.f32.mrb[0].mxu0
  %v408 = vpop.f32.mrb[0].mxu0
  %v409 = vadd.f32 0.0, %v408
  %v410 = vpop.f32.mrb[0].mxu0
  %411 = vmatprep.mubr.bf16.mxu0 0
  %412 = vmatmul.mubr.bf16.gmra.mrb[0].mxu0 %v264
  %v413 = vpop.f32.mrb[0].mxu0
  %v414 = vadd.f32 0.0, %v413
  %v415 = vpop.f32.mrb[0].mxu0
  %v416 = vpop.f32.mrb[0].mxu0
  %v417 = vadd.f32 0.0, %v416
  %v418 = vpop.f32.mrb[0].mxu0
  %419 = vmatprep.mubr.bf16.mxu0 0
  %420 = vmatmul.mubr.bf16.gmra.mrb[0].mxu0 %v267
  %v421 = vpop.f32.mrb[0].mxu0
  %v422 = vadd.f32 0.0, %v421
  %v423 = vpop.f32.mrb[0].mxu0
  %v424 = vpop.f32.mrb[0].mxu0
  %v425 = vadd.f32 0.0, %v424
  %v426 = vpop.f32.mrb[0].mxu0
  %427 = vmatprep.mubr.bf16.mxu0 0
  %428 = vmatmul.mubr.bf16.gmra.mrb[0].mxu0 %v270
  %v429 = vpop.f32.mrb[0].mxu0
  %v430 = vadd.f32 0.0, %v429
  %v431 = vpop.f32.mrb[0].mxu0
  %v432 = vpop.f32.mrb[0].mxu0
  %v433 = vadd.f32 0.0, %v432
  %v434 = vpop.f32.mrb[0].mxu0
  %435 = vmatprep.mubr.bf16.mxu0 0
  %436 = vmatmul.mubr.bf16.gmra.mrb[0].mxu0 %v273
  %v437 = vpop.f32.mrb[0].mxu0
  %v438 = vadd.f32 0.0, %v437
  %v439 = vpop.f32.mrb[0].mxu0
  %v440 = vpop.f32.mrb[0].mxu0
  %v441 = vadd.f32 0.0, %v440
  %v442 = vpop.f32.mrb[0].mxu0
  %443 = vmatprep.mubr.bf16.mxu0 0
  %444 = vmatmul.mubr.bf16.gmra.mrb[0].mxu0 %v276
  %v445 = vpop.f32.mrb[0].mxu0
  %v446 = vadd.f32 0.0, %v445
  %v447 = vpop.f32.mrb[0].mxu0
  %v448 = vpop.f32.mrb[0].mxu0
  %v449 = vadd.f32 0.0, %v448
  %v450 = vpop.f32.mrb[0].mxu0
  %451 = vmatprep.mubr.bf16.mxu0 0
  %452 = vmatmul.mubr.bf16.gmra.mrb[0].mxu0 %v279
  %v453 = vpop.f32.mrb[0].mxu0
  %v454 = vadd.f32 0.0, %v453
  %v455 = vpop.f32.mrb[0].mxu0
  %v456 = vpop.f32.mrb[0].mxu0
  %v457 = vadd.f32 0.0, %v456
  %v458 = vpop.f32.mrb[0].mxu0
  %459 = vmatprep.mubr.bf16.mxu0 0
  %460 = vmatmul.mubr.bf16.gmra.mrb[0].mxu0 %v282
  %v461 = vpop.f32.mrb[0].mxu0
  %v462 = vadd.f32 0.0, %v461
  %v463 = vpop.f32.mrb[0].mxu0
  %v464 = vpop.f32.mrb[0].mxu0
  %v465 = vadd.f32 0.0, %v464
  %v466 = vpop.f32.mrb[0].mxu0
  %467 = vmatprep.mubr.bf16.mxu0 0
  %468 = vmatmul.mubr.bf16.gmra.mrb[0].mxu0 %v285
  %v469 = vpop.f32.mrb[0].mxu0
  %v470 = vadd.f32 0.0, %v469
  %v471 = vpop.f32.mrb[0].mxu0
  %v472 = vpop.f32.mrb[0].mxu0
  %v473 = vadd.f32 0.0, %v472
  %v474 = vpop.f32.mrb[0].mxu0
  %475 = vmatprep.mubr.bf16.mxu0 0
  %476 = vmatmul.mubr.bf16.gmra.mrb[0].mxu0 %v288
  %v477 = vpop.f32.mrb[0].mxu0
  %v478 = vadd.f32 0.0, %v477
  %v479 = vpop.f32.mrb[0].mxu0
  %v480 = vpop.f32.mrb[0].mxu0
  %v481 = vadd.f32 0.0, %v480
  %v482 = vpop.f32.mrb[0].mxu0
  %483 = vmatprep.mubr.bf16.mxu0 0
  %484 = vmatmul.mubr.bf16.gmra.mrb[0].mxu0 %v291
  %v485 = vpop.f32.mrb[0].mxu0
  %v486 = vadd.f32 0.0, %v485
  %v487 = vpop.f32.mrb[0].mxu0
  %v488 = vpop.f32.mrb[0].mxu0
  %v489 = vadd.f32 0.0, %v488
  %v490 = vpop.f32.mrb[0].mxu0
  %491 = vmatprep.mubr.bf16.mxu0 0
  %492 = vmatmul.mubr.bf16.gmra.mrb[0].mxu0 %v294
  %v493 = vpop.f32.mrb[0].mxu0
  %v494 = vadd.f32 0.0, %v493
  %v495 = vpop.f32.mrb[0].mxu0
  %v496 = vpop.f32.mrb[0].mxu0
  %v497 = vadd.f32 0.0, %v496
  %v498 = vpop.f32.mrb[0].mxu0
  %499 = vmatprep.mubr.bf16.mxu0 0
  %500 = vmatmul.mubr.bf16.gmra.mrb[0].mxu0 %v297
  %v501 = vpop.f32.mrb[0].mxu0
  %v502 = vadd.f32 0.0, %v501
  %v503 = vpop.f32.mrb[0].mxu0
  %v504 = vpop.f32.mrb[0].mxu0
  %v505 = vadd.f32 0.0, %v504
  %v506 = vpop.f32.mrb[0].mxu0
  %507 = vmatprep.mubr.bf16.mxu0 0
  %508 = vmatmul.mubr.bf16.gmra.mrb[0].mxu0 %v300
  %v509 = vpop.f32.mrb[0].mxu0
  %v510 = vadd.f32 0.0, %v509
  %v511 = vpop.f32.mrb[0].mxu0
  %v512 = vpop.f32.mrb[0].mxu0
  %v513 = vadd.f32 0.0, %v512
  %v514 = vpop.f32.mrb[0].mxu0
  %515 = vmatprep.mubr.bf16.mxu0 0
  %516 = vmatmul.mubr.bf16.gmra.mrb[0].mxu0 %v303
  %v517 = vpop.f32.mrb[0].mxu0
  %v518 = vadd.f32 0.0, %v517
  %v519 = vpop.f32.mrb[0].mxu0
  %v520 = vpop.f32.mrb[0].mxu0
  %v521 = vadd.f32 0.0, %v520
  %v522 = vpop.f32.mrb[0].mxu0
  %523 = vmatprep.mubr.bf16.mxu0 0
  %524 = vmatmul.mubr.bf16.gmra.mrb[0].mxu0 %v306
  %v525 = vpop.f32.mrb[0].mxu0
  %v526 = vadd.f32 0.0, %v525
  %v527 = vpop.f32.mrb[0].mxu0
  %v528 = vpop.f32.mrb[0].mxu0
  %v529 = vadd.f32 0.0, %v528
  %v530 = vpop.f32.mrb[0].mxu0
  %531 = vmatprep.mubr.bf16.mxu0 0
  %532 = vmatmul.mubr.bf16.gmra.mrb[0].mxu0 %v309
  %v533 = vpop.f32.mrb[0].mxu0
  %v534 = vadd.f32 0.0, %v533
  %v535 = vpop.f32.mrb[0].mxu0
  %v536 = vpop.f32.mrb[0].mxu0
  %v537 = vadd.f32 0.0, %v536
  %v538 = vpop.f32.mrb[0].mxu0
  %539 = vmatprep.mubr.bf16.mxu0 0
  %540 = vmatmul.mubr.bf16.gmra.mrb[0].mxu0 %v312
  %v541 = vpop.f32.mrb[0].mxu0
  %v542 = vadd.f32 0.0, %v541
  %v543 = vpop.f32.mrb[0].mxu0
  %v544 = vpop.f32.mrb[0].mxu0
  %v545 = vadd.f32 0.0, %v544
  %v546 = vpop.f32.mrb[0].mxu0
  %547 = vmatprep.mubr.bf16.mxu0 0
  %548 = vmatmul.mubr.bf16.gmra.mrb[0].mxu0 %v315
  %v549 = vpop.f32.mrb[0].mxu0
  %v550 = vadd.f32 0.0, %v549
  %v551 = vpop.f32.mrb[0].mxu0
  %v552 = vpop.f32.mrb[0].mxu0
  %v553 = vadd.f32 0.0, %v552
  %v554 = vpop.f32.mrb[0].mxu0
  %555 = vmatprep.mubr.bf16.mxu0 0
  %556 = vmatmul.mubr.bf16.gmra.mrb[0].mxu0 %v318
  %v557 = vpop.f32.mrb[0].mxu0
  %v558 = vadd.f32 0.0, %v557
  %v559 = vpop.f32.mrb[0].mxu0
  %v560 = vpop.f32.mrb[0].mxu0
  %v561 = vadd.f32 0.0, %v560
  %v562 = vpop.f32.mrb[0].mxu0
  %563 = vmatprep.mubr.bf16.mxu0 0
  %564 = vmatmul.mubr.bf16.gmra.mrb[0].mxu0 %v321
  %v565 = vpop.f32.mrb[0].mxu0
  %v566 = vadd.f32 0.0, %v565
  %v567 = vpop.f32.mrb[0].mxu0
  %v568 = vpop.f32.mrb[0].mxu0
  %v569 = vadd.f32 0.0, %v568
  %v570 = vpop.f32.mrb[0].mxu0
  %571 = vmatprep.mubr.bf16.mxu0 0
  %572 = vmatmul.mubr.bf16.gmra.mrb[0].mxu0 %v324
  %v573 = vpop.f32.mrb[0].mxu0
  %v574 = vadd.f32 0.0, %v573
  %v575 = vpop.f32.mrb[0].mxu0
  %v576 = vpop.f32.mrb[0].mxu0
  %v577 = vadd.f32 0.0, %v576
  %v578 = vpop.f32.mrb[0].mxu0
  %579 = vmatprep.mubr.bf16.mxu0 0
  %580 = vmatmul.mubr.bf16.gmra.mrb[0].mxu0 %v327
  %v581 = vpop.f32.mrb[0].mxu0
  %v582 = vadd.f32 0.0, %v581
  %v583 = vpop.f32.mrb[0].mxu0
  %v584 = vpop.f32.mrb[0].mxu0
  %v585 = vadd.f32 0.0, %v584
  %v586 = vpop.f32.mrb[0].mxu0
  %587 = vmatprep.mubr.bf16.mxu0 0
  %588 = vmatmul.mubr.bf16.gmra.mrb[0].mxu0 %v330
  %v589 = vpop.f32.mrb[0].mxu0
  %v590 = vadd.f32 0.0, %v589
  %v591 = vpop.f32.mrb[0].mxu0
  %v592 = vpop.f32.mrb[0].mxu0
  %v593 = vadd.f32 0.0, %v592
  %v594 = vpop.f32.mrb[0].mxu0
  %595 = vmatprep.mubr.bf16.mxu0 0
  %596 = vmatmul.mubr.bf16.gmra.mrb[0].mxu0 %v333
  %v597 = vpop.f32.mrb[0].mxu0
  %v598 = vadd.f32 0.0, %v597
  %v599 = vpop.f32.mrb[0].mxu0
  %v600 = vpop.f32.mrb[0].mxu0
  %v601 = vadd.f32 0.0, %v600
  %v602 = vpop.f32.mrb[0].mxu0
  %603 = vmatprep.mubr.bf16.mxu0 0
  %604 = vmatmul.mubr.bf16.gmra.mrb[0].mxu0 %v336
  %v605 = vpop.f32.mrb[0].mxu0
  %v606 = vadd.f32 0.0, %v605
  %v607 = vpop.f32.mrb[0].mxu0
  %v608 = vpop.f32.mrb[0].mxu0
  %v609 = vadd.f32 0.0, %v608
  %v610 = vpop.f32.mrb[0].mxu0
  %611 = vmatprep.mubr.bf16.mxu0 0
  %612 = vmatmul.mubr.bf16.gmra.mrb[0].mxu0 %v339
  %v613 = vpop.f32.mrb[0].mxu0
  %v614 = vadd.f32 0.0, %v613
  %v615 = vpop.f32.mrb[0].mxu0
  %v616 = vpop.f32.mrb[0].mxu0
  %v617 = vadd.f32 0.0, %v616
  %v618 = vpop.f32.mrb[0].mxu0
  %619 = vmatprep.mubr.bf16.mxu0 0
  %620 = vmatmul.mubr.bf16.gmra.mrb[0].mxu0 %v342
  %v621 = vpop.f32.mrb[0].mxu0
  %v622 = vadd.f32 0.0, %v621
  %v623 = vpop.f32.mrb[0].mxu0
  %v624 = vpop.f32.mrb[0].mxu0
  %v625 = vadd.f32 0.0, %v624
  %v626 = vpop.f32.mrb[0].mxu0
  %627 = vmatprep.mubr.bf16.mxu0 0
  %628 = vmatmul.mubr.bf16.gmra.mrb[0].mxu0 %v345
  %v629 = vpop.f32.mrb[0].mxu0
  %v630 = vadd.f32 0.0, %v629
  %v631 = vpop.f32.mrb[0].mxu0
  %v632 = vpop.f32.mrb[0].mxu0
  %v633 = vadd.f32 0.0, %v632
  %v634 = vpop.f32.mrb[0].mxu0
  %635 = vdwg.mxu0
  %v636 = vld [vmem:[%s2] sm:$0x1]
  %v638 = vlaneseq
  %v639 = vshrl.u32 %v638, 7
  %v640 = vsub.s32 0, %v639
  %v641 = vrot.slane %v636, %v640
  %v643 = vmul.f32 %v382, %v641
  %v644 = vmul.f32 %v385, %v641
  %v645 = vmul.f32 %v390, %v641
  %v646 = vmul.f32 %v393, %v641
  %v647 = vmul.f32 %v398, %v641
  %v648 = vmul.f32 %v401, %v641
  %v649 = vmul.f32 %v406, %v641
  %v650 = vmul.f32 %v409, %v641
  %v651 = vmul.f32 %v414, %v641
  %v652 = vmul.f32 %v417, %v641
  %v653 = vmul.f32 %v422, %v641
  %v654 = vmul.f32 %v425, %v641
  %v655 = vmul.f32 %v430, %v641
  %v656 = vmul.f32 %v433, %v641
  %v657 = vmul.f32 %v438, %v641
  %v658 = vmul.f32 %v441, %v641
  %v659 = vmul.f32 %v446, %v641
  %v660 = vmul.f32 %v449, %v641
  %v661 = vmul.f32 %v454, %v641
  %v662 = vmul.f32 %v457, %v641
  %v663 = vmul.f32 %v462, %v641
  %v664 = vmul.f32 %v465, %v641
  %v665 = vmul.f32 %v470, %v641
  %v666 = vmul.f32 %v473, %v641
  %v667 = vmul.f32 %v478, %v641
  %v668 = vmul.f32 %v481, %v641
  %v669 = vmul.f32 %v486, %v641
  %v670 = vmul.f32 %v489, %v641
  %v671 = vmul.f32 %v494, %v641
  %v672 = vmul.f32 %v497, %v641
  %v673 = vmul.f32 %v502, %v641
  %v674 = vmul.f32 %v505, %v641
  %v675 = vmul.f32 %v510, %v641
  %v676 = vmul.f32 %v513, %v641
  %v677 = vmul.f32 %v518, %v641
  %v678 = vmul.f32 %v521, %v641
  %v679 = vmul.f32 %v526, %v641
  %v680 = vmul.f32 %v529, %v641
  %v681 = vmul.f32 %v534, %v641
  %v682 = vmul.f32 %v537, %v641
  %v683 = vmul.f32 %v542, %v641
  %v684 = vmul.f32 %v545, %v641
  %v685 = vmul.f32 %v550, %v641
  %v686 = vmul.f32 %v553, %v641
  %v687 = vmul.f32 %v558, %v641
  %v688 = vmul.f32 %v561, %v641
  %v689 = vmul.f32 %v566, %v641
  %v690 = vmul.f32 %v569, %v641
  %v691 = vmul.f32 %v574, %v641
  %v692 = vmul.f32 %v577, %v641
  %v693 = vmul.f32 %v582, %v641
  %v694 = vmul.f32 %v585, %v641
  %v695 = vmul.f32 %v590, %v641
  %v696 = vmul.f32 %v593, %v641
  %v697 = vmul.f32 %v598, %v641
  %v698 = vmul.f32 %v601, %v641
  %v699 = vmul.f32 %v606, %v641
  %v700 = vmul.f32 %v609, %v641
  %v701 = vmul.f32 %v614, %v641
  %v702 = vmul.f32 %v617, %v641
  %v703 = vmul.f32 %v622, %v641
  %v704 = vmul.f32 %v625, %v641
  %v705 = vmul.f32 %v630, %v641
  %v706 = vmul.f32 %v633, %v641
  %v707 = vld [vmem:[%s3] sm:$0x1]
  %v709 = vlaneseq
  %v710 = vshrl.u32 %v709, 7
  %v711 = vsub.s32 0, %v710
  %v712 = vrot.slane %v707, %v711
  %v714 = vadd.f32 %v643, %v712
  %v715 = vadd.f32 %v644, %v712
  %v716 = vadd.f32 %v645, %v712
  %v717 = vadd.f32 %v646, %v712
  %v718 = vadd.f32 %v647, %v712
  %v719 = vadd.f32 %v648, %v712
  %v720 = vadd.f32 %v649, %v712
  %v721 = vadd.f32 %v650, %v712
  %v722 = vadd.f32 %v651, %v712
  %v723 = vadd.f32 %v652, %v712
  %v724 = vadd.f32 %v653, %v712
  %v725 = vadd.f32 %v654, %v712
  %v726 = vadd.f32 %v655, %v712
  %v727 = vadd.f32 %v656, %v712
  %v728 = vadd.f32 %v657, %v712
  %v729 = vadd.f32 %v658, %v712
  %v730 = vadd.f32 %v659, %v712
  %v731 = vadd.f32 %v660, %v712
  %v732 = vadd.f32 %v661, %v712
  %v733 = vadd.f32 %v662, %v712
  %v734 = vadd.f32 %v663, %v712
  %v735 = vadd.f32 %v664, %v712
  %v736 = vadd.f32 %v665, %v712
  %v737 = vadd.f32 %v666, %v712
  %v738 = vadd.f32 %v667, %v712
  %v739 = vadd.f32 %v668, %v712
  %v740 = vadd.f32 %v669, %v712
  %v741 = vadd.f32 %v670, %v712
  %v742 = vadd.f32 %v671, %v712
  %v743 = vadd.f32 %v672, %v712
  %v744 = vadd.f32 %v673, %v712
  %v745 = vadd.f32 %v674, %v712
  %v746 = vadd.f32 %v675, %v712
  %v747 = vadd.f32 %v676, %v712
  %v748 = vadd.f32 %v677, %v712
  %v749 = vadd.f32 %v678, %v712
  %v750 = vadd.f32 %v679, %v712
  %v751 = vadd.f32 %v680, %v712
  %v752 = vadd.f32 %v681, %v712
  %v753 = vadd.f32 %v682, %v712
  %v754 = vadd.f32 %v683, %v712
  %v755 = vadd.f32 %v684, %v712
  %v756 = vadd.f32 %v685, %v712
  %v757 = vadd.f32 %v686, %v712
  %v758 = vadd.f32 %v687, %v712
  %v759 = vadd.f32 %v688, %v712
  %v760 = vadd.f32 %v689, %v712
  %v761 = vadd.f32 %v690, %v712
  %v762 = vadd.f32 %v691, %v712
  %v763 = vadd.f32 %v692, %v712
  %v764 = vadd.f32 %v693, %v712
  %v765 = vadd.f32 %v694, %v712
  %v766 = vadd.f32 %v695, %v712
  %v767 = vadd.f32 %v696, %v712
  %v768 = vadd.f32 %v697, %v712
  %v769 = vadd.f32 %v698, %v712
  %v770 = vadd.f32 %v699, %v712
  %v771 = vadd.f32 %v700, %v712
  %v772 = vadd.f32 %v701, %v712
  %v773 = vadd.f32 %v702, %v712
  %v774 = vadd.f32 %v703, %v712
  %v775 = vadd.f32 %v704, %v712
  %v776 = vadd.f32 %v705, %v712
  %v777 = vadd.f32 %v706, %v712
  %v778 = vmax.f32 %v714, 0.0
  %v779 = vmax.f32 %v715, 0.0
  %v780 = vmax.f32 %v716, 0.0
  %v781 = vmax.f32 %v717, 0.0
  %v782 = vmax.f32 %v718, 0.0
  %v783 = vmax.f32 %v719, 0.0
  %v784 = vmax.f32 %v720, 0.0
  %v785 = vmax.f32 %v721, 0.0
  %v786 = vmax.f32 %v722, 0.0
  %v787 = vmax.f32 %v723, 0.0
  %v788 = vmax.f32 %v724, 0.0
  %v789 = vmax.f32 %v725, 0.0
  %v790 = vmax.f32 %v726, 0.0
  %v791 = vmax.f32 %v727, 0.0
  %v792 = vmax.f32 %v728, 0.0
  %v793 = vmax.f32 %v729, 0.0
  %v794 = vmax.f32 %v730, 0.0
  %v795 = vmax.f32 %v731, 0.0
  %v796 = vmax.f32 %v732, 0.0
  %v797 = vmax.f32 %v733, 0.0
  %v798 = vmax.f32 %v734, 0.0
  %v799 = vmax.f32 %v735, 0.0
  %v800 = vmax.f32 %v736, 0.0
  %v801 = vmax.f32 %v737, 0.0
  %v802 = vmax.f32 %v738, 0.0
  %v803 = vmax.f32 %v739, 0.0
  %v804 = vmax.f32 %v740, 0.0
  %v805 = vmax.f32 %v741, 0.0
  %v806 = vmax.f32 %v742, 0.0
  %v807 = vmax.f32 %v743, 0.0
  %v808 = vmax.f32 %v744, 0.0
  %v809 = vmax.f32 %v745, 0.0
  %v810 = vmax.f32 %v746, 0.0
  %v811 = vmax.f32 %v747, 0.0
  %v812 = vmax.f32 %v748, 0.0
  %v813 = vmax.f32 %v749, 0.0
  %v814 = vmax.f32 %v750, 0.0
  %v815 = vmax.f32 %v751, 0.0
  %v816 = vmax.f32 %v752, 0.0
  %v817 = vmax.f32 %v753, 0.0
  %v818 = vmax.f32 %v754, 0.0
  %v819 = vmax.f32 %v755, 0.0
  %v820 = vmax.f32 %v756, 0.0
  %v821 = vmax.f32 %v757, 0.0
  %v822 = vmax.f32 %v758, 0.0
  %v823 = vmax.f32 %v759, 0.0
  %v824 = vmax.f32 %v760, 0.0
  %v825 = vmax.f32 %v761, 0.0
  %v826 = vmax.f32 %v762, 0.0
  %v827 = vmax.f32 %v763, 0.0
  %v828 = vmax.f32 %v764, 0.0
  %v829 = vmax.f32 %v765, 0.0
  %v830 = vmax.f32 %v766, 0.0
  %v831 = vmax.f32 %v767, 0.0
  %v832 = vmax.f32 %v768, 0.0
  %v833 = vmax.f32 %v769, 0.0
  %v834 = vmax.f32 %v770, 0.0
  %v835 = vmax.f32 %v771, 0.0
  %v836 = vmax.f32 %v772, 0.0
  %v837 = vmax.f32 %v773, 0.0
  %v838 = vmax.f32 %v774, 0.0
  %v839 = vmax.f32 %v775, 0.0
  %v840 = vmax.f32 %v776, 0.0
  %v841 = vmax.f32 %v777, 0.0
  %v842 = vpack.c.bf16 %v779, %v778
  %v843 = vpack.c.bf16 %v781, %v780
  %v844 = vpack.c.bf16 %v783, %v782
  %v845 = vpack.c.bf16 %v785, %v784
  %v846 = vpack.c.bf16 %v787, %v786
  %v847 = vpack.c.bf16 %v789, %v788
  %v848 = vpack.c.bf16 %v791, %v790
  %v849 = vpack.c.bf16 %v793, %v792
  %v850 = vpack.c.bf16 %v795, %v794
  %v851 = vpack.c.bf16 %v797, %v796
  %v852 = vpack.c.bf16 %v799, %v798
  %v853 = vpack.c.bf16 %v801, %v800
  %v854 = vpack.c.bf16 %v803, %v802
  %v855 = vpack.c.bf16 %v805, %v804
  %v856 = vpack.c.bf16 %v807, %v806
  %v857 = vpack.c.bf16 %v809, %v808
  %v858 = vpack.c.bf16 %v811, %v810
  %v859 = vpack.c.bf16 %v813, %v812
  %v860 = vpack.c.bf16 %v815, %v814
  %v861 = vpack.c.bf16 %v817, %v816
  %v862 = vpack.c.bf16 %v819, %v818
  %v863 = vpack.c.bf16 %v821, %v820
  %v864 = vpack.c.bf16 %v823, %v822
  %v865 = vpack.c.bf16 %v825, %v824
  %v866 = vpack.c.bf16 %v827, %v826
  %v867 = vpack.c.bf16 %v829, %v828
  %v868 = vpack.c.bf16 %v831, %v830
  %v869 = vpack.c.bf16 %v833, %v832
  %v870 = vpack.c.bf16 %v835, %v834
  %v871 = vpack.c.bf16 %v837, %v836
  %v872 = vpack.c.bf16 %v839, %v838
  %v873 = vpack.c.bf16 %v841, %v840
  %v906 = vunpack.c.l.b16 %v842
  %v907 = vunpack.c.h.b16 %v842
  %v908 = vunpack.c.l.b16 %v843
  %v909 = vunpack.c.h.b16 %v843
  %v910 = vunpack.c.l.b16 %v844
  %v911 = vunpack.c.h.b16 %v844
  %v912 = vunpack.c.l.b16 %v845
  %v913 = vunpack.c.h.b16 %v845
  %v914 = vunpack.c.l.b16 %v846
  %v915 = vunpack.c.h.b16 %v846
  %v916 = vunpack.c.l.b16 %v847
  %v917 = vunpack.c.h.b16 %v847
  %v918 = vunpack.c.l.b16 %v848
  %v919 = vunpack.c.h.b16 %v848
  %v920 = vunpack.c.l.b16 %v849
  %v921 = vunpack.c.h.b16 %v849
  %v922 = vunpack.c.l.b16 %v850
  %v923 = vunpack.c.h.b16 %v850
  %v924 = vunpack.c.l.b16 %v851
  %v925 = vunpack.c.h.b16 %v851
  %v926 = vunpack.c.l.b16 %v852
  %v927 = vunpack.c.h.b16 %v852
  %v928 = vunpack.c.l.b16 %v853
  %v929 = vunpack.c.h.b16 %v853
  %v930 = vunpack.c.l.b16 %v854
  %v931 = vunpack.c.h.b16 %v854
  %v932 = vunpack.c.l.b16 %v855
  %v933 = vunpack.c.h.b16 %v855
  %v934 = vunpack.c.l.b16 %v856
  %v935 = vunpack.c.h.b16 %v856
  %v936 = vunpack.c.l.b16 %v857
  %v937 = vunpack.c.h.b16 %v857
  %v938 = vunpack.c.l.b16 %v858
  %v939 = vunpack.c.h.b16 %v858
  %v940 = vunpack.c.l.b16 %v859
  %v941 = vunpack.c.h.b16 %v859
  %v942 = vunpack.c.l.b16 %v860
  %v943 = vunpack.c.h.b16 %v860
  %v944 = vunpack.c.l.b16 %v861
  %v945 = vunpack.c.h.b16 %v861
  %v946 = vunpack.c.l.b16 %v862
  %v947 = vunpack.c.h.b16 %v862
  %v948 = vunpack.c.l.b16 %v863
  %v949 = vunpack.c.h.b16 %v863
  %v950 = vunpack.c.l.b16 %v864
  %v951 = vunpack.c.h.b16 %v864
  %v952 = vunpack.c.l.b16 %v865
  %v953 = vunpack.c.h.b16 %v865
  %v954 = vunpack.c.l.b16 %v866
  %v955 = vunpack.c.h.b16 %v866
  %v956 = vunpack.c.l.b16 %v867
  %v957 = vunpack.c.h.b16 %v867
  %v958 = vunpack.c.l.b16 %v868
  %v959 = vunpack.c.h.b16 %v868
  %v960 = vunpack.c.l.b16 %v869
  %v961 = vunpack.c.h.b16 %v869
  %v962 = vunpack.c.l.b16 %v870
  %v963 = vunpack.c.h.b16 %v870
  %v964 = vunpack.c.l.b16 %v871
  %v965 = vunpack.c.h.b16 %v871
  %v966 = vunpack.c.l.b16 %v872
  %v967 = vunpack.c.h.b16 %v872
  %v968 = vunpack.c.l.b16 %v873
  %v969 = vunpack.c.h.b16 %v873
  %v970 = vpack.c.b16 %v906, %v906
  %v971 = vpack.c.b16 %v907, %v907
  %v972 = vpack.c.b16 %v908, %v908
  %v973 = vpack.c.b16 %v909, %v909
  %v974 = vpack.c.b16 %v910, %v910
  %v975 = vpack.c.b16 %v911, %v911
  %v976 = vpack.c.b16 %v912, %v912
  %v977 = vpack.c.b16 %v913, %v913
  %v978 = vpack.c.b16 %v914, %v914
  %v979 = vpack.c.b16 %v915, %v915
  %v980 = vpack.c.b16 %v916, %v916
  %v981 = vpack.c.b16 %v917, %v917
  %v982 = vpack.c.b16 %v918, %v918
  %v983 = vpack.c.b16 %v919, %v919
  %v984 = vpack.c.b16 %v920, %v920
  %v985 = vpack.c.b16 %v921, %v921
  %v986 = vpack.c.b16 %v922, %v922
  %v987 = vpack.c.b16 %v923, %v923
  %v988 = vpack.c.b16 %v924, %v924
  %v989 = vpack.c.b16 %v925, %v925
  %v990 = vpack.c.b16 %v926, %v926
  %v991 = vpack.c.b16 %v927, %v927
  %v992 = vpack.c.b16 %v928, %v928
  %v993 = vpack.c.b16 %v929, %v929
  %v994 = vpack.c.b16 %v930, %v930
  %v995 = vpack.c.b16 %v931, %v931
  %v996 = vpack.c.b16 %v932, %v932
  %v997 = vpack.c.b16 %v933, %v933
  %v998 = vpack.c.b16 %v934, %v934
  %v999 = vpack.c.b16 %v935, %v935
  %v1000 = vpack.c.b16 %v936, %v936
  %v1001 = vpack.c.b16 %v937, %v937
  %v1002 = vpack.c.b16 %v938, %v938
  %v1003 = vpack.c.b16 %v939, %v939
  %v1004 = vpack.c.b16 %v940, %v940
  %v1005 = vpack.c.b16 %v941, %v941
  %v1006 = vpack.c.b16 %v942, %v942
  %v1007 = vpack.c.b16 %v943, %v943
  %v1008 = vpack.c.b16 %v944, %v944
  %v1009 = vpack.c.b16 %v945, %v945
  %v1010 = vpack.c.b16 %v946, %v946
  %v1011 = vpack.c.b16 %v947, %v947
  %v1012 = vpack.c.b16 %v948, %v948
  %v1013 = vpack.c.b16 %v949, %v949
  %v1014 = vpack.c.b16 %v950, %v950
  %v1015 = vpack.c.b16 %v951, %v951
  %v1016 = vpack.c.b16 %v952, %v952
  %v1017 = vpack.c.b16 %v953, %v953
  %v1018 = vpack.c.b16 %v954, %v954
  %v1019 = vpack.c.b16 %v955, %v955
  %v1020 = vpack.c.b16 %v956, %v956
  %v1021 = vpack.c.b16 %v957, %v957
  %v1022 = vpack.c.b16 %v958, %v958
  %v1023 = vpack.c.b16 %v959, %v959
  %v1024 = vpack.c.b16 %v960, %v960
  %v1025 = vpack.c.b16 %v961, %v961
  %v1026 = vpack.c.b16 %v962, %v962
  %v1027 = vpack.c.b16 %v963, %v963
  %v1028 = vpack.c.b16 %v964, %v964
  %v1029 = vpack.c.b16 %v965, %v965
  %v1030 = vpack.c.b16 %v966, %v966
  %v1031 = vpack.c.b16 %v967, %v967
  %v1032 = vpack.c.b16 %v968, %v968
  %v1033 = vpack.c.b16 %v969, %v969
  %1098 = vst [vmem:[%s4] sm:$0xf] %v970
  %1099 = vst [vmem:[%s4 + $0x4] sm:$0xf] %v971
  %1100 = vst [vmem:[%s4 + $0x8] sm:$0xf] %v972
  %1101 = vst [vmem:[%s4 + $0xc] sm:$0xf] %v973
  %1102 = vst [vmem:[%s4 + $0x10] sm:$0xf] %v974
  %1103 = vst [vmem:[%s4 + $0x14] sm:$0xf] %v975
  %1104 = vst [vmem:[%s4 + $0x18] sm:$0xf] %v976
  %1105 = vst [vmem:[%s4 + $0x1c] sm:$0xf] %v977
  %1106 = vst [vmem:[%s4 + $0x20] sm:$0xf] %v978
  %1107 = vst [vmem:[%s4 + $0x24] sm:$0xf] %v979
  %1108 = vst [vmem:[%s4 + $0x28] sm:$0xf] %v980
  %1109 = vst [vmem:[%s4 + $0x2c] sm:$0xf] %v981
  %1110 = vst [vmem:[%s4 + $0x30] sm:$0xf] %v982
  %1111 = vst [vmem:[%s4 + $0x34] sm:$0xf] %v983
  %1112 = vst [vmem:[%s4 + $0x38] sm:$0xf] %v984
  %1113 = vst [vmem:[%s4 + $0x3c] sm:$0xf] %v985
  %1114 = vst [vmem:[%s4 + $0x40] sm:$0xf] %v986
  %1115 = vst [vmem:[%s4 + $0x44] sm:$0xf] %v987
  %1116 = vst [vmem:[%s4 + $0x48] sm:$0xf] %v988
  %1117 = vst [vmem:[%s4 + $0x4c] sm:$0xf] %v989
  %1118 = vst [vmem:[%s4 + $0x50] sm:$0xf] %v990
  %1119 = vst [vmem:[%s4 + $0x54] sm:$0xf] %v991
  %1120 = vst [vmem:[%s4 + $0x58] sm:$0xf] %v992
  %1121 = vst [vmem:[%s4 + $0x5c] sm:$0xf] %v993
  %1122 = vst [vmem:[%s4 + $0x60] sm:$0xf] %v994
  %1123 = vst [vmem:[%s4 + $0x64] sm:$0xf] %v995
  %1124 = vst [vmem:[%s4 + $0x68] sm:$0xf] %v996
  %1125 = vst [vmem:[%s4 + $0x6c] sm:$0xf] %v997
  %1126 = vst [vmem:[%s4 + $0x70] sm:$0xf] %v998
  %1127 = vst [vmem:[%s4 + $0x74] sm:$0xf] %v999
  %1128 = vst [vmem:[%s4 + $0x78] sm:$0xf] %v1000
  %1129 = vst [vmem:[%s4 + $0x7c] sm:$0xf] %v1001
  %1130 = vst [vmem:[%s4 + $0x80] sm:$0xf] %v1002
  %1131 = vst [vmem:[%s4 + $0x84] sm:$0xf] %v1003
  %1132 = vst [vmem:[%s4 + $0x88] sm:$0xf] %v1004
  %1133 = vst [vmem:[%s4 + $0x8c] sm:$0xf] %v1005
  %1134 = vst [vmem:[%s4 + $0x90] sm:$0xf] %v1006
  %1135 = vst [vmem:[%s4 + $0x94] sm:$0xf] %v1007
  %1136 = vst [vmem:[%s4 + $0x98] sm:$0xf] %v1008
  %1137 = vst [vmem:[%s4 + $0x9c] sm:$0xf] %v1009
  %1138 = vst [vmem:[%s4 + $0xa0] sm:$0xf] %v1010
  %1139 = vst [vmem:[%s4 + $0xa4] sm:$0xf] %v1011
  %1140 = vst [vmem:[%s4 + $0xa8] sm:$0xf] %v1012
  %1141 = vst [vmem:[%s4 + $0xac] sm:$0xf] %v1013
  %1142 = vst [vmem:[%s4 + $0xb0] sm:$0xf] %v1014
  %1143 = vst [vmem:[%s4 + $0xb4] sm:$0xf] %v1015
  %1144 = vst [vmem:[%s4 + $0xb8] sm:$0xf] %v1016
  %1145 = vst [vmem:[%s4 + $0xbc] sm:$0xf] %v1017
  %1146 = vst [vmem:[%s4 + $0xc0] sm:$0xf] %v1018
  %1147 = vst [vmem:[%s4 + $0xc4] sm:$0xf] %v1019
  %1148 = vst [vmem:[%s4 + $0xc8] sm:$0xf] %v1020
  %1149 = vst [vmem:[%s4 + $0xcc] sm:$0xf] %v1021
  %1150 = vst [vmem:[%s4 + $0xd0] sm:$0xf] %v1022
  %1151 = vst [vmem:[%s4 + $0xd4] sm:$0xf] %v1023
  %1152 = vst [vmem:[%s4 + $0xd8] sm:$0xf] %v1024
  %1153 = vst [vmem:[%s4 + $0xdc] sm:$0xf] %v1025
  %1154 = vst [vmem:[%s4 + $0xe0] sm:$0xf] %v1026
  %1155 = vst [vmem:[%s4 + $0xe4] sm:$0xf] %v1027
  %1156 = vst [vmem:[%s4 + $0xe8] sm:$0xf] %v1028
  %1157 = vst [vmem:[%s4 + $0xec] sm:$0xf] %v1029
  %1158 = vst [vmem:[%s4 + $0xf0] sm:$0xf] %v1030
  %1159 = vst [vmem:[%s4 + $0xf4] sm:$0xf] %v1031
  %1160 = vst [vmem:[%s4 + $0xf8] sm:$0xf] %v1032
  %1161 = vst [vmem:[%s4 + $0xfc] sm:$0xf] %v1033
  // Predicated region
  $region18: #{bottleneck_forward.3} parent=0 // pred_check
    _
  $region19: #{bottleneck_forward.3} parent=0 // pred_check_branch
    %1163 = sbr.rel (0) target = $region21
  $region20: #{bottleneck_forward.3} parent=0 // pred_region
    _
  $region21: #{bottleneck_forward.3} parent=0 // pred_fallthru
    _
  // Predicated region
  $region22: #{bottleneck_forward.3} parent=0 // pred_check
    _
  $region23: #{bottleneck_forward.3} parent=0 // pred_check_branch
    %1165 = sbr.rel (0) target = $region25
  $region24: #{bottleneck_forward.3} parent=0 // pred_region
    _
  $region25: #{bottleneck_forward.3} parent=0 // pred_fallthru
    _

// kernel: bottleneck_forward.5
$region0: #{bottleneck_forward.5}
  #allocation0 [shape = 'u32[]', space=smem, size = 0x4, offset = 0x4, fixed_abs, tag = 'smem constant byte address 0x4 - core index']
  #allocation1 [shape = 'u32[144,128]{1,0:T(1,128)}', space=vmem, size = 0x12000, scoped, tag = 'internal scratch']
  %s0 = inlined_call_operand.vmem [shape: bf16[128,128], index: 0, kind: input, shape index: {}]
  %s1 = inlined_call_operand.vmem [shape: bf16[128,16], index: 1, kind: input, shape index: {}]
  %s2 = inlined_call_operand.vmem [shape: bf16[128,128], index: 2, kind: input, shape index: {}]
  %s3 = inlined_call_operand.vmem [shape: bf16[16,128], index: 3, kind: input, shape index: {}]
  %s4 = inlined_call_operand.vmem [shape: f32[1,128], index: 4, kind: input, shape index: {}]
  %s5 = inlined_call_operand.vmem [shape: f32[1,128], index: 5, kind: input, shape index: {}]
  %s6 = inlined_call_operand.vmem [shape: f32[1,128], index: 6, kind: input, shape index: {}]
  %s7 = inlined_call_operand.vmem [shape: f32[128,128], index: 7, kind: output, shape index: {}]
  %s8 = sld [smem:[#allocation0]]
  $region38: #{bottleneck_forward.5} parent=0
    _
  %s10 = ssub.s32 1, %s8
  %s11 = scalar_select 0, %s10, %s8
  // Predicated region
  $region2: #{bottleneck_forward.5} parent=0 // pred_check
    _
  $region3: #{bottleneck_forward.5} parent=0 // pred_check_branch
    %13 = sbr.rel (0) target = $region5
  $region4: #{bottleneck_forward.5} parent=0 // pred_region
    _
  $region5: #{bottleneck_forward.5} parent=0 // pred_fallthru
    _
  // Predicated region
  $region6: #{bottleneck_forward.5} parent=0 // pred_check
    _
  $region7: #{bottleneck_forward.5} parent=0 // pred_check_branch
    %15 = sbr.rel (0) target = $region9
  $region8: #{bottleneck_forward.5} parent=0 // pred_region
    _
  $region9: #{bottleneck_forward.5} parent=0 // pred_fallthru
    _
  // Predicated region
  $region10: #{bottleneck_forward.5} parent=0 // pred_check
    _
  $region11: #{bottleneck_forward.5} parent=0 // pred_check_branch
    %17 = sbr.rel (0) target = $region13
  $region12: #{bottleneck_forward.5} parent=0 // pred_region
    _
  $region13: #{bottleneck_forward.5} parent=0 // pred_fallthru
    _
  // Predicated region
  $region14: #{bottleneck_forward.5} parent=0 // pred_check
    _
  $region15: #{bottleneck_forward.5} parent=0 // pred_check_branch
    %19 = sbr.rel (0) target = $region17
  $region16: #{bottleneck_forward.5} parent=0 // pred_region
    _
  $region17: #{bottleneck_forward.5} parent=0 // pred_fallthru
    _
  // Predicated region
  $region18: #{bottleneck_forward.5} parent=0 // pred_check
    _
  $region19: #{bottleneck_forward.5} parent=0 // pred_check_branch
    %21 = sbr.rel (0) target = $region21
  $region20: #{bottleneck_forward.5} parent=0 // pred_region
    _
  $region21: #{bottleneck_forward.5} parent=0 // pred_fallthru
    _
  // Predicated region
  $region22: #{bottleneck_forward.5} parent=0 // pred_check
    _
  $region23: #{bottleneck_forward.5} parent=0 // pred_check_branch
    %23 = sbr.rel (0) target = $region25
  $region24: #{bottleneck_forward.5} parent=0 // pred_region
    _
  $region25: #{bottleneck_forward.5} parent=0 // pred_fallthru
    _
  // Predicated region
  $region26: #{bottleneck_forward.5} parent=0 // pred_check
    _
  $region27: #{bottleneck_forward.5} parent=0 // pred_check_branch
    %25 = sbr.rel (0) target = $region29
  $region28: #{bottleneck_forward.5} parent=0 // pred_region
    _
  $region29: #{bottleneck_forward.5} parent=0 // pred_fallthru
    _
  %v27 = vld [vmem:[%s0] sm:$0xf]
  %v28 = vld [vmem:[%s0 + $0x4] sm:$0xf]
  %v29 = vld [vmem:[%s0 + $0x8] sm:$0xf]
  %v30 = vld [vmem:[%s0 + $0xc] sm:$0xf]
  %v31 = vld [vmem:[%s0 + $0x10] sm:$0xf]
  %v32 = vld [vmem:[%s0 + $0x14] sm:$0xf]
  %v33 = vld [vmem:[%s0 + $0x18] sm:$0xf]
  %v34 = vld [vmem:[%s0 + $0x1c] sm:$0xf]
  %v35 = vld [vmem:[%s0 + $0x20] sm:$0xf]
  %v36 = vld [vmem:[%s0 + $0x24] sm:$0xf]
  %v37 = vld [vmem:[%s0 + $0x28] sm:$0xf]
  %v38 = vld [vmem:[%s0 + $0x2c] sm:$0xf]
  %v39 = vld [vmem:[%s0 + $0x30] sm:$0xf]
  %v40 = vld [vmem:[%s0 + $0x34] sm:$0xf]
  %v41 = vld [vmem:[%s0 + $0x38] sm:$0xf]
  %v42 = vld [vmem:[%s0 + $0x3c] sm:$0xf]
  %v43 = vld [vmem:[%s2] sm:$0xf]
  %v44 = vld [vmem:[%s2 + $0x4] sm:$0xf]
  %v45 = vld [vmem:[%s2 + $0x8] sm:$0xf]
  %v46 = vld [vmem:[%s2 + $0xc] sm:$0xf]
  %v47 = vld [vmem:[%s2 + $0x10] sm:$0xf]
  %v48 = vld [vmem:[%s2 + $0x14] sm:$0xf]
  %v49 = vld [vmem:[%s2 + $0x18] sm:$0xf]
  %v50 = vld [vmem:[%s2 + $0x1c] sm:$0xf]
  %v51 = vld [vmem:[%s2 + $0x20] sm:$0xf]
  %v52 = vld [vmem:[%s2 + $0x24] sm:$0xf]
  %v53 = vld [vmem:[%s2 + $0x28] sm:$0xf]
  %v54 = vld [vmem:[%s2 + $0x2c] sm:$0xf]
  %v55 = vld [vmem:[%s2 + $0x30] sm:$0xf]
  %v56 = vld [vmem:[%s2 + $0x34] sm:$0xf]
  %v57 = vld [vmem:[%s2 + $0x38] sm:$0xf]
  %v58 = vld [vmem:[%s2 + $0x3c] sm:$0xf]
  %v75 = vunpack.c.l.b16 %v27
  %v76 = vunpack.c.l.b16 %v28
  %v77 = vunpack.c.l.b16 %v29
  %v78 = vunpack.c.l.b16 %v30
  %v79 = vunpack.c.l.b16 %v31
  %v80 = vunpack.c.l.b16 %v32
  %v81 = vunpack.c.l.b16 %v33
  %v82 = vunpack.c.l.b16 %v34
  %v83 = vunpack.c.l.b16 %v35
  %v84 = vunpack.c.l.b16 %v36
  %v85 = vunpack.c.l.b16 %v37
  %v86 = vunpack.c.l.b16 %v38
  %v87 = vunpack.c.l.b16 %v39
  %v88 = vunpack.c.l.b16 %v40
  %v89 = vunpack.c.l.b16 %v41
  %v90 = vunpack.c.l.b16 %v42
  %v91 = vpack.c.b16 %v76, %v75
  %v92 = vpack.c.b16 %v78, %v77
  %v93 = vpack.c.b16 %v80, %v79
  %v94 = vpack.c.b16 %v82, %v81
  %v95 = vpack.c.b16 %v84, %v83
  %v96 = vpack.c.b16 %v86, %v85
  %v97 = vpack.c.b16 %v88, %v87
  %v98 = vpack.c.b16 %v90, %v89
  %v123 = vunpack.c.l.b16 %v43
  %v124 = vunpack.c.l.b16 %v44
  %v125 = vunpack.c.l.b16 %v45
  %v126 = vunpack.c.l.b16 %v46
  %v127 = vunpack.c.l.b16 %v47
  %v128 = vunpack.c.l.b16 %v48
  %v129 = vunpack.c.l.b16 %v49
  %v130 = vunpack.c.l.b16 %v50
  %v131 = vunpack.c.l.b16 %v51
  %v132 = vunpack.c.l.b16 %v52
  %v133 = vunpack.c.l.b16 %v53
  %v134 = vunpack.c.l.b16 %v54
  %v135 = vunpack.c.l.b16 %v55
  %v136 = vunpack.c.l.b16 %v56
  %v137 = vunpack.c.l.b16 %v57
  %v138 = vunpack.c.l.b16 %v58
  %v139 = vpack.c.b16 %v124, %v123
  %v140 = vpack.c.b16 %v126, %v125
  %v141 = vpack.c.b16 %v128, %v127
  %v142 = vpack.c.b16 %v130, %v129
  %v143 = vpack.c.b16 %v132, %v131
  %v144 = vpack.c.b16 %v134, %v133
  %v145 = vpack.c.b16 %v136, %v135
  %v146 = vpack.c.b16 %v138, %v137
  %155 = vmatprep.subr.bf16.mxu0 0
  %156 = vmatpush1.bf16.msra.mxu0 %v139
  %157 = vmatprep.subr.bf16.mxu0 0
  %158 = vmatpush1.bf16.msra.mxu0 %v140
  %159 = vmatprep.subr.bf16.mxu0 0
  %160 = vmatpush1.bf16.msra.mxu0 %v141
  %161 = vmatprep.subr.bf16.mxu0 0
  %162 = vmatpush1.bf16.msra.mxu0 %v142
  %163 = vmatprep.subr.bf16.mxu0 0
  %164 = vmatpush1.bf16.msra.mxu0 %v143
  %165 = vmatprep.subr.bf16.mxu0 0
  %166 = vmatpush1.bf16.msra.mxu0 %v144
  %167 = vmatprep.subr.bf16.mxu0 0
  %168 = vmatpush1.bf16.msra.mxu0 %v145
  %169 = vmatprep.subr.bf16.mxu0 0
  %170 = vmatpush1.bf16.msra.mxu0 %v146
  %171 = vmatprep.subr.bf16.mxu0 0
  %172 = vmatpush1.bf16.msra.mxu0 0
  %173 = vmatprep.subr.bf16.mxu0 0
  %174 = vmatpush1.bf16.msra.mxu0 0
  %175 = vmatprep.subr.bf16.mxu0 0
  %176 = vmatpush1.bf16.msra.mxu0 0
  %177 = vmatprep.subr.bf16.mxu0 0
  %178 = vmatpush1.bf16.msra.mxu0 0
  %179 = vmatprep.subr.bf16.mxu0 0
  %180 = vmatpush1.bf16.msra.mxu0 0
  %181 = vmatprep.subr.bf16.mxu0 0
  %182 = vmatpush1.bf16.msra.mxu0 0
  %183 = vmatprep.subr.bf16.mxu0 0
  %184 = vmatpush1.bf16.msra.mxu0 0
  %185 = vmatprep.subr.bf16.mxu0 0
  %186 = vmatpush1.bf16.msra.mxu0 0
  %187 = vmatprep.mubr.bf16.mxu0 0
  %188 = vmatmul.mubr.bf16.gmra.mrb[0].mxu0 %v91
  %v189 = vpop.f32.mrb[0].mxu0
  %v190 = vadd.f32 0.0, %v189
  %v191 = vpop.f32.mrb[0].mxu0
  %v192 = vpop.f32.mrb[0].mxu0
  %v193 = vadd.f32 0.0, %v192
  %v194 = vpop.f32.mrb[0].mxu0
  %195 = vmatprep.mubr.bf16.mxu0 0
  %196 = vmatmul.mubr.bf16.gmra.mrb[0].mxu0 %v92
  %v197 = vpop.f32.mrb[0].mxu0
  %v198 = vadd.f32 0.0, %v197
  %v199 = vpop.f32.mrb[0].mxu0
  %v200 = vpop.f32.mrb[0].mxu0
  %v201 = vadd.f32 0.0, %v200
  %v202 = vpop.f32.mrb[0].mxu0
  %203 = vmatprep.mubr.bf16.mxu0 0
  %204 = vmatmul.mubr.bf16.gmra.mrb[0].mxu0 %v93
  %v205 = vpop.f32.mrb[0].mxu0
  %v206 = vadd.f32 0.0, %v205
  %v207 = vpop.f32.mrb[0].mxu0
  %v208 = vpop.f32.mrb[0].mxu0
  %v209 = vadd.f32 0.0, %v208
  %v210 = vpop.f32.mrb[0].mxu0
  %211 = vmatprep.mubr.bf16.mxu0 0
  %212 = vmatmul.mubr.bf16.gmra.mrb[0].mxu0 %v94
  %v213 = vpop.f32.mrb[0].mxu0
  %v214 = vadd.f32 0.0, %v213
  %v215 = vpop.f32.mrb[0].mxu0
  %v216 = vpop.f32.mrb[0].mxu0
  %v217 = vadd.f32 0.0, %v216
  %v218 = vpop.f32.mrb[0].mxu0
  %219 = vmatprep.mubr.bf16.mxu0 0
  %220 = vmatmul.mubr.bf16.gmra.mrb[0].mxu0 %v95
  %v221 = vpop.f32.mrb[0].mxu0
  %v222 = vadd.f32 0.0, %v221
  %v223 = vpop.f32.mrb[0].mxu0
  %v224 = vpop.f32.mrb[0].mxu0
  %v225 = vadd.f32 0.0, %v224
  %v226 = vpop.f32.mrb[0].mxu0
  %227 = vmatprep.mubr.bf16.mxu0 0
  %228 = vmatmul.mubr.bf16.gmra.mrb[0].mxu0 %v96
  %v229 = vpop.f32.mrb[0].mxu0
  %v230 = vadd.f32 0.0, %v229
  %v231 = vpop.f32.mrb[0].mxu0
  %v232 = vpop.f32.mrb[0].mxu0
  %v233 = vadd.f32 0.0, %v232
  %v234 = vpop.f32.mrb[0].mxu0
  %235 = vmatprep.mubr.bf16.mxu0 0
  %236 = vmatmul.mubr.bf16.gmra.mrb[0].mxu0 %v97
  %v237 = vpop.f32.mrb[0].mxu0
  %v238 = vadd.f32 0.0, %v237
  %v239 = vpop.f32.mrb[0].mxu0
  %v240 = vpop.f32.mrb[0].mxu0
  %v241 = vadd.f32 0.0, %v240
  %v242 = vpop.f32.mrb[0].mxu0
  %243 = vmatprep.mubr.bf16.mxu0 0
  %244 = vmatmul.mubr.bf16.gmra.mrb[0].mxu0 %v98
  %v245 = vpop.f32.mrb[0].mxu0
  %v246 = vadd.f32 0.0, %v245
  %v247 = vpop.f32.mrb[0].mxu0
  %v248 = vpop.f32.mrb[0].mxu0
  %v249 = vadd.f32 0.0, %v248
  %v250 = vpop.f32.mrb[0].mxu0
  %251 = vdwg.mxu0
  %v252 = vld [vmem:[%s1] sm:$0xf]
  %v253 = vld [vmem:[%s1 + $0x4] sm:$0xf]
  %v254 = vld [vmem:[%s1 + $0x8] sm:$0xf]
  %v255 = vld [vmem:[%s1 + $0xc] sm:$0xf]
  %v256 = vld [vmem:[%s1 + $0x10] sm:$0xf]
  %v257 = vld [vmem:[%s1 + $0x14] sm:$0xf]
  %v258 = vld [vmem:[%s1 + $0x18] sm:$0xf]
  %v259 = vld [vmem:[%s1 + $0x1c] sm:$0xf]
  %v260 = vld [vmem:[%s1 + $0x20] sm:$0xf]
  %v261 = vld [vmem:[%s1 + $0x24] sm:$0xf]
  %v262 = vld [vmem:[%s1 + $0x28] sm:$0xf]
  %v263 = vld [vmem:[%s1 + $0x2c] sm:$0xf]
  %v264 = vld [vmem:[%s1 + $0x30] sm:$0xf]
  %v265 = vld [vmem:[%s1 + $0x34] sm:$0xf]
  %v266 = vld [vmem:[%s1 + $0x38] sm:$0xf]
  %v267 = vld [vmem:[%s1 + $0x3c] sm:$0xf]
  %v268 = vld [vmem:[%s3] sm:$0xf]
  %v269 = vld [vmem:[%s3 + $0x4] sm:$0xf]
  %v286 = vunpack.c.l.b16 %v252
  %v287 = vunpack.c.l.b16 %v253
  %v288 = vunpack.c.l.b16 %v254
  %v289 = vunpack.c.l.b16 %v255
  %v290 = vunpack.c.l.b16 %v256
  %v291 = vunpack.c.l.b16 %v257
  %v292 = vunpack.c.l.b16 %v258
  %v293 = vunpack.c.l.b16 %v259
  %v294 = vunpack.c.l.b16 %v260
  %v295 = vunpack.c.l.b16 %v261
  %v296 = vunpack.c.l.b16 %v262
  %v297 = vunpack.c.l.b16 %v263
  %v298 = vunpack.c.l.b16 %v264
  %v299 = vunpack.c.l.b16 %v265
  %v300 = vunpack.c.l.b16 %v266
  %v301 = vunpack.c.l.b16 %v267
  %v302 = vpack.c.b16 %v287, %v286
  %v303 = vpack.c.b16 %v289, %v288
  %v304 = vpack.c.b16 %v291, %v290
  %v305 = vpack.c.b16 %v293, %v292
  %v306 = vpack.c.b16 %v295, %v294
  %v307 = vpack.c.b16 %v297, %v296
  %v308 = vpack.c.b16 %v299, %v298
  %v309 = vpack.c.b16 %v301, %v300
  %v312 = vunpack.c.l.b16 %v268
  %v313 = vunpack.c.l.b16 %v269
  %v314 = vpack.c.b16 %v313, %v312
  %vm316 = vcmask 130048
  %v318 = vsel %vm316, %v302, 0
  %v321 = vsel %vm316, %v303, 0
  %v324 = vsel %vm316, %v304, 0
  %v327 = vsel %vm316, %v305, 0
  %v330 = vsel %vm316, %v306, 0
  %v333 = vsel %vm316, %v307, 0
  %v336 = vsel %vm316, %v308, 0
  %v339 = vsel %vm316, %v309, 0
  %341 = vmatprep.subr.bf16.mxu0 0
  %342 = vmatpush1.bf16.msra.mxu0 %v314
  %343 = vmatprep.subr.bf16.mxu0 0
  %344 = vmatpush1.bf16.msra.mxu0 0
  %345 = vmatprep.subr.bf16.mxu0 0
  %346 = vmatpush1.bf16.msra.mxu0 0
  %347 = vmatprep.subr.bf16.mxu0 0
  %348 = vmatpush1.bf16.msra.mxu0 0
  %349 = vmatprep.subr.bf16.mxu0 0
  %350 = vmatpush1.bf16.msra.mxu0 0
  %351 = vmatprep.subr.bf16.mxu0 0
  %352 = vmatpush1.bf16.msra.mxu0 0
  %353 = vmatprep.subr.bf16.mxu0 0
  %354 = vmatpush1.bf16.msra.mxu0 0
  %355 = vmatprep.subr.bf16.mxu0 0
  %356 = vmatpush1.bf16.msra.mxu0 0
  %357 = vmatprep.subr.bf16.mxu0 0
  %358 = vmatpush1.bf16.msra.mxu0 0
  %359 = vmatprep.subr.bf16.mxu0 0
  %360 = vmatpush1.bf16.msra.mxu0 0
  %361 = vmatprep.subr.bf16.mxu0 0
  %362 = vmatpush1.bf16.msra.mxu0 0
  %363 = vmatprep.subr.bf16.mxu0 0
  %364 = vmatpush1.bf16.msra.mxu0 0
  %365 = vmatprep.subr.bf16.mxu0 0
  %366 = vmatpush1.bf16.msra.mxu0 0
  %367 = vmatprep.subr.bf16.mxu0 0
  %368 = vmatpush1.bf16.msra.mxu0 0
  %369 = vmatprep.subr.bf16.mxu0 0
  %370 = vmatpush1.bf16.msra.mxu0 0
  %371 = vmatprep.subr.bf16.mxu0 0
  %372 = vmatpush1.bf16.msra.mxu0 0
  %373 = vmatprep.mubr.bf16.mxu0 0
  %374 = vmatmul.mubr.bf16.gmra.mrb[0].mxu0 %v318
  %v375 = vpop.f32.mrb[0].mxu0
  %v376 = vadd.f32 0.0, %v375
  %v377 = vpop.f32.mrb[0].mxu0
  %v378 = vpop.f32.mrb[0].mxu0
  %v379 = vadd.f32 0.0, %v378
  %v380 = vpop.f32.mrb[0].mxu0
  %381 = vmatprep.mubr.bf16.mxu0 0
  %382 = vmatmul.mubr.bf16.gmra.mrb[0].mxu0 %v321
  %v383 = vpop.f32.mrb[0].mxu0
  %v384 = vadd.f32 0.0, %v383
  %v385 = vpop.f32.mrb[0].mxu0
  %v386 = vpop.f32.mrb[0].mxu0
  %v387 = vadd.f32 0.0, %v386
  %v388 = vpop.f32.mrb[0].mxu0
  %389 = vmatprep.mubr.bf16.mxu0 0
  %390 = vmatmul.mubr.bf16.gmra.mrb[0].mxu0 %v324
  %v391 = vpop.f32.mrb[0].mxu0
  %v392 = vadd.f32 0.0, %v391
  %v393 = vpop.f32.mrb[0].mxu0
  %v394 = vpop.f32.mrb[0].mxu0
  %v395 = vadd.f32 0.0, %v394
  %v396 = vpop.f32.mrb[0].mxu0
  %397 = vmatprep.mubr.bf16.mxu0 0
  %398 = vmatmul.mubr.bf16.gmra.mrb[0].mxu0 %v327
  %v399 = vpop.f32.mrb[0].mxu0
  %v400 = vadd.f32 0.0, %v399
  %v401 = vpop.f32.mrb[0].mxu0
  %v402 = vpop.f32.mrb[0].mxu0
  %v403 = vadd.f32 0.0, %v402
  %v404 = vpop.f32.mrb[0].mxu0
  %405 = vmatprep.mubr.bf16.mxu0 0
  %406 = vmatmul.mubr.bf16.gmra.mrb[0].mxu0 %v330
  %v407 = vpop.f32.mrb[0].mxu0
  %v408 = vadd.f32 0.0, %v407
  %v409 = vpop.f32.mrb[0].mxu0
  %v410 = vpop.f32.mrb[0].mxu0
  %v411 = vadd.f32 0.0, %v410
  %v412 = vpop.f32.mrb[0].mxu0
  %413 = vmatprep.mubr.bf16.mxu0 0
  %414 = vmatmul.mubr.bf16.gmra.mrb[0].mxu0 %v333
  %v415 = vpop.f32.mrb[0].mxu0
  %v416 = vadd.f32 0.0, %v415
  %v417 = vpop.f32.mrb[0].mxu0
  %v418 = vpop.f32.mrb[0].mxu0
  %v419 = vadd.f32 0.0, %v418
  %v420 = vpop.f32.mrb[0].mxu0
  %421 = vmatprep.mubr.bf16.mxu0 0
  %422 = vmatmul.mubr.bf16.gmra.mrb[0].mxu0 %v336
  %v423 = vpop.f32.mrb[0].mxu0
  %v424 = vadd.f32 0.0, %v423
  %v425 = vpop.f32.mrb[0].mxu0
  %v426 = vpop.f32.mrb[0].mxu0
  %v427 = vadd.f32 0.0, %v426
  %v428 = vpop.f32.mrb[0].mxu0
  %429 = vmatprep.mubr.bf16.mxu0 0
  %430 = vmatmul.mubr.bf16.gmra.mrb[0].mxu0 %v339
  %v431 = vpop.f32.mrb[0].mxu0
  %v432 = vadd.f32 0.0, %v431
  %v433 = vpop.f32.mrb[0].mxu0
  %v434 = vpop.f32.mrb[0].mxu0
  %v435 = vadd.f32 0.0, %v434
  %v436 = vpop.f32.mrb[0].mxu0
  %437 = vdwg.mxu0
  %v438 = vld [vmem:[%s4] sm:$0x1]
  %v440 = vlaneseq
  %v441 = vshrl.u32 %v440, 7
  %v442 = vsub.s32 0, %v441
  %v443 = vrot.slane %v438, %v442
  %v445 = vmul.f32 %v190, %v443
  %v446 = vmul.f32 %v193, %v443
  %v447 = vmul.f32 %v198, %v443
  %v448 = vmul.f32 %v201, %v443
  %v449 = vmul.f32 %v206, %v443
  %v450 = vmul.f32 %v209, %v443
  %v451 = vmul.f32 %v214, %v443
  %v452 = vmul.f32 %v217, %v443
  %v453 = vmul.f32 %v222, %v443
  %v454 = vmul.f32 %v225, %v443
  %v455 = vmul.f32 %v230, %v443
  %v456 = vmul.f32 %v233, %v443
  %v457 = vmul.f32 %v238, %v443
  %v458 = vmul.f32 %v241, %v443
  %v459 = vmul.f32 %v246, %v443
  %v460 = vmul.f32 %v249, %v443
  %v461 = vld [vmem:[%s5] sm:$0x1]
  %v463 = vlaneseq
  %v464 = vshrl.u32 %v463, 7
  %v465 = vsub.s32 0, %v464
  %v466 = vrot.slane %v461, %v465
  %v468 = vmul.f32 %v376, %v466
  %v469 = vmul.f32 %v379, %v466
  %v470 = vmul.f32 %v384, %v466
  %v471 = vmul.f32 %v387, %v466
  %v472 = vmul.f32 %v392, %v466
  %v473 = vmul.f32 %v395, %v466
  %v474 = vmul.f32 %v400, %v466
  %v475 = vmul.f32 %v403, %v466
  %v476 = vmul.f32 %v408, %v466
  %v477 = vmul.f32 %v411, %v466
  %v478 = vmul.f32 %v416, %v466
  %v479 = vmul.f32 %v419, %v466
  %v480 = vmul.f32 %v424, %v466
  %v481 = vmul.f32 %v427, %v466
  %v482 = vmul.f32 %v432, %v466
  %v483 = vmul.f32 %v435, %v466
  %v484 = vadd.f32 %v445, %v468
  %v485 = vadd.f32 %v446, %v469
  %v486 = vadd.f32 %v447, %v470
  %v487 = vadd.f32 %v448, %v471
  %v488 = vadd.f32 %v449, %v472
  %v489 = vadd.f32 %v450, %v473
  %v490 = vadd.f32 %v451, %v474
  %v491 = vadd.f32 %v452, %v475
  %v492 = vadd.f32 %v453, %v476
  %v493 = vadd.f32 %v454, %v477
  %v494 = vadd.f32 %v455, %v478
  %v495 = vadd.f32 %v456, %v479
  %v496 = vadd.f32 %v457, %v480
  %v497 = vadd.f32 %v458, %v481
  %v498 = vadd.f32 %v459, %v482
  %v499 = vadd.f32 %v460, %v483
  %v500 = vld [vmem:[%s6] sm:$0x1]
  %v502 = vlaneseq
  %v503 = vshrl.u32 %v502, 7
  %v504 = vsub.s32 0, %v503
  %v505 = vrot.slane %v500, %v504
  %v507 = vadd.f32 %v484, %v505
  %v508 = vadd.f32 %v485, %v505
  %v509 = vadd.f32 %v486, %v505
  %v510 = vadd.f32 %v487, %v505
  %v511 = vadd.f32 %v488, %v505
  %v512 = vadd.f32 %v489, %v505
  %v513 = vadd.f32 %v490, %v505
  %v514 = vadd.f32 %v491, %v505
  %v515 = vadd.f32 %v492, %v505
  %v516 = vadd.f32 %v493, %v505
  %v517 = vadd.f32 %v494, %v505
  %v518 = vadd.f32 %v495, %v505
  %v519 = vadd.f32 %v496, %v505
  %v520 = vadd.f32 %v497, %v505
  %v521 = vadd.f32 %v498, %v505
  %v522 = vadd.f32 %v499, %v505
  %v523 = vmax.f32 %v507, 0.0
  %v524 = vmax.f32 %v508, 0.0
  %v525 = vmax.f32 %v509, 0.0
  %v526 = vmax.f32 %v510, 0.0
  %v527 = vmax.f32 %v511, 0.0
  %v528 = vmax.f32 %v512, 0.0
  %v529 = vmax.f32 %v513, 0.0
  %v530 = vmax.f32 %v514, 0.0
  %v531 = vmax.f32 %v515, 0.0
  %v532 = vmax.f32 %v516, 0.0
  %v533 = vmax.f32 %v517, 0.0
  %v534 = vmax.f32 %v518, 0.0
  %v535 = vmax.f32 %v519, 0.0
  %v536 = vmax.f32 %v520, 0.0
  %v537 = vmax.f32 %v521, 0.0
  %v538 = vmax.f32 %v522, 0.0
  %539 = vst [vmem:[%s7] sm:$0xff] %v523
  %540 = vst [vmem:[%s7 + $0x8] sm:$0xff] %v524
  %541 = vst [vmem:[%s7 + $0x10] sm:$0xff] %v525
  %542 = vst [vmem:[%s7 + $0x18] sm:$0xff] %v526
  %543 = vst [vmem:[%s7 + $0x20] sm:$0xff] %v527
  %544 = vst [vmem:[%s7 + $0x28] sm:$0xff] %v528
  %545 = vst [vmem:[%s7 + $0x30] sm:$0xff] %v529
  %546 = vst [vmem:[%s7 + $0x38] sm:$0xff] %v530
  %547 = vst [vmem:[%s7 + $0x40] sm:$0xff] %v531
  %548 = vst [vmem:[%s7 + $0x48] sm:$0xff] %v532
  %549 = vst [vmem:[%s7 + $0x50] sm:$0xff] %v533
  %550 = vst [vmem:[%s7 + $0x58] sm:$0xff] %v534
  %551 = vst [vmem:[%s7 + $0x60] sm:$0xff] %v535
  %552 = vst [vmem:[%s7 + $0x68] sm:$0xff] %v536
  %553 = vst [vmem:[%s7 + $0x70] sm:$0xff] %v537
  %554 = vst [vmem:[%s7 + $0x78] sm:$0xff] %v538
  // Predicated region
  $region30: #{bottleneck_forward.5} parent=0 // pred_check
    _
  $region31: #{bottleneck_forward.5} parent=0 // pred_check_branch
    %556 = sbr.rel (0) target = $region33
  $region32: #{bottleneck_forward.5} parent=0 // pred_region
    _
  $region33: #{bottleneck_forward.5} parent=0 // pred_fallthru
    _
  // Predicated region
  $region34: #{bottleneck_forward.5} parent=0 // pred_check
    _
  $region35: #{bottleneck_forward.5} parent=0 // pred_check_branch
    %558 = sbr.rel (0) target = $region37
  $region36: #{bottleneck_forward.5} parent=0 // pred_region
    _
  $region37: #{bottleneck_forward.5} parent=0 // pred_fallthru
    _

// kernel: bottleneck_forward.4
$region0: #{bottleneck_forward.4}
  #allocation0 [shape = 'u32[]', space=smem, size = 0x4, offset = 0x4, fixed_abs, tag = 'smem constant byte address 0x4 - core index']
  #allocation1 [shape = 'u32[144,128]{1,0:T(1,128)}', space=vmem, size = 0x12000, scoped, tag = 'internal scratch']
  %s0 = inlined_call_operand.vmem [shape: bf16[2,9,2,9,256], index: 0, kind: input, shape index: {}]
  %s1 = inlined_call_operand.vmem [shape: bf16[3,2,256,128], index: 1, kind: input, shape index: {}]
  %s2 = inlined_call_operand.vmem [shape: f32[1,128], index: 2, kind: input, shape index: {}]
  %s3 = inlined_call_operand.vmem [shape: f32[1,128], index: 3, kind: input, shape index: {}]
  %s4 = inlined_call_operand.vmem [shape: bf16[128,128], index: 4, kind: output, shape index: {}]
  %s5 = sld [smem:[#allocation0]]
  $region49: #{bottleneck_forward.4} parent=0
    _
  %s7 = ssub.s32 1, %s5
  %s8 = scalar_select 0, %s7, %s5
  loop: start=0, step=1, limit=4
  $region2: #{bottleneck_forward.4} parent=0 // loop_pre_header
    _
  $region3: #{bottleneck_forward.4} parent=0 // loop_header
    %s10 = sphi 0, %s14
    %p11 = scmp.ge.s32.totalorder %s10, 4
    %s20 = sphi 0, %s22
    %s23 = sphi 0, %s20
    %s24 = sphi 0, %s23
    %s40 = sphi 0, %s24
    %s44 = sphi 0, %s44
    %s46 = sphi 0, %s44
    %s47 = sphi 0, %s46
    %s61 = sphi 0, %s47
    %s65 = sphi 0, %s65
    %s67 = sphi 0, %s65
    %s68 = sphi 0, %s67
    %s82 = sphi 0, %s68
    %s86 = sphi 0, %s86
    %s88 = sphi 0, %s86
    %s89 = sphi 0, %s88
    %s103 = sphi 0, %s89
    %s109 = sphi 0, %s111
    %s112 = sphi 0, %s109
    %s113 = sphi 0, %s112
    %s129 = sphi 0, %s113
  $region4: #{bottleneck_forward.4} parent=0 // loop_header_branch
    %13 = sbr.rel (%p11) target = $region8
  $region5: #{bottleneck_forward.4} parent=0 // loop_body
    %s15 = ssub.s32 %s10, 1
    %s16 = ssub.s32 %s10, 2
    %s17 = sadd.s32 %s10, 1
    %s18 = ssub.s32 %s10, %s17
    %p19 = scmp.eq.s32.totalorder %s18, 0
    %s21 = sadd.s32 %s20, 1
    %s22 = scalar_select %p19, %s20, %s21
    %p25 = pneg %p19
    %p26 = scmp.eq.s32.totalorder %s10, 1
    %p27 = por %p25, %p26
    %p28 = scmp.ne.s32.totalorder %s20, %s23
    %p29 = scmp.eq.s32.totalorder %s10, 0
    %p30 = por %p28, %p29
    %p31 = scmp.ne.s32.totalorder %s20, %s23
    %p32 = scmp.eq.s32.totalorder %s15, 1
    %p33 = por %p31, %p32
    %p34 = scmp.ne.s32.totalorder %s23, %s24
    %p35 = scmp.eq.s32.totalorder %s15, 0
    %p36 = por %p34, %p35
    %p37 = scmp.ne.s32.totalorder %s23, %s24
    %p38 = scmp.eq.s32.totalorder %s16, 1
    %p39 = por %p37, %p38
    %p41 = scmp.ne.s32.totalorder %s24, %s40
    %p42 = scmp.eq.s32.totalorder %s16, 0
    %p43 = por %p41, %p42
    %s45 = sadd.s32 %s44, 1
    %p48 = scmp.eq.s32.totalorder %s10, 1
    %p49 = scmp.ne.s32.totalorder %s44, %s46
    %p50 = scmp.eq.s32.totalorder %s10, 0
    %p51 = por %p49, %p50
    %p52 = scmp.ne.s32.totalorder %s44, %s46
    %p53 = scmp.eq.s32.totalorder %s15, 1
    %p54 = por %p52, %p53
    %p55 = scmp.ne.s32.totalorder %s46, %s47
    %p56 = scmp.eq.s32.totalorder %s15, 0
    %p57 = por %p55, %p56
    %p58 = scmp.ne.s32.totalorder %s46, %s47
    %p59 = scmp.eq.s32.totalorder %s16, 1
    %p60 = por %p58, %p59
    %p62 = scmp.ne.s32.totalorder %s47, %s61
    %p63 = scmp.eq.s32.totalorder %s16, 0
    %p64 = por %p62, %p63
    %s66 = sadd.s32 %s65, 1
    %p69 = scmp.eq.s32.totalorder %s10, 1
    %p70 = scmp.ne.s32.totalorder %s65, %s67
    %p71 = scmp.eq.s32.totalorder %s10, 0
    %p72 = por %p70, %p71
    %p73 = scmp.ne.s32.totalorder %s65, %s67
    %p74 = scmp.eq.s32.totalorder %s15, 1
    %p75 = por %p73, %p74
    %p76 = scmp.ne.s32.totalorder %s67, %s68
    %p77 = scmp.eq.s32.totalorder %s15, 0
    %p78 = por %p76, %p77
    %p79 = scmp.ne.s32.totalorder %s67, %s68
    %p80 = scmp.eq.s32.totalorder %s16, 1
    %p81 = por %p79, %p80
    %p83 = scmp.ne.s32.totalorder %s68, %s82
    %p84 = scmp.eq.s32.totalorder %s16, 0
    %p85 = por %p83, %p84
    %s87 = sadd.s32 %s86, 1
    %p90 = scmp.eq.s32.totalorder %s10, 1
    %p91 = scmp.ne.s32.totalorder %s86, %s88
    %p92 = scmp.eq.s32.totalorder %s10, 0
    %p93 = por %p91, %p92
    %p94 = scmp.ne.s32.totalorder %s86, %s88
    %p95 = scmp.eq.s32.totalorder %s15, 1
    %p96 = por %p94, %p95
    %p97 = scmp.ne.s32.totalorder %s88, %s89
    %p98 = scmp.eq.s32.totalorder %s15, 0
    %p99 = por %p97, %p98
    %p100 = scmp.ne.s32.totalorder %s88, %s89
    %p101 = scmp.eq.s32.totalorder %s16, 1
    %p102 = por %p100, %p101
    %p104 = scmp.ne.s32.totalorder %s89, %s103
    %p105 = scmp.eq.s32.totalorder %s16, 0
    %p106 = por %p104, %p105
    %s107 = ssub.s32 %s10, %s17
    %p108 = scmp.eq.s32.totalorder %s107, 0
    %s110 = sadd.s32 %s109, 1
    %s111 = scalar_select %p108, %s109, %s110
    %p114 = pneg %p108
    %p115 = scmp.eq.s32.totalorder %s10, 1
    %p116 = por %p114, %p115
    %p117 = scmp.ne.s32.totalorder %s109, %s112
    %p118 = scmp.eq.s32.totalorder %s10, 0
    %p119 = por %p117, %p118
    %p120 = scmp.ne.s32.totalorder %s109, %s112
    %p121 = scmp.eq.s32.totalorder %s15, 1
    %p122 = por %p120, %p121
    %p123 = scmp.ne.s32.totalorder %s112, %s113
    %p124 = scmp.eq.s32.totalorder %s15, 0
    %p125 = por %p123, %p124
    %p126 = scmp.ne.s32.totalorder %s112, %s113
    %p127 = scmp.eq.s32.totalorder %s16, 1
    %p128 = por %p126, %p127
    %p130 = scmp.ne.s32.totalorder %s113, %s129
    %p131 = scmp.eq.s32.totalorder %s16, 0
    %p132 = por %p130, %p131
    %p133 = scmp.le.s32.totalorder 1, %s10
    %p134 = scmp.lt.s32.totalorder %s10, 3
    %p135 = pnand %p133, %p134
    %p136 = pneg %p135
    // Predicated region
    $region9: #{bottleneck_forward.4} parent=5 // pred_check
      _
    $region10: #{bottleneck_forward.4} parent=5 // pred_check_branch
      %138 = sbr.rel (%p135) target = $region12
    $region11: #{bottleneck_forward.4} parent=5 // pred_region
      %s139 = ssub.s32 %s10, 1
      // Predicated region
      $region13: #{bottleneck_forward.4} parent=11 // pred_check
        %p140 = pneg %p57
      $region14: #{bottleneck_forward.4} parent=11 // pred_check_branch
        %142 = sbr.rel (%p140) target = $region16
      $region15: #{bottleneck_forward.4} parent=11 // pred_region
        _
      $region16: #{bottleneck_forward.4} parent=11 // pred_fallthru
        _
      // Predicated region
      $region17: #{bottleneck_forward.4} parent=11 // pred_check
        %p143 = pneg %p78
      $region18: #{bottleneck_forward.4} parent=11 // pred_check_branch
        %145 = sbr.rel (%p143) target = $region20
      $region19: #{bottleneck_forward.4} parent=11 // pred_region
        _
      $region20: #{bottleneck_forward.4} parent=11 // pred_fallthru
        _
      // Predicated region
      $region21: #{bottleneck_forward.4} parent=11 // pred_check
        %p146 = pneg %p99
      $region22: #{bottleneck_forward.4} parent=11 // pred_check_branch
        %148 = sbr.rel (%p146) target = $region24
      $region23: #{bottleneck_forward.4} parent=11 // pred_region
        _
      $region24: #{bottleneck_forward.4} parent=11 // pred_fallthru
        _
    $region12: #{bottleneck_forward.4} parent=5 // pred_fallthru
      _
    %p149 = scmp.lt.s32.totalorder %s10, 2
    // Predicated region
    $region25: #{bottleneck_forward.4} parent=5 // pred_check
      %p150 = pneg %p149
    $region26: #{bottleneck_forward.4} parent=5 // pred_check_branch
      %152 = sbr.rel (%p150) target = $region28
    $region27: #{bottleneck_forward.4} parent=5 // pred_region
      // Predicated region
      $region29: #{bottleneck_forward.4} parent=27 // pred_check
        %p153 = pneg %p30
      $region30: #{bottleneck_forward.4} parent=27 // pred_check_branch
        %155 = sbr.rel (%p153) target = $region32
      $region31: #{bottleneck_forward.4} parent=27 // pred_region
        %p156 = scmp.lt.s32.totalorder %s10, 1
        %s157 = scalar_select %p156, %s10, 1
        %s158 = smul.addr %s157, 72
        %s159 = smul.addr %s158, 4
        %s160 = scalar_lea.vmem %s0, %s159
      $region32: #{bottleneck_forward.4} parent=27 // pred_fallthru
        _
    $region28: #{bottleneck_forward.4} parent=5 // pred_fallthru
      _
    %p161 = scmp.le.s32.totalorder 1, %s10
    %p162 = scmp.lt.s32.totalorder %s10, 3
    %p163 = pnand %p161, %p162
    %p164 = pneg %p163
    // Predicated region
    $region33: #{bottleneck_forward.4} parent=5 // pred_check
      _
    $region34: #{bottleneck_forward.4} parent=5 // pred_check_branch
      %166 = sbr.rel (%p163) target = $region36
    $region35: #{bottleneck_forward.4} parent=5 // pred_region
      %s167 = ssub.s32 %s10, 1
      %p168 = scmp.lt.s32.totalorder %s15, 1
      %s169 = scalar_select %p168, %s15, 1
      %s170 = smul.addr %s169, 72
      %s171 = smul.addr %s170, 4
      %s172 = scalar_lea.vmem %s0, %s171
      %p173 = pneg %p36
      %p174 = pneg %p33
      %p175 = pneg %p57
      %p176 = pneg %p54
      %p177 = pneg %p78
      %p178 = pneg %p75
      %p179 = pneg %p99
      %p180 = pneg %p96
      %p181 = pneg %p125
      %p182 = pneg %p122
      %s183 = smul.u32 8, %s15
      %p184 = scmp.lt.s32.totalorder %s183, 15
      %s185 = scalar_select %p184, %s183, 15
      %s186 = smul.addr %s185, 4
      %s187 = scalar_lea.vmem %s4, %s186
      %p188 = scmp.lt.s32.totalorder %s15, 1
      %s189 = scalar_select %p188, %s15, 1
      %s190 = smul.addr %s189, 72
      %s191 = smul.addr %s190, 4
      %s192 = scalar_lea.vmem %s0, %s191
      %s193 = smul.u32 8, %s15
      %p194 = scmp.lt.s32.totalorder %s193, 15
      %s195 = scalar_select %p194, %s193, 15
      %s196 = smul.addr %s195, 4
      %s197 = scalar_lea.vmem %s4, %s196
      %s198 = smul.u32 8, %s15
      %v200 = vld [vmem:[%s192] sm:$0xff]
      %v201 = vld [vmem:[%s192 + $0x20] sm:$0xff]
      %v202 = vld [vmem:[%s192 + $0x40] sm:$0xff]
      %v203 = vld [vmem:[%s192 + $0x60] sm:$0xff]
      %v204 = vld [vmem:[%s192 + $0x80] sm:$0xff]
      %v205 = vld [vmem:[%s192 + $0xa0] sm:$0xff]
      %v206 = vld [vmem:[%s192 + $0xc0] sm:$0xff]
      %v207 = vld [vmem:[%s192 + $0xe0] sm:$0xff]
      %v208 = vld [vmem:[%s1] sm:$0xf]
      %v209 = vld [vmem:[%s1 + $0x4] sm:$0xf]
      %v210 = vld [vmem:[%s1 + $0x8] sm:$0xf]
      %v211 = vld [vmem:[%s1 + $0xc] sm:$0xf]
      %v212 = vld [vmem:[%s1 + $0x10] sm:$0xf]
      %v213 = vld [vmem:[%s1 + $0x14] sm:$0xf]
      %v214 = vld [vmem:[%s1 + $0x18] sm:$0xf]
      %v215 = vld [vmem:[%s1 + $0x1c] sm:$0xf]
      %v216 = vld [vmem:[%s1 + $0x20] sm:$0xf]
      %v217 = vld [vmem:[%s1 + $0x24] sm:$0xf]
      %v218 = vld [vmem:[%s1 + $0x28] sm:$0xf]
      %v219 = vld [vmem:[%s1 + $0x2c] sm:$0xf]
      %v220 = vld [vmem:[%s1 + $0x30] sm:$0xf]
      %v221 = vld [vmem:[%s1 + $0x34] sm:$0xf]
      %v222 = vld [vmem:[%s1 + $0x38] sm:$0xf]
      %v223 = vld [vmem:[%s1 + $0x3c] sm:$0xf]
      %v224 = vld [vmem:[%s1 + $0x40] sm:$0xf]
      %v225 = vld [vmem:[%s1 + $0x44] sm:$0xf]
      %v226 = vld [vmem:[%s1 + $0x48] sm:$0xf]
      %v227 = vld [vmem:[%s1 + $0x4c] sm:$0xf]
      %v228 = vld [vmem:[%s1 + $0x50] sm:$0xf]
      %v229 = vld [vmem:[%s1 + $0x54] sm:$0xf]
      %v230 = vld [vmem:[%s1 + $0x58] sm:$0xf]
      %v231 = vld [vmem:[%s1 + $0x5c] sm:$0xf]
      %v232 = vld [vmem:[%s1 + $0x60] sm:$0xf]
      %v233 = vld [vmem:[%s1 + $0x64] sm:$0xf]
      %v234 = vld [vmem:[%s1 + $0x68] sm:$0xf]
      %v235 = vld [vmem:[%s1 + $0x6c] sm:$0xf]
      %v236 = vld [vmem:[%s1 + $0x70] sm:$0xf]
      %v237 = vld [vmem:[%s1 + $0x74] sm:$0xf]
      %v238 = vld [vmem:[%s1 + $0x78] sm:$0xf]
      %v239 = vld [vmem:[%s1 + $0x7c] sm:$0xf]
      %v240 = vld [vmem:[%s192 + $0x8] sm:$0x11]
      %v241 = vld [vmem:[%s192 + $0x28] sm:$0x11]
      %v242 = vld [vmem:[%s192 + $0x48] sm:$0x11]
      %v243 = vld [vmem:[%s192 + $0x68] sm:$0x11]
      %v244 = vld [vmem:[%s192 + $0x88] sm:$0x11]
      %v245 = vld [vmem:[%s192 + $0xa8] sm:$0x11]
      %v246 = vld [vmem:[%s192 + $0xc8] sm:$0x11]
      %v247 = vld [vmem:[%s192 + $0xe8] sm:$0x11]
      %vm248 = vsmask.f32 3328
      %vm249 = vsmask.f32 7440
      %vm250 = vmor %vm248, %vm249
      %v252 = vshrl.u32 %v200, 16
      %v254 = vrot.slane %v252, 4
      %v255 = vshll.u32 %v200, 16
      %v257 = vrot.slane %v255, 5
      %v258 = vor.u32 %v254, %v257
      %v259 = vrot.slane %v258, 4
      %v261 = vshll.u32 %v240, 16
      %v263 = vrot.slane %v261, 5
      %v264 = vsel %vm250, %v259, %v263
      %v266 = vshrl.u32 %v201, 16
      %v268 = vrot.slane %v266, 4
      %v269 = vshll.u32 %v201, 16
      %v271 = vrot.slane %v269, 5
      %v272 = vor.u32 %v268, %v271
      %v273 = vrot.slane %v272, 4
      %v275 = vshll.u32 %v241, 16
      %v277 = vrot.slane %v275, 5
      %v278 = vsel %vm250, %v273, %v277
      %v280 = vshrl.u32 %v202, 16
      %v282 = vrot.slane %v280, 4
      %v283 = vshll.u32 %v202, 16
      %v285 = vrot.slane %v283, 5
      %v286 = vor.u32 %v282, %v285
      %v287 = vrot.slane %v286, 4
      %v289 = vshll.u32 %v242, 16
      %v291 = vrot.slane %v289, 5
      %v292 = vsel %vm250, %v287, %v291
      %v294 = vshrl.u32 %v203, 16
      %v296 = vrot.slane %v294, 4
      %v297 = vshll.u32 %v203, 16
      %v299 = vrot.slane %v297, 5
      %v300 = vor.u32 %v296, %v299
      %v301 = vrot.slane %v300, 4
      %v303 = vshll.u32 %v243, 16
      %v305 = vrot.slane %v303, 5
      %v306 = vsel %vm250, %v301, %v305
      %v308 = vshrl.u32 %v204, 16
      %v310 = vrot.slane %v308, 4
      %v311 = vshll.u32 %v204, 16
      %v313 = vrot.slane %v311, 5
      %v314 = vor.u32 %v310, %v313
      %v315 = vrot.slane %v314, 4
      %v317 = vshll.u32 %v244, 16
      %v319 = vrot.slane %v317, 5
      %v320 = vsel %vm250, %v315, %v319
      %v322 = vshrl.u32 %v205, 16
      %v324 = vrot.slane %v322, 4
      %v325 = vshll.u32 %v205, 16
      %v327 = vrot.slane %v325, 5
      %v328 = vor.u32 %v324, %v327
      %v329 = vrot.slane %v328, 4
      %v331 = vshll.u32 %v245, 16
      %v333 = vrot.slane %v331, 5
      %v334 = vsel %vm250, %v329, %v333
      %v336 = vshrl.u32 %v206, 16
      %v338 = vrot.slane %v336, 4
      %v339 = vshll.u32 %v206, 16
      %v341 = vrot.slane %v339, 5
      %v342 = vor.u32 %v338, %v341
      %v343 = vrot.slane %v342, 4
      %v345 = vshll.u32 %v246, 16
      %v347 = vrot.slane %v345, 5
      %v348 = vsel %vm250, %v343, %v347
      %v350 = vshrl.u32 %v207, 16
      %v352 = vrot.slane %v350, 4
      %v353 = vshll.u32 %v207, 16
      %v355 = vrot.slane %v353, 5
      %v356 = vor.u32 %v352, %v355
      %v357 = vrot.slane %v356, 4
      %v359 = vshll.u32 %v247, 16
      %v361 = vrot.slane %v359, 5
      %v362 = vsel %vm250, %v357, %v361
      %s363 = scalar_lea.vmem %s1, 128
      %v364 = vld [vmem:[%s363] sm:$0xf]
      %v365 = vld [vmem:[%s363 + $0x4] sm:$0xf]
      %v366 = vld [vmem:[%s363 + $0x8] sm:$0xf]
      %v367 = vld [vmem:[%s363 + $0xc] sm:$0xf]
      %v368 = vld [vmem:[%s363 + $0x10] sm:$0xf]
      %v369 = vld [vmem:[%s363 + $0x14] sm:$0xf]
      %v370 = vld [vmem:[%s363 + $0x18] sm:$0xf]
      %v371 = vld [vmem:[%s363 + $0x1c] sm:$0xf]
      %v372 = vld [vmem:[%s363 + $0x20] sm:$0xf]
      %v373 = vld [vmem:[%s363 + $0x24] sm:$0xf]
      %v374 = vld [vmem:[%s363 + $0x28] sm:$0xf]
      %v375 = vld [vmem:[%s363 + $0x2c] sm:$0xf]
      %v376 = vld [vmem:[%s363 + $0x30] sm:$0xf]
      %v377 = vld [vmem:[%s363 + $0x34] sm:$0xf]
      %v378 = vld [vmem:[%s363 + $0x38] sm:$0xf]
      %v379 = vld [vmem:[%s363 + $0x3c] sm:$0xf]
      %v380 = vld [vmem:[%s363 + $0x40] sm:$0xf]
      %v381 = vld [vmem:[%s363 + $0x44] sm:$0xf]
      %v382 = vld [vmem:[%s363 + $0x48] sm:$0xf]
      %v383 = vld [vmem:[%s363 + $0x4c] sm:$0xf]
      %v384 = vld [vmem:[%s363 + $0x50] sm:$0xf]
      %v385 = vld [vmem:[%s363 + $0x54] sm:$0xf]
      %v386 = vld [vmem:[%s363 + $0x58] sm:$0xf]
      %v387 = vld [vmem:[%s363 + $0x5c] sm:$0xf]
      %v388 = vld [vmem:[%s363 + $0x60] sm:$0xf]
      %v389 = vld [vmem:[%s363 + $0x64] sm:$0xf]
      %v390 = vld [vmem:[%s363 + $0x68] sm:$0xf]
      %v391 = vld [vmem:[%s363 + $0x6c] sm:$0xf]
      %v392 = vld [vmem:[%s363 + $0x70] sm:$0xf]
      %v393 = vld [vmem:[%s363 + $0x74] sm:$0xf]
      %v394 = vld [vmem:[%s363 + $0x78] sm:$0xf]
      %v395 = vld [vmem:[%s363 + $0x7c] sm:$0xf]
      %v396 = vunpack.c.l.b16 %v264
      %v397 = vunpack.c.h.b16 %v264
      %v398 = vunpack.c.l.b16 %v278
      %v399 = vunpack.c.h.b16 %v278
      %v400 = vunpack.c.l.b16 %v292
      %v401 = vunpack.c.h.b16 %v292
      %v402 = vunpack.c.l.b16 %v306
      %v403 = vunpack.c.h.b16 %v306
      %v404 = vunpack.c.l.b16 %v320
      %v405 = vunpack.c.h.b16 %v320
      %v406 = vunpack.c.l.b16 %v334
      %v407 = vunpack.c.h.b16 %v334
      %v408 = vunpack.c.l.b16 %v348
      %v409 = vunpack.c.h.b16 %v348
      %v410 = vunpack.c.l.b16 %v362
      %v411 = vunpack.c.h.b16 %v362
      %v412 = vpack.c.b16 %v398, %v396
      %v413 = vpack.c.b16 %v399, %v397
      %v414 = vpack.c.b16 %v402, %v400
      %v415 = vpack.c.b16 %v403, %v401
      %v416 = vpack.c.b16 %v406, %v404
      %v417 = vpack.c.b16 %v407, %v405
      %v418 = vpack.c.b16 %v410, %v408
      %v419 = vpack.c.b16 %v411, %v409
      %v460 = vunpack.c.l.b16 %v364
      %v461 = vunpack.c.l.b16 %v365
      %v462 = vunpack.c.l.b16 %v366
      %v463 = vunpack.c.l.b16 %v367
      %v464 = vunpack.c.l.b16 %v368
      %v465 = vunpack.c.l.b16 %v369
      %v466 = vunpack.c.l.b16 %v370
      %v467 = vunpack.c.l.b16 %v371
      %v468 = vunpack.c.l.b16 %v372
      %v469 = vunpack.c.l.b16 %v373
      %v470 = vunpack.c.l.b16 %v374
      %v471 = vunpack.c.l.b16 %v375
      %v472 = vunpack.c.l.b16 %v376
      %v473 = vunpack.c.l.b16 %v377
      %v474 = vunpack.c.l.b16 %v378
      %v475 = vunpack.c.l.b16 %v379
      %v476 = vunpack.c.l.b16 %v380
      %v477 = vunpack.c.l.b16 %v381
      %v478 = vunpack.c.l.b16 %v382
      %v479 = vunpack.c.l.b16 %v383
      %v480 = vunpack.c.l.b16 %v384
      %v481 = vunpack.c.l.b16 %v385
      %v482 = vunpack.c.l.b16 %v386
      %v483 = vunpack.c.l.b16 %v387
      %v484 = vunpack.c.l.b16 %v388
      %v485 = vunpack.c.l.b16 %v389
      %v486 = vunpack.c.l.b16 %v390
      %v487 = vunpack.c.l.b16 %v391
      %v488 = vunpack.c.l.b16 %v392
      %v489 = vunpack.c.l.b16 %v393
      %v490 = vunpack.c.l.b16 %v394
      %v491 = vunpack.c.l.b16 %v395
      %v492 = vpack.c.b16 %v461, %v460
      %v493 = vpack.c.b16 %v463, %v462
      %v494 = vpack.c.b16 %v465, %v464
      %v495 = vpack.c.b16 %v467, %v466
      %v496 = vpack.c.b16 %v469, %v468
      %v497 = vpack.c.b16 %v471, %v470
      %v498 = vpack.c.b16 %v473, %v472
      %v499 = vpack.c.b16 %v475, %v474
      %v500 = vpack.c.b16 %v477, %v476
      %v501 = vpack.c.b16 %v479, %v478
      %v502 = vpack.c.b16 %v481, %v480
      %v503 = vpack.c.b16 %v483, %v482
      %v504 = vpack.c.b16 %v485, %v484
      %v505 = vpack.c.b16 %v487, %v486
      %v506 = vpack.c.b16 %v489, %v488
      %v507 = vpack.c.b16 %v491, %v490
      %524 = vmatprep.subr.bf16.mxu0 0
      %525 = vmatpush1.bf16.msra.mxu0 %v492
      %526 = vmatprep.subr.bf16.mxu0 0
      %527 = vmatpush1.bf16.msra.mxu0 %v493
      %528 = vmatprep.subr.bf16.mxu0 0
      %529 = vmatpush1.bf16.msra.mxu0 %v494
      %530 = vmatprep.subr.bf16.mxu0 0
      %531 = vmatpush1.bf16.msra.mxu0 %v495
      %532 = vmatprep.subr.bf16.mxu0 0
      %533 = vmatpush1.bf16.msra.mxu0 %v496
      %534 = vmatprep.subr.bf16.mxu0 0
      %535 = vmatpush1.bf16.msra.mxu0 %v497
      %536 = vmatprep.subr.bf16.mxu0 0
      %537 = vmatpush1.bf16.msra.mxu0 %v498
      %538 = vmatprep.subr.bf16.mxu0 0
      %539 = vmatpush1.bf16.msra.mxu0 %v499
      %540 = vmatprep.subr.bf16.mxu0 0
      %541 = vmatpush1.bf16.msra.mxu0 %v500
      %542 = vmatprep.subr.bf16.mxu0 0
      %543 = vmatpush1.bf16.msra.mxu0 %v501
      %544 = vmatprep.subr.bf16.mxu0 0
      %545 = vmatpush1.bf16.msra.mxu0 %v502
      %546 = vmatprep.subr.bf16.mxu0 0
      %547 = vmatpush1.bf16.msra.mxu0 %v503
      %548 = vmatprep.subr.bf16.mxu0 0
      %549 = vmatpush1.bf16.msra.mxu0 %v504
      %550 = vmatprep.subr.bf16.mxu0 0
      %551 = vmatpush1.bf16.msra.mxu0 %v505
      %552 = vmatprep.subr.bf16.mxu0 0
      %553 = vmatpush1.bf16.msra.mxu0 %v506
      %554 = vmatprep.subr.bf16.mxu0 0
      %555 = vmatpush1.bf16.msra.mxu0 %v507
      %556 = vmatprep.mubr.bf16.mxu0 %v413
      %557 = vmatmul.mubr.bf16.gmra.mrb[0].mxu0 %v412
      %v558 = vpop.f32.mrb[0].mxu0
      %v559 = vadd.f32 0.0, %v558
      %v560 = vpop.f32.mrb[0].mxu0
      %v561 = vpop.f32.mrb[0].mxu0
      %v562 = vadd.f32 0.0, %v561
      %v563 = vpop.f32.mrb[0].mxu0
      %564 = vmatprep.mubr.bf16.mxu0 %v415
      %565 = vmatmul.mubr.bf16.gmra.mrb[0].mxu0 %v414
      %v566 = vpop.f32.mrb[0].mxu0
      %v567 = vadd.f32 0.0, %v566
      %v568 = vpop.f32.mrb[0].mxu0
      %v569 = vpop.f32.mrb[0].mxu0
      %v570 = vadd.f32 0.0, %v569
      %v571 = vpop.f32.mrb[0].mxu0
      %572 = vmatprep.mubr.bf16.mxu0 %v417
      %573 = vmatmul.mubr.bf16.gmra.mrb[0].mxu0 %v416
      %v574 = vpop.f32.mrb[0].mxu0
      %v575 = vadd.f32 0.0, %v574
      %v576 = vpop.f32.mrb[0].mxu0
      %v577 = vpop.f32.mrb[0].mxu0
      %v578 = vadd.f32 0.0, %v577
      %v579 = vpop.f32.mrb[0].mxu0
      %580 = vmatprep.mubr.bf16.mxu0 %v419
      %581 = vmatmul.mubr.bf16.gmra.mrb[0].mxu0 %v418
      %v582 = vpop.f32.mrb[0].mxu0
      %v583 = vadd.f32 0.0, %v582
      %v584 = vpop.f32.mrb[0].mxu0
      %v585 = vpop.f32.mrb[0].mxu0
      %v586 = vadd.f32 0.0, %v585
      %v587 = vpop.f32.mrb[0].mxu0
      %588 = vdwg.mxu0
      %v597 = vunpack.c.l.b16 %v200
      %v598 = vunpack.c.h.b16 %v200
      %v599 = vunpack.c.l.b16 %v201
      %v600 = vunpack.c.h.b16 %v201
      %v601 = vunpack.c.l.b16 %v202
      %v602 = vunpack.c.h.b16 %v202
      %v603 = vunpack.c.l.b16 %v203
      %v604 = vunpack.c.h.b16 %v203
      %v605 = vunpack.c.l.b16 %v204
      %v606 = vunpack.c.h.b16 %v204
      %v607 = vunpack.c.l.b16 %v205
      %v608 = vunpack.c.h.b16 %v205
      %v609 = vunpack.c.l.b16 %v206
      %v610 = vunpack.c.h.b16 %v206
      %v611 = vunpack.c.l.b16 %v207
      %v612 = vunpack.c.h.b16 %v207
      %v613 = vpack.c.b16 %v599, %v597
      %v614 = vpack.c.b16 %v600, %v598
      %v615 = vpack.c.b16 %v603, %v601
      %v616 = vpack.c.b16 %v604, %v602
      %v617 = vpack.c.b16 %v607, %v605
      %v618 = vpack.c.b16 %v608, %v606
      %v619 = vpack.c.b16 %v611, %v609
      %v620 = vpack.c.b16 %v612, %v610
      %v661 = vunpack.c.l.b16 %v208
      %v662 = vunpack.c.l.b16 %v209
      %v663 = vunpack.c.l.b16 %v210
      %v664 = vunpack.c.l.b16 %v211
      %v665 = vunpack.c.l.b16 %v212
      %v666 = vunpack.c.l.b16 %v213
      %v667 = vunpack.c.l.b16 %v214
      %v668 = vunpack.c.l.b16 %v215
      %v669 = vunpack.c.l.b16 %v216
      %v670 = vunpack.c.l.b16 %v217
      %v671 = vunpack.c.l.b16 %v218
      %v672 = vunpack.c.l.b16 %v219
      %v673 = vunpack.c.l.b16 %v220
      %v674 = vunpack.c.l.b16 %v221
      %v675 = vunpack.c.l.b16 %v222
      %v676 = vunpack.c.l.b16 %v223
      %v677 = vunpack.c.l.b16 %v224
      %v678 = vunpack.c.l.b16 %v225
      %v679 = vunpack.c.l.b16 %v226
      %v680 = vunpack.c.l.b16 %v227
      %v681 = vunpack.c.l.b16 %v228
      %v682 = vunpack.c.l.b16 %v229
      %v683 = vunpack.c.l.b16 %v230
      %v684 = vunpack.c.l.b16 %v231
      %v685 = vunpack.c.l.b16 %v232
      %v686 = vunpack.c.l.b16 %v233
      %v687 = vunpack.c.l.b16 %v234
      %v688 = vunpack.c.l.b16 %v235
      %v689 = vunpack.c.l.b16 %v236
      %v690 = vunpack.c.l.b16 %v237
      %v691 = vunpack.c.l.b16 %v238
      %v692 = vunpack.c.l.b16 %v239
      %v693 = vpack.c.b16 %v662, %v661
      %v694 = vpack.c.b16 %v664, %v663
      %v695 = vpack.c.b16 %v666, %v665
      %v696 = vpack.c.b16 %v668, %v667
      %v697 = vpack.c.b16 %v670, %v669
      %v698 = vpack.c.b16 %v672, %v671
      %v699 = vpack.c.b16 %v674, %v673
      %v700 = vpack.c.b16 %v676, %v675
      %v701 = vpack.c.b16 %v678, %v677
      %v702 = vpack.c.b16 %v680, %v679
      %v703 = vpack.c.b16 %v682, %v681
      %v704 = vpack.c.b16 %v684, %v683
      %v705 = vpack.c.b16 %v686, %v685
      %v706 = vpack.c.b16 %v688, %v687
      %v707 = vpack.c.b16 %v690, %v689
      %v708 = vpack.c.b16 %v692, %v691
      %725 = vmatprep.subr.bf16.mxu0 0
      %726 = vmatpush1.bf16.msra.mxu0 %v693
      %727 = vmatprep.subr.bf16.mxu0 0
      %728 = vmatpush1.bf16.msra.mxu0 %v694
      %729 = vmatprep.subr.bf16.mxu0 0
      %730 = vmatpush1.bf16.msra.mxu0 %v695
      %731 = vmatprep.subr.bf16.mxu0 0
      %732 = vmatpush1.bf16.msra.mxu0 %v696
      %733 = vmatprep.subr.bf16.mxu0 0
      %734 = vmatpush1.bf16.msra.mxu0 %v697
      %735 = vmatprep.subr.bf16.mxu0 0
      %736 = vmatpush1.bf16.msra.mxu0 %v698
      %737 = vmatprep.subr.bf16.mxu0 0
      %738 = vmatpush1.bf16.msra.mxu0 %v699
      %739 = vmatprep.subr.bf16.mxu0 0
      %740 = vmatpush1.bf16.msra.mxu0 %v700
      %741 = vmatprep.subr.bf16.mxu0 0
      %742 = vmatpush1.bf16.msra.mxu0 %v701
      %743 = vmatprep.subr.bf16.mxu0 0
      %744 = vmatpush1.bf16.msra.mxu0 %v702
      %745 = vmatprep.subr.bf16.mxu0 0
      %746 = vmatpush1.bf16.msra.mxu0 %v703
      %747 = vmatprep.subr.bf16.mxu0 0
      %748 = vmatpush1.bf16.msra.mxu0 %v704
      %749 = vmatprep.subr.bf16.mxu0 0
      %750 = vmatpush1.bf16.msra.mxu0 %v705
      %751 = vmatprep.subr.bf16.mxu0 0
      %752 = vmatpush1.bf16.msra.mxu0 %v706
      %753 = vmatprep.subr.bf16.mxu0 0
      %754 = vmatpush1.bf16.msra.mxu0 %v707
      %755 = vmatprep.subr.bf16.mxu0 0
      %756 = vmatpush1.bf16.msra.mxu0 %v708
      %757 = vmatprep.mubr.bf16.mxu0 %v614
      %758 = vmatmul.mubr.bf16.gmra.mrb[0].mxu0 %v613
      %v759 = vpop.f32.mrb[0].mxu0
      %v760 = vadd.f32 %v559, %v759
      %v761 = vpop.f32.mrb[0].mxu0
      %v762 = vpop.f32.mrb[0].mxu0
      %v763 = vadd.f32 %v562, %v762
      %v764 = vpop.f32.mrb[0].mxu0
      %765 = vmatprep.mubr.bf16.mxu0 %v616
      %766 = vmatmul.mubr.bf16.gmra.mrb[0].mxu0 %v615
      %v767 = vpop.f32.mrb[0].mxu0
      %v768 = vadd.f32 %v567, %v767
      %v769 = vpop.f32.mrb[0].mxu0
      %v770 = vpop.f32.mrb[0].mxu0
      %v771 = vadd.f32 %v570, %v770
      %v772 = vpop.f32.mrb[0].mxu0
      %773 = vmatprep.mubr.bf16.mxu0 %v618
      %774 = vmatmul.mubr.bf16.gmra.mrb[0].mxu0 %v617
      %v775 = vpop.f32.mrb[0].mxu0
      %v776 = vadd.f32 %v575, %v775
      %v777 = vpop.f32.mrb[0].mxu0
      %v778 = vpop.f32.mrb[0].mxu0
      %v779 = vadd.f32 %v578, %v778
      %v780 = vpop.f32.mrb[0].mxu0
      %781 = vmatprep.mubr.bf16.mxu0 %v620
      %782 = vmatmul.mubr.bf16.gmra.mrb[0].mxu0 %v619
      %v783 = vpop.f32.mrb[0].mxu0
      %v784 = vadd.f32 %v583, %v783
      %v785 = vpop.f32.mrb[0].mxu0
      %v786 = vpop.f32.mrb[0].mxu0
      %v787 = vadd.f32 %v586, %v786
      %v788 = vpop.f32.mrb[0].mxu0
      %789 = vdwg.mxu0
      %s790 = scalar_lea.vmem %s192, 16
      %v791 = vld [vmem:[%s790] sm:$0xff]
      %v792 = vld [vmem:[%s790 + $0x20] sm:$0xff]
      %v793 = vld [vmem:[%s790 + $0x40] sm:$0xff]
      %v794 = vld [vmem:[%s790 + $0x60] sm:$0xff]
      %v795 = vld [vmem:[%s790 + $0x80] sm:$0xff]
      %v796 = vld [vmem:[%s790 + $0xa0] sm:$0xff]
      %v797 = vld [vmem:[%s790 + $0xc0] sm:$0xff]
      %v798 = vld [vmem:[%s790 + $0xe0] sm:$0xff]
      %s799 = scalar_lea.vmem %s1, 256
      %v800 = vld [vmem:[%s799] sm:$0xf]
      %v801 = vld [vmem:[%s799 + $0x4] sm:$0xf]
      %v802 = vld [vmem:[%s799 + $0x8] sm:$0xf]
      %v803 = vld [vmem:[%s799 + $0xc] sm:$0xf]
      %v804 = vld [vmem:[%s799 + $0x10] sm:$0xf]
      %v805 = vld [vmem:[%s799 + $0x14] sm:$0xf]
      %v806 = vld [vmem:[%s799 + $0x18] sm:$0xf]
      %v807 = vld [vmem:[%s799 + $0x1c] sm:$0xf]
      %v808 = vld [vmem:[%s799 + $0x20] sm:$0xf]
      %v809 = vld [vmem:[%s799 + $0x24] sm:$0xf]
      %v810 = vld [vmem:[%s799 + $0x28] sm:$0xf]
      %v811 = vld [vmem:[%s799 + $0x2c] sm:$0xf]
      %v812 = vld [vmem:[%s799 + $0x30] sm:$0xf]
      %v813 = vld [vmem:[%s799 + $0x34] sm:$0xf]
      %v814 = vld [vmem:[%s799 + $0x38] sm:$0xf]
      %v815 = vld [vmem:[%s799 + $0x3c] sm:$0xf]
      %v816 = vld [vmem:[%s799 + $0x40] sm:$0xf]
      %v817 = vld [vmem:[%s799 + $0x44] sm:$0xf]
      %v818 = vld [vmem:[%s799 + $0x48] sm:$0xf]
      %v819 = vld [vmem:[%s799 + $0x4c] sm:$0xf]
      %v820 = vld [vmem:[%s799 + $0x50] sm:$0xf]
      %v821 = vld [vmem:[%s799 + $0x54] sm:$0xf]
      %v822 = vld [vmem:[%s799 + $0x58] sm:$0xf]
      %v823 = vld [vmem:[%s799 + $0x5c] sm:$0xf]
      %v824 = vld [vmem:[%s799 + $0x60] sm:$0xf]
      %v825 = vld [vmem:[%s799 + $0x64] sm:$0xf]
      %v826 = vld [vmem:[%s799 + $0x68] sm:$0xf]
      %v827 = vld [vmem:[%s799 + $0x6c] sm:$0xf]
      %v828 = vld [vmem:[%s799 + $0x70] sm:$0xf]
      %v829 = vld [vmem:[%s799 + $0x74] sm:$0xf]
      %v830 = vld [vmem:[%s799 + $0x78] sm:$0xf]
      %v831 = vld [vmem:[%s799 + $0x7c] sm:$0xf]
      %v840 = vunpack.c.l.b16 %v791
      %v841 = vunpack.c.h.b16 %v791
      %v842 = vunpack.c.l.b16 %v792
      %v843 = vunpack.c.h.b16 %v792
      %v844 = vunpack.c.l.b16 %v793
      %v845 = vunpack.c.h.b16 %v793
      %v846 = vunpack.c.l.b16 %v794
      %v847 = vunpack.c.h.b16 %v794
      %v848 = vunpack.c.l.b16 %v795
      %v849 = vunpack.c.h.b16 %v795
      %v850 = vunpack.c.l.b16 %v796
      %v851 = vunpack.c.h.b16 %v796
      %v852 = vunpack.c.l.b16 %v797
      %v853 = vunpack.c.h.b16 %v797
      %v854 = vunpack.c.l.b16 %v798
      %v855 = vunpack.c.h.b16 %v798
      %v856 = vpack.c.b16 %v842, %v840
      %v857 = vpack.c.b16 %v843, %v841
      %v858 = vpack.c.b16 %v846, %v844
      %v859 = vpack.c.b16 %v847, %v845
      %v860 = vpack.c.b16 %v850, %v848
      %v861 = vpack.c.b16 %v851, %v849
      %v862 = vpack.c.b16 %v854, %v852
      %v863 = vpack.c.b16 %v855, %v853
      %v904 = vunpack.c.l.b16 %v800
      %v905 = vunpack.c.l.b16 %v801
      %v906 = vunpack.c.l.b16 %v802
      %v907 = vunpack.c.l.b16 %v803
      %v908 = vunpack.c.l.b16 %v804
      %v909 = vunpack.c.l.b16 %v805
      %v910 = vunpack.c.l.b16 %v806
      %v911 = vunpack.c.l.b16 %v807
      %v912 = vunpack.c.l.b16 %v808
      %v913 = vunpack.c.l.b16 %v809
      %v914 = vunpack.c.l.b16 %v810
      %v915 = vunpack.c.l.b16 %v811
      %v916 = vunpack.c.l.b16 %v812
      %v917 = vunpack.c.l.b16 %v813
      %v918 = vunpack.c.l.b16 %v814
      %v919 = vunpack.c.l.b16 %v815
      %v920 = vunpack.c.l.b16 %v816
      %v921 = vunpack.c.l.b16 %v817
      %v922 = vunpack.c.l.b16 %v818
      %v923 = vunpack.c.l.b16 %v819
      %v924 = vunpack.c.l.b16 %v820
      %v925 = vunpack.c.l.b16 %v821
      %v926 = vunpack.c.l.b16 %v822
      %v927 = vunpack.c.l.b16 %v823
      %v928 = vunpack.c.l.b16 %v824
      %v929 = vunpack.c.l.b16 %v825
      %v930 = vunpack.c.l.b16 %v826
      %v931 = vunpack.c.l.b16 %v827
      %v932 = vunpack.c.l.b16 %v828
      %v933 = vunpack.c.l.b16 %v829
      %v934 = vunpack.c.l.b16 %v830
      %v935 = vunpack.c.l.b16 %v831
      %v936 = vpack.c.b16 %v905, %v904
      %v937 = vpack.c.b16 %v907, %v906
      %v938 = vpack.c.b16 %v909, %v908
      %v939 = vpack.c.b16 %v911, %v910
      %v940 = vpack.c.b16 %v913, %v912
      %v941 = vpack.c.b16 %v915, %v914
      %v942 = vpack.c.b16 %v917, %v916
      %v943 = vpack.c.b16 %v919, %v918
      %v944 = vpack.c.b16 %v921, %v920
      %v945 = vpack.c.b16 %v923, %v922
      %v946 = vpack.c.b16 %v925, %v924
      %v947 = vpack.c.b16 %v927, %v926
      %v948 = vpack.c.b16 %v929, %v928
      %v949 = vpack.c.b16 %v931, %v930
      %v950 = vpack.c.b16 %v933, %v932
      %v951 = vpack.c.b16 %v935, %v934
      %968 = vmatprep.subr.bf16.mxu0 0
      %969 = vmatpush1.bf16.msra.mxu0 %v936
      %970 = vmatprep.subr.bf16.mxu0 0
      %971 = vmatpush1.bf16.msra.mxu0 %v937
      %972 = vmatprep.subr.bf16.mxu0 0
      %973 = vmatpush1.bf16.msra.mxu0 %v938
      %974 = vmatprep.subr.bf16.mxu0 0
      %975 = vmatpush1.bf16.msra.mxu0 %v939
      %976 = vmatprep.subr.bf16.mxu0 0
      %977 = vmatpush1.bf16.msra.mxu0 %v940
      %978 = vmatprep.subr.bf16.mxu0 0
      %979 = vmatpush1.bf16.msra.mxu0 %v941
      %980 = vmatprep.subr.bf16.mxu0 0
      %981 = vmatpush1.bf16.msra.mxu0 %v942
      %982 = vmatprep.subr.bf16.mxu0 0
      %983 = vmatpush1.bf16.msra.mxu0 %v943
      %984 = vmatprep.subr.bf16.mxu0 0
      %985 = vmatpush1.bf16.msra.mxu0 %v944
      %986 = vmatprep.subr.bf16.mxu0 0
      %987 = vmatpush1.bf16.msra.mxu0 %v945
      %988 = vmatprep.subr.bf16.mxu0 0
      %989 = vmatpush1.bf16.msra.mxu0 %v946
      %990 = vmatprep.subr.bf16.mxu0 0
      %991 = vmatpush1.bf16.msra.mxu0 %v947
      %992 = vmatprep.subr.bf16.mxu0 0
      %993 = vmatpush1.bf16.msra.mxu0 %v948
      %994 = vmatprep.subr.bf16.mxu0 0
      %995 = vmatpush1.bf16.msra.mxu0 %v949
      %996 = vmatprep.subr.bf16.mxu0 0
      %997 = vmatpush1.bf16.msra.mxu0 %v950
      %998 = vmatprep.subr.bf16.mxu0 0
      %999 = vmatpush1.bf16.msra.mxu0 %v951
      %1000 = vmatprep.mubr.bf16.mxu0 %v857
      %1001 = vmatmul.mubr.bf16.gmra.mrb[0].mxu0 %v856
      %v1002 = vpop.f32.mrb[0].mxu0
      %v1003 = vadd.f32 0.0, %v1002
      %v1004 = vpop.f32.mrb[0].mxu0
      %v1005 = vpop.f32.mrb[0].mxu0
      %v1006 = vadd.f32 0.0, %v1005
      %v1007 = vpop.f32.mrb[0].mxu0
      %1008 = vmatprep.mubr.bf16.mxu0 %v859
      %1009 = vmatmul.mubr.bf16.gmra.mrb[0].mxu0 %v858
      %v1010 = vpop.f32.mrb[0].mxu0
      %v1011 = vadd.f32 0.0, %v1010
      %v1012 = vpop.f32.mrb[0].mxu0
      %v1013 = vpop.f32.mrb[0].mxu0
      %v1014 = vadd.f32 0.0, %v1013
      %v1015 = vpop.f32.mrb[0].mxu0
      %1016 = vmatprep.mubr.bf16.mxu0 %v861
      %1017 = vmatmul.mubr.bf16.gmra.mrb[0].mxu0 %v860
      %v1018 = vpop.f32.mrb[0].mxu0
      %v1019 = vadd.f32 0.0, %v1018
      %v1020 = vpop.f32.mrb[0].mxu0
      %v1021 = vpop.f32.mrb[0].mxu0
      %v1022 = vadd.f32 0.0, %v1021
      %v1023 = vpop.f32.mrb[0].mxu0
      %1024 = vmatprep.mubr.bf16.mxu0 %v863
      %1025 = vmatmul.mubr.bf16.gmra.mrb[0].mxu0 %v862
      %v1026 = vpop.f32.mrb[0].mxu0
      %v1027 = vadd.f32 0.0, %v1026
      %v1028 = vpop.f32.mrb[0].mxu0
      %v1029 = vpop.f32.mrb[0].mxu0
      %v1030 = vadd.f32 0.0, %v1029
      %v1031 = vpop.f32.mrb[0].mxu0
      %1032 = vdwg.mxu0
      %v1033 = vadd.f32 %v760, %v1003
      %v1034 = vadd.f32 %v763, %v1006
      %v1035 = vadd.f32 %v768, %v1011
      %v1036 = vadd.f32 %v771, %v1014
      %v1037 = vadd.f32 %v776, %v1019
      %v1038 = vadd.f32 %v779, %v1022
      %v1039 = vadd.f32 %v784, %v1027
      %v1040 = vadd.f32 %v787, %v1030
      %v1041 = vld [vmem:[%s790] sm:$0xff]
      %v1042 = vld [vmem:[%s790 + $0x8] sm:$0x11]
      %v1043 = vld [vmem:[%s790 + $0x20] sm:$0xff]
      %v1044 = vld [vmem:[%s790 + $0x28] sm:$0x11]
      %v1045 = vld [vmem:[%s790 + $0x40] sm:$0xff]
      %v1046 = vld [vmem:[%s790 + $0x48] sm:$0x11]
      %v1047 = vld [vmem:[%s790 + $0x60] sm:$0xff]
      %v1048 = vld [vmem:[%s790 + $0x68] sm:$0x11]
      %v1049 = vld [vmem:[%s790 + $0x80] sm:$0xff]
      %v1050 = vld [vmem:[%s790 + $0x88] sm:$0x11]
      %v1051 = vld [vmem:[%s790 + $0xa0] sm:$0xff]
      %v1052 = vld [vmem:[%s790 + $0xa8] sm:$0x11]
      %v1053 = vld [vmem:[%s790 + $0xc0] sm:$0xff]
      %v1054 = vld [vmem:[%s790 + $0xc8] sm:$0x11]
      %v1055 = vld [vmem:[%s790 + $0xe0] sm:$0xff]
      %v1056 = vld [vmem:[%s790 + $0xe8] sm:$0x11]
      %v1058 = vshrl.u32 %v1041, 16
      %v1060 = vrot.slane %v1058, 4
      %v1061 = vshll.u32 %v1041, 16
      %v1063 = vrot.slane %v1061, 5
      %v1064 = vor.u32 %v1060, %v1063
      %v1065 = vrot.slane %v1064, 4
      %v1067 = vshll.u32 %v1042, 16
      %v1069 = vrot.slane %v1067, 5
      %v1070 = vsel %vm250, %v1065, %v1069
      %v1072 = vshrl.u32 %v1043, 16
      %v1074 = vrot.slane %v1072, 4
      %v1075 = vshll.u32 %v1043, 16
      %v1077 = vrot.slane %v1075, 5
      %v1078 = vor.u32 %v1074, %v1077
      %v1079 = vrot.slane %v1078, 4
      %v1081 = vshll.u32 %v1044, 16
      %v1083 = vrot.slane %v1081, 5
      %v1084 = vsel %vm250, %v1079, %v1083
      %v1086 = vshrl.u32 %v1045, 16
      %v1088 = vrot.slane %v1086, 4
      %v1089 = vshll.u32 %v1045, 16
      %v1091 = vrot.slane %v1089, 5
      %v1092 = vor.u32 %v1088, %v1091
      %v1093 = vrot.slane %v1092, 4
      %v1095 = vshll.u32 %v1046, 16
      %v1097 = vrot.slane %v1095, 5
      %v1098 = vsel %vm250, %v1093, %v1097
      %v1100 = vshrl.u32 %v1047, 16
      %v1102 = vrot.slane %v1100, 4
      %v1103 = vshll.u32 %v1047, 16
      %v1105 = vrot.slane %v1103, 5
      %v1106 = vor.u32 %v1102, %v1105
      %v1107 = vrot.slane %v1106, 4
      %v1109 = vshll.u32 %v1048, 16
      %v1111 = vrot.slane %v1109, 5
      %v1112 = vsel %vm250, %v1107, %v1111
      %v1114 = vshrl.u32 %v1049, 16
      %v1116 = vrot.slane %v1114, 4
      %v1117 = vshll.u32 %v1049, 16
      %v1119 = vrot.slane %v1117, 5
      %v1120 = vor.u32 %v1116, %v1119
      %v1121 = vrot.slane %v1120, 4
      %v1123 = vshll.u32 %v1050, 16
      %v1125 = vrot.slane %v1123, 5
      %v1126 = vsel %vm250, %v1121, %v1125
      %v1128 = vshrl.u32 %v1051, 16
      %v1130 = vrot.slane %v1128, 4
      %v1131 = vshll.u32 %v1051, 16
      %v1133 = vrot.slane %v1131, 5
      %v1134 = vor.u32 %v1130, %v1133
      %v1135 = vrot.slane %v1134, 4
      %v1137 = vshll.u32 %v1052, 16
      %v1139 = vrot.slane %v1137, 5
      %v1140 = vsel %vm250, %v1135, %v1139
      %v1142 = vshrl.u32 %v1053, 16
      %v1144 = vrot.slane %v1142, 4
      %v1145 = vshll.u32 %v1053, 16
      %v1147 = vrot.slane %v1145, 5
      %v1148 = vor.u32 %v1144, %v1147
      %v1149 = vrot.slane %v1148, 4
      %v1151 = vshll.u32 %v1054, 16
      %v1153 = vrot.slane %v1151, 5
      %v1154 = vsel %vm250, %v1149, %v1153
      %v1156 = vshrl.u32 %v1055, 16
      %v1158 = vrot.slane %v1156, 4
      %v1159 = vshll.u32 %v1055, 16
      %v1161 = vrot.slane %v1159, 5
      %v1162 = vor.u32 %v1158, %v1161
      %v1163 = vrot.slane %v1162, 4
      %v1165 = vshll.u32 %v1056, 16
      %v1167 = vrot.slane %v1165, 5
      %v1168 = vsel %vm250, %v1163, %v1167
      %s1169 = scalar_lea.vmem %s1, 384
      %v1170 = vld [vmem:[%s1169] sm:$0xf]
      %v1171 = vld [vmem:[%s1169 + $0x4] sm:$0xf]
      %v1172 = vld [vmem:[%s1169 + $0x8] sm:$0xf]
      %v1173 = vld [vmem:[%s1169 + $0xc] sm:$0xf]
      %v1174 = vld [vmem:[%s1169 + $0x10] sm:$0xf]
      %v1175 = vld [vmem:[%s1169 + $0x14] sm:$0xf]
      %v1176 = vld [vmem:[%s1169 + $0x18] sm:$0xf]
      %v1177 = vld [vmem:[%s1169 + $0x1c] sm:$0xf]
      %v1178 = vld [vmem:[%s1169 + $0x20] sm:$0xf]
      %v1179 = vld [vmem:[%s1169 + $0x24] sm:$0xf]
      %v1180 = vld [vmem:[%s1169 + $0x28] sm:$0xf]
      %v1181 = vld [vmem:[%s1169 + $0x2c] sm:$0xf]
      %v1182 = vld [vmem:[%s1169 + $0x30] sm:$0xf]
      %v1183 = vld [vmem:[%s1169 + $0x34] sm:$0xf]
      %v1184 = vld [vmem:[%s1169 + $0x38] sm:$0xf]
      %v1185 = vld [vmem:[%s1169 + $0x3c] sm:$0xf]
      %v1186 = vld [vmem:[%s1169 + $0x40] sm:$0xf]
      %v1187 = vld [vmem:[%s1169 + $0x44] sm:$0xf]
      %v1188 = vld [vmem:[%s1169 + $0x48] sm:$0xf]
      %v1189 = vld [vmem:[%s1169 + $0x4c] sm:$0xf]
      %v1190 = vld [vmem:[%s1169 + $0x50] sm:$0xf]
      %v1191 = vld [vmem:[%s1169 + $0x54] sm:$0xf]
      %v1192 = vld [vmem:[%s1169 + $0x58] sm:$0xf]
      %v1193 = vld [vmem:[%s1169 + $0x5c] sm:$0xf]
      %v1194 = vld [vmem:[%s1169 + $0x60] sm:$0xf]
      %v1195 = vld [vmem:[%s1169 + $0x64] sm:$0xf]
      %v1196 = vld [vmem:[%s1169 + $0x68] sm:$0xf]
      %v1197 = vld [vmem:[%s1169 + $0x6c] sm:$0xf]
      %v1198 = vld [vmem:[%s1169 + $0x70] sm:$0xf]
      %v1199 = vld [vmem:[%s1169 + $0x74] sm:$0xf]
      %v1200 = vld [vmem:[%s1169 + $0x78] sm:$0xf]
      %v1201 = vld [vmem:[%s1169 + $0x7c] sm:$0xf]
      %v1202 = vunpack.c.l.b16 %v1070
      %v1203 = vunpack.c.h.b16 %v1070
      %v1204 = vunpack.c.l.b16 %v1084
      %v1205 = vunpack.c.h.b16 %v1084
      %v1206 = vunpack.c.l.b16 %v1098
      %v1207 = vunpack.c.h.b16 %v1098
      %v1208 = vunpack.c.l.b16 %v1112
      %v1209 = vunpack.c.h.b16 %v1112
      %v1210 = vunpack.c.l.b16 %v1126
      %v1211 = vunpack.c.h.b16 %v1126
      %v1212 = vunpack.c.l.b16 %v1140
      %v1213 = vunpack.c.h.b16 %v1140
      %v1214 = vunpack.c.l.b16 %v1154
      %v1215 = vunpack.c.h.b16 %v1154
      %v1216 = vunpack.c.l.b16 %v1168
      %v1217 = vunpack.c.h.b16 %v1168
      %v1218 = vpack.c.b16 %v1204, %v1202
      %v1219 = vpack.c.b16 %v1205, %v1203
      %v1220 = vpack.c.b16 %v1208, %v1206
      %v1221 = vpack.c.b16 %v1209, %v1207
      %v1222 = vpack.c.b16 %v1212, %v1210
      %v1223 = vpack.c.b16 %v1213, %v1211
      %v1224 = vpack.c.b16 %v1216, %v1214
      %v1225 = vpack.c.b16 %v1217, %v1215
      %v1266 = vunpack.c.l.b16 %v1170
      %v1267 = vunpack.c.l.b16 %v1171
      %v1268 = vunpack.c.l.b16 %v1172
      %v1269 = vunpack.c.l.b16 %v1173
      %v1270 = vunpack.c.l.b16 %v1174
      %v1271 = vunpack.c.l.b16 %v1175
      %v1272 = vunpack.c.l.b16 %v1176
      %v1273 = vunpack.c.l.b16 %v1177
      %v1274 = vunpack.c.l.b16 %v1178
      %v1275 = vunpack.c.l.b16 %v1179
      %v1276 = vunpack.c.l.b16 %v1180
      %v1277 = vunpack.c.l.b16 %v1181
      %v1278 = vunpack.c.l.b16 %v1182
      %v1279 = vunpack.c.l.b16 %v1183
      %v1280 = vunpack.c.l.b16 %v1184
      %v1281 = vunpack.c.l.b16 %v1185
      %v1282 = vunpack.c.l.b16 %v1186
      %v1283 = vunpack.c.l.b16 %v1187
      %v1284 = vunpack.c.l.b16 %v1188
      %v1285 = vunpack.c.l.b16 %v1189
      %v1286 = vunpack.c.l.b16 %v1190
      %v1287 = vunpack.c.l.b16 %v1191
      %v1288 = vunpack.c.l.b16 %v1192
      %v1289 = vunpack.c.l.b16 %v1193
      %v1290 = vunpack.c.l.b16 %v1194
      %v1291 = vunpack.c.l.b16 %v1195
      %v1292 = vunpack.c.l.b16 %v1196
      %v1293 = vunpack.c.l.b16 %v1197
      %v1294 = vunpack.c.l.b16 %v1198
      %v1295 = vunpack.c.l.b16 %v1199
      %v1296 = vunpack.c.l.b16 %v1200
      %v1297 = vunpack.c.l.b16 %v1201
      %v1298 = vpack.c.b16 %v1267, %v1266
      %v1299 = vpack.c.b16 %v1269, %v1268
      %v1300 = vpack.c.b16 %v1271, %v1270
      %v1301 = vpack.c.b16 %v1273, %v1272
      %v1302 = vpack.c.b16 %v1275, %v1274
      %v1303 = vpack.c.b16 %v1277, %v1276
      %v1304 = vpack.c.b16 %v1279, %v1278
      %v1305 = vpack.c.b16 %v1281, %v1280
      %v1306 = vpack.c.b16 %v1283, %v1282
      %v1307 = vpack.c.b16 %v1285, %v1284
      %v1308 = vpack.c.b16 %v1287, %v1286
      %v1309 = vpack.c.b16 %v1289, %v1288
      %v1310 = vpack.c.b16 %v1291, %v1290
      %v1311 = vpack.c.b16 %v1293, %v1292
      %v1312 = vpack.c.b16 %v1295, %v1294
      %v1313 = vpack.c.b16 %v1297, %v1296
      %1330 = vmatprep.subr.bf16.mxu0 0
      %1331 = vmatpush1.bf16.msra.mxu0 %v1298
      %1332 = vmatprep.subr.bf16.mxu0 0
      %1333 = vmatpush1.bf16.msra.mxu0 %v1299
      %1334 = vmatprep.subr.bf16.mxu0 0
      %1335 = vmatpush1.bf16.msra.mxu0 %v1300
      %1336 = vmatprep.subr.bf16.mxu0 0
      %1337 = vmatpush1.bf16.msra.mxu0 %v1301
      %1338 = vmatprep.subr.bf16.mxu0 0
      %1339 = vmatpush1.bf16.msra.mxu0 %v1302
      %1340 = vmatprep.subr.bf16.mxu0 0
      %1341 = vmatpush1.bf16.msra.mxu0 %v1303
      %1342 = vmatprep.subr.bf16.mxu0 0
      %1343 = vmatpush1.bf16.msra.mxu0 %v1304
      %1344 = vmatprep.subr.bf16.mxu0 0
      %1345 = vmatpush1.bf16.msra.mxu0 %v1305
      %1346 = vmatprep.subr.bf16.mxu0 0
      %1347 = vmatpush1.bf16.msra.mxu0 %v1306
      %1348 = vmatprep.subr.bf16.mxu0 0
      %1349 = vmatpush1.bf16.msra.mxu0 %v1307
      %1350 = vmatprep.subr.bf16.mxu0 0
      %1351 = vmatpush1.bf16.msra.mxu0 %v1308
      %1352 = vmatprep.subr.bf16.mxu0 0
      %1353 = vmatpush1.bf16.msra.mxu0 %v1309
      %1354 = vmatprep.subr.bf16.mxu0 0
      %1355 = vmatpush1.bf16.msra.mxu0 %v1310
      %1356 = vmatprep.subr.bf16.mxu0 0
      %1357 = vmatpush1.bf16.msra.mxu0 %v1311
      %1358 = vmatprep.subr.bf16.mxu0 0
      %1359 = vmatpush1.bf16.msra.mxu0 %v1312
      %1360 = vmatprep.subr.bf16.mxu0 0
      %1361 = vmatpush1.bf16.msra.mxu0 %v1313
      %1362 = vmatprep.mubr.bf16.mxu0 %v1219
      %1363 = vmatmul.mubr.bf16.gmra.mrb[0].mxu0 %v1218
      %v1364 = vpop.f32.mrb[0].mxu0
      %v1365 = vadd.f32 0.0, %v1364
      %v1366 = vpop.f32.mrb[0].mxu0
      %v1367 = vpop.f32.mrb[0].mxu0
      %v1368 = vadd.f32 0.0, %v1367
      %v1369 = vpop.f32.mrb[0].mxu0
      %1370 = vmatprep.mubr.bf16.mxu0 %v1221
      %1371 = vmatmul.mubr.bf16.gmra.mrb[0].mxu0 %v1220
      %v1372 = vpop.f32.mrb[0].mxu0
      %v1373 = vadd.f32 0.0, %v1372
      %v1374 = vpop.f32.mrb[0].mxu0
      %v1375 = vpop.f32.mrb[0].mxu0
      %v1376 = vadd.f32 0.0, %v1375
      %v1377 = vpop.f32.mrb[0].mxu0
      %1378 = vmatprep.mubr.bf16.mxu0 %v1223
      %1379 = vmatmul.mubr.bf16.gmra.mrb[0].mxu0 %v1222
      %v1380 = vpop.f32.mrb[0].mxu0
      %v1381 = vadd.f32 0.0, %v1380
      %v1382 = vpop.f32.mrb[0].mxu0
      %v1383 = vpop.f32.mrb[0].mxu0
      %v1384 = vadd.f32 0.0, %v1383
      %v1385 = vpop.f32.mrb[0].mxu0
      %1386 = vmatprep.mubr.bf16.mxu0 %v1225
      %1387 = vmatmul.mubr.bf16.gmra.mrb[0].mxu0 %v1224
      %v1388 = vpop.f32.mrb[0].mxu0
      %v1389 = vadd.f32 0.0, %v1388
      %v1390 = vpop.f32.mrb[0].mxu0
      %v1391 = vpop.f32.mrb[0].mxu0
      %v1392 = vadd.f32 0.0, %v1391
      %v1393 = vpop.f32.mrb[0].mxu0
      %1394 = vdwg.mxu0
      %v1395 = vadd.f32 %v1033, %v1365
      %v1396 = vadd.f32 %v1034, %v1368
      %v1397 = vadd.f32 %v1035, %v1373
      %v1398 = vadd.f32 %v1036, %v1376
      %v1399 = vadd.f32 %v1037, %v1381
      %v1400 = vadd.f32 %v1038, %v1384
      %v1401 = vadd.f32 %v1039, %v1389
      %v1402 = vadd.f32 %v1040, %v1392
      %s1403 = scalar_lea.vmem %s192, 32
      %v1404 = vld [vmem:[%s1403] sm:$0xff]
      %v1405 = vld [vmem:[%s1403 + $0x20] sm:$0xff]
      %v1406 = vld [vmem:[%s1403 + $0x40] sm:$0xff]
      %v1407 = vld [vmem:[%s1403 + $0x60] sm:$0xff]
      %v1408 = vld [vmem:[%s1403 + $0x80] sm:$0xff]
      %v1409 = vld [vmem:[%s1403 + $0xa0] sm:$0xff]
      %v1410 = vld [vmem:[%s1403 + $0xc0] sm:$0xff]
      %v1411 = vld [vmem:[%s1403 + $0xe0] sm:$0xff]
      %s1412 = scalar_lea.vmem %s1, 512
      %v1413 = vld [vmem:[%s1412] sm:$0xf]
      %v1414 = vld [vmem:[%s1412 + $0x4] sm:$0xf]
      %v1415 = vld [vmem:[%s1412 + $0x8] sm:$0xf]
      %v1416 = vld [vmem:[%s1412 + $0xc] sm:$0xf]
      %v1417 = vld [vmem:[%s1412 + $0x10] sm:$0xf]
      %v1418 = vld [vmem:[%s1412 + $0x14] sm:$0xf]
      %v1419 = vld [vmem:[%s1412 + $0x18] sm:$0xf]
      %v1420 = vld [vmem:[%s1412 + $0x1c] sm:$0xf]
      %v1421 = vld [vmem:[%s1412 + $0x20] sm:$0xf]
      %v1422 = vld [vmem:[%s1412 + $0x24] sm:$0xf]
      %v1423 = vld [vmem:[%s1412 + $0x28] sm:$0xf]
      %v1424 = vld [vmem:[%s1412 + $0x2c] sm:$0xf]
      %v1425 = vld [vmem:[%s1412 + $0x30] sm:$0xf]
      %v1426 = vld [vmem:[%s1412 + $0x34] sm:$0xf]
      %v1427 = vld [vmem:[%s1412 + $0x38] sm:$0xf]
      %v1428 = vld [vmem:[%s1412 + $0x3c] sm:$0xf]
      %v1429 = vld [vmem:[%s1412 + $0x40] sm:$0xf]
      %v1430 = vld [vmem:[%s1412 + $0x44] sm:$0xf]
      %v1431 = vld [vmem:[%s1412 + $0x48] sm:$0xf]
      %v1432 = vld [vmem:[%s1412 + $0x4c] sm:$0xf]
      %v1433 = vld [vmem:[%s1412 + $0x50] sm:$0xf]
      %v1434 = vld [vmem:[%s1412 + $0x54] sm:$0xf]
      %v1435 = vld [vmem:[%s1412 + $0x58] sm:$0xf]
      %v1436 = vld [vmem:[%s1412 + $0x5c] sm:$0xf]
      %v1437 = vld [vmem:[%s1412 + $0x60] sm:$0xf]
      %v1438 = vld [vmem:[%s1412 + $0x64] sm:$0xf]
      %v1439 = vld [vmem:[%s1412 + $0x68] sm:$0xf]
      %v1440 = vld [vmem:[%s1412 + $0x6c] sm:$0xf]
      %v1441 = vld [vmem:[%s1412 + $0x70] sm:$0xf]
      %v1442 = vld [vmem:[%s1412 + $0x74] sm:$0xf]
      %v1443 = vld [vmem:[%s1412 + $0x78] sm:$0xf]
      %v1444 = vld [vmem:[%s1412 + $0x7c] sm:$0xf]
      %v1453 = vunpack.c.l.b16 %v1404
      %v1454 = vunpack.c.h.b16 %v1404
      %v1455 = vunpack.c.l.b16 %v1405
      %v1456 = vunpack.c.h.b16 %v1405
      %v1457 = vunpack.c.l.b16 %v1406
      %v1458 = vunpack.c.h.b16 %v1406
      %v1459 = vunpack.c.l.b16 %v1407
      %v1460 = vunpack.c.h.b16 %v1407
      %v1461 = vunpack.c.l.b16 %v1408
      %v1462 = vunpack.c.h.b16 %v1408
      %v1463 = vunpack.c.l.b16 %v1409
      %v1464 = vunpack.c.h.b16 %v1409
      %v1465 = vunpack.c.l.b16 %v1410
      %v1466 = vunpack.c.h.b16 %v1410
      %v1467 = vunpack.c.l.b16 %v1411
      %v1468 = vunpack.c.h.b16 %v1411
      %v1469 = vpack.c.b16 %v1455, %v1453
      %v1470 = vpack.c.b16 %v1456, %v1454
      %v1471 = vpack.c.b16 %v1459, %v1457
      %v1472 = vpack.c.b16 %v1460, %v1458
      %v1473 = vpack.c.b16 %v1463, %v1461
      %v1474 = vpack.c.b16 %v1464, %v1462
      %v1475 = vpack.c.b16 %v1467, %v1465
      %v1476 = vpack.c.b16 %v1468, %v1466
      %v1517 = vunpack.c.l.b16 %v1413
      %v1518 = vunpack.c.l.b16 %v1414
      %v1519 = vunpack.c.l.b16 %v1415
      %v1520 = vunpack.c.l.b16 %v1416
      %v1521 = vunpack.c.l.b16 %v1417
      %v1522 = vunpack.c.l.b16 %v1418
      %v1523 = vunpack.c.l.b16 %v1419
      %v1524 = vunpack.c.l.b16 %v1420
      %v1525 = vunpack.c.l.b16 %v1421
      %v1526 = vunpack.c.l.b16 %v1422
      %v1527 = vunpack.c.l.b16 %v1423
      %v1528 = vunpack.c.l.b16 %v1424
      %v1529 = vunpack.c.l.b16 %v1425
      %v1530 = vunpack.c.l.b16 %v1426
      %v1531 = vunpack.c.l.b16 %v1427
      %v1532 = vunpack.c.l.b16 %v1428
      %v1533 = vunpack.c.l.b16 %v1429
      %v1534 = vunpack.c.l.b16 %v1430
      %v1535 = vunpack.c.l.b16 %v1431
      %v1536 = vunpack.c.l.b16 %v1432
      %v1537 = vunpack.c.l.b16 %v1433
      %v1538 = vunpack.c.l.b16 %v1434
      %v1539 = vunpack.c.l.b16 %v1435
      %v1540 = vunpack.c.l.b16 %v1436
      %v1541 = vunpack.c.l.b16 %v1437
      %v1542 = vunpack.c.l.b16 %v1438
      %v1543 = vunpack.c.l.b16 %v1439
      %v1544 = vunpack.c.l.b16 %v1440
      %v1545 = vunpack.c.l.b16 %v1441
      %v1546 = vunpack.c.l.b16 %v1442
      %v1547 = vunpack.c.l.b16 %v1443
      %v1548 = vunpack.c.l.b16 %v1444
      %v1549 = vpack.c.b16 %v1518, %v1517
      %v1550 = vpack.c.b16 %v1520, %v1519
      %v1551 = vpack.c.b16 %v1522, %v1521
      %v1552 = vpack.c.b16 %v1524, %v1523
      %v1553 = vpack.c.b16 %v1526, %v1525
      %v1554 = vpack.c.b16 %v1528, %v1527
      %v1555 = vpack.c.b16 %v1530, %v1529
      %v1556 = vpack.c.b16 %v1532, %v1531
      %v1557 = vpack.c.b16 %v1534, %v1533
      %v1558 = vpack.c.b16 %v1536, %v1535
      %v1559 = vpack.c.b16 %v1538, %v1537
      %v1560 = vpack.c.b16 %v1540, %v1539
      %v1561 = vpack.c.b16 %v1542, %v1541
      %v1562 = vpack.c.b16 %v1544, %v1543
      %v1563 = vpack.c.b16 %v1546, %v1545
      %v1564 = vpack.c.b16 %v1548, %v1547
      %1581 = vmatprep.subr.bf16.mxu0 0
      %1582 = vmatpush1.bf16.msra.mxu0 %v1549
      %1583 = vmatprep.subr.bf16.mxu0 0
      %1584 = vmatpush1.bf16.msra.mxu0 %v1550
      %1585 = vmatprep.subr.bf16.mxu0 0
      %1586 = vmatpush1.bf16.msra.mxu0 %v1551
      %1587 = vmatprep.subr.bf16.mxu0 0
      %1588 = vmatpush1.bf16.msra.mxu0 %v1552
      %1589 = vmatprep.subr.bf16.mxu0 0
      %1590 = vmatpush1.bf16.msra.mxu0 %v1553
      %1591 = vmatprep.subr.bf16.mxu0 0
      %1592 = vmatpush1.bf16.msra.mxu0 %v1554
      %1593 = vmatprep.subr.bf16.mxu0 0
      %1594 = vmatpush1.bf16.msra.mxu0 %v1555
      %1595 = vmatprep.subr.bf16.mxu0 0
      %1596 = vmatpush1.bf16.msra.mxu0 %v1556
      %1597 = vmatprep.subr.bf16.mxu0 0
      %1598 = vmatpush1.bf16.msra.mxu0 %v1557
      %1599 = vmatprep.subr.bf16.mxu0 0
      %1600 = vmatpush1.bf16.msra.mxu0 %v1558
      %1601 = vmatprep.subr.bf16.mxu0 0
      %1602 = vmatpush1.bf16.msra.mxu0 %v1559
      %1603 = vmatprep.subr.bf16.mxu0 0
      %1604 = vmatpush1.bf16.msra.mxu0 %v1560
      %1605 = vmatprep.subr.bf16.mxu0 0
      %1606 = vmatpush1.bf16.msra.mxu0 %v1561
      %1607 = vmatprep.subr.bf16.mxu0 0
      %1608 = vmatpush1.bf16.msra.mxu0 %v1562
      %1609 = vmatprep.subr.bf16.mxu0 0
      %1610 = vmatpush1.bf16.msra.mxu0 %v1563
      %1611 = vmatprep.subr.bf16.mxu0 0
      %1612 = vmatpush1.bf16.msra.mxu0 %v1564
      %1613 = vmatprep.mubr.bf16.mxu0 %v1470
      %1614 = vmatmul.mubr.bf16.gmra.mrb[0].mxu0 %v1469
      %v1615 = vpop.f32.mrb[0].mxu0
      %v1616 = vadd.f32 0.0, %v1615
      %v1617 = vpop.f32.mrb[0].mxu0
      %v1618 = vpop.f32.mrb[0].mxu0
      %v1619 = vadd.f32 0.0, %v1618
      %v1620 = vpop.f32.mrb[0].mxu0
      %1621 = vmatprep.mubr.bf16.mxu0 %v1472
      %1622 = vmatmul.mubr.bf16.gmra.mrb[0].mxu0 %v1471
      %v1623 = vpop.f32.mrb[0].mxu0
      %v1624 = vadd.f32 0.0, %v1623
      %v1625 = vpop.f32.mrb[0].mxu0
      %v1626 = vpop.f32.mrb[0].mxu0
      %v1627 = vadd.f32 0.0, %v1626
      %v1628 = vpop.f32.mrb[0].mxu0
      %1629 = vmatprep.mubr.bf16.mxu0 %v1474
      %1630 = vmatmul.mubr.bf16.gmra.mrb[0].mxu0 %v1473
      %v1631 = vpop.f32.mrb[0].mxu0
      %v1632 = vadd.f32 0.0, %v1631
      %v1633 = vpop.f32.mrb[0].mxu0
      %v1634 = vpop.f32.mrb[0].mxu0
      %v1635 = vadd.f32 0.0, %v1634
      %v1636 = vpop.f32.mrb[0].mxu0
      %1637 = vmatprep.mubr.bf16.mxu0 %v1476
      %1638 = vmatmul.mubr.bf16.gmra.mrb[0].mxu0 %v1475
      %v1639 = vpop.f32.mrb[0].mxu0
      %v1640 = vadd.f32 0.0, %v1639
      %v1641 = vpop.f32.mrb[0].mxu0
      %v1642 = vpop.f32.mrb[0].mxu0
      %v1643 = vadd.f32 0.0, %v1642
      %v1644 = vpop.f32.mrb[0].mxu0
      %1645 = vdwg.mxu0
      %v1646 = vadd.f32 %v1395, %v1616
      %v1647 = vadd.f32 %v1396, %v1619
      %v1648 = vadd.f32 %v1397, %v1624
      %v1649 = vadd.f32 %v1398, %v1627
      %v1650 = vadd.f32 %v1399, %v1632
      %v1651 = vadd.f32 %v1400, %v1635
      %v1652 = vadd.f32 %v1401, %v1640
      %v1653 = vadd.f32 %v1402, %v1643
      %v1654 = vld [vmem:[%s1403] sm:$0xff]
      %v1655 = vld [vmem:[%s1403 + $0x8] sm:$0x11]
      %v1656 = vld [vmem:[%s1403 + $0x20] sm:$0xff]
      %v1657 = vld [vmem:[%s1403 + $0x28] sm:$0x11]
      %v1658 = vld [vmem:[%s1403 + $0x40] sm:$0xff]
      %v1659 = vld [vmem:[%s1403 + $0x48] sm:$0x11]
      %v1660 = vld [vmem:[%s1403 + $0x60] sm:$0xff]
      %v1661 = vld [vmem:[%s1403 + $0x68] sm:$0x11]
      %v1662 = vld [vmem:[%s1403 + $0x80] sm:$0xff]
      %v1663 = vld [vmem:[%s1403 + $0x88] sm:$0x11]
      %v1664 = vld [vmem:[%s1403 + $0xa0] sm:$0xff]
      %v1665 = vld [vmem:[%s1403 + $0xa8] sm:$0x11]
      %v1666 = vld [vmem:[%s1403 + $0xc0] sm:$0xff]
      %v1667 = vld [vmem:[%s1403 + $0xc8] sm:$0x11]
      %v1668 = vld [vmem:[%s1403 + $0xe0] sm:$0xff]
      %v1669 = vld [vmem:[%s1403 + $0xe8] sm:$0x11]
      %v1671 = vshrl.u32 %v1654, 16
      %v1673 = vrot.slane %v1671, 4
      %v1674 = vshll.u32 %v1654, 16
      %v1676 = vrot.slane %v1674, 5
      %v1677 = vor.u32 %v1673, %v1676
      %v1678 = vrot.slane %v1677, 4
      %v1680 = vshll.u32 %v1655, 16
      %v1682 = vrot.slane %v1680, 5
      %v1683 = vsel %vm250, %v1678, %v1682
      %v1685 = vshrl.u32 %v1656, 16
      %v1687 = vrot.slane %v1685, 4
      %v1688 = vshll.u32 %v1656, 16
      %v1690 = vrot.slane %v1688, 5
      %v1691 = vor.u32 %v1687, %v1690
      %v1692 = vrot.slane %v1691, 4
      %v1694 = vshll.u32 %v1657, 16
      %v1696 = vrot.slane %v1694, 5
      %v1697 = vsel %vm250, %v1692, %v1696
      %v1699 = vshrl.u32 %v1658, 16
      %v1701 = vrot.slane %v1699, 4
      %v1702 = vshll.u32 %v1658, 16
      %v1704 = vrot.slane %v1702, 5
      %v1705 = vor.u32 %v1701, %v1704
      %v1706 = vrot.slane %v1705, 4
      %v1708 = vshll.u32 %v1659, 16
      %v1710 = vrot.slane %v1708, 5
      %v1711 = vsel %vm250, %v1706, %v1710
      %v1713 = vshrl.u32 %v1660, 16
      %v1715 = vrot.slane %v1713, 4
      %v1716 = vshll.u32 %v1660, 16
      %v1718 = vrot.slane %v1716, 5
      %v1719 = vor.u32 %v1715, %v1718
      %v1720 = vrot.slane %v1719, 4
      %v1722 = vshll.u32 %v1661, 16
      %v1724 = vrot.slane %v1722, 5
      %v1725 = vsel %vm250, %v1720, %v1724
      %v1727 = vshrl.u32 %v1662, 16
      %v1729 = vrot.slane %v1727, 4
      %v1730 = vshll.u32 %v1662, 16
      %v1732 = vrot.slane %v1730, 5
      %v1733 = vor.u32 %v1729, %v1732
      %v1734 = vrot.slane %v1733, 4
      %v1736 = vshll.u32 %v1663, 16
      %v1738 = vrot.slane %v1736, 5
      %v1739 = vsel %vm250, %v1734, %v1738
      %v1741 = vshrl.u32 %v1664, 16
      %v1743 = vrot.slane %v1741, 4
      %v1744 = vshll.u32 %v1664, 16
      %v1746 = vrot.slane %v1744, 5
      %v1747 = vor.u32 %v1743, %v1746
      %v1748 = vrot.slane %v1747, 4
      %v1750 = vshll.u32 %v1665, 16
      %v1752 = vrot.slane %v1750, 5
      %v1753 = vsel %vm250, %v1748, %v1752
      %v1755 = vshrl.u32 %v1666, 16
      %v1757 = vrot.slane %v1755, 4
      %v1758 = vshll.u32 %v1666, 16
      %v1760 = vrot.slane %v1758, 5
      %v1761 = vor.u32 %v1757, %v1760
      %v1762 = vrot.slane %v1761, 4
      %v1764 = vshll.u32 %v1667, 16
      %v1766 = vrot.slane %v1764, 5
      %v1767 = vsel %vm250, %v1762, %v1766
      %v1769 = vshrl.u32 %v1668, 16
      %v1771 = vrot.slane %v1769, 4
      %v1772 = vshll.u32 %v1668, 16
      %v1774 = vrot.slane %v1772, 5
      %v1775 = vor.u32 %v1771, %v1774
      %v1776 = vrot.slane %v1775, 4
      %v1778 = vshll.u32 %v1669, 16
      %v1780 = vrot.slane %v1778, 5
      %v1781 = vsel %vm250, %v1776, %v1780
      %s1782 = scalar_lea.vmem %s1, 640
      %v1783 = vld [vmem:[%s1782] sm:$0xf]
      %v1784 = vld [vmem:[%s1782 + $0x4] sm:$0xf]
      %v1785 = vld [vmem:[%s1782 + $0x8] sm:$0xf]
      %v1786 = vld [vmem:[%s1782 + $0xc] sm:$0xf]
      %v1787 = vld [vmem:[%s1782 + $0x10] sm:$0xf]
      %v1788 = vld [vmem:[%s1782 + $0x14] sm:$0xf]
      %v1789 = vld [vmem:[%s1782 + $0x18] sm:$0xf]
      %v1790 = vld [vmem:[%s1782 + $0x1c] sm:$0xf]
      %v1791 = vld [vmem:[%s1782 + $0x20] sm:$0xf]
      %v1792 = vld [vmem:[%s1782 + $0x24] sm:$0xf]
      %v1793 = vld [vmem:[%s1782 + $0x28] sm:$0xf]
      %v1794 = vld [vmem:[%s1782 + $0x2c] sm:$0xf]
      %v1795 = vld [vmem:[%s1782 + $0x30] sm:$0xf]
      %v1796 = vld [vmem:[%s1782 + $0x34] sm:$0xf]
      %v1797 = vld [vmem:[%s1782 + $0x38] sm:$0xf]
      %v1798 = vld [vmem:[%s1782 + $0x3c] sm:$0xf]
      %v1799 = vld [vmem:[%s1782 + $0x40] sm:$0xf]
      %v1800 = vld [vmem:[%s1782 + $0x44] sm:$0xf]
      %v1801 = vld [vmem:[%s1782 + $0x48] sm:$0xf]
      %v1802 = vld [vmem:[%s1782 + $0x4c] sm:$0xf]
      %v1803 = vld [vmem:[%s1782 + $0x50] sm:$0xf]
      %v1804 = vld [vmem:[%s1782 + $0x54] sm:$0xf]
      %v1805 = vld [vmem:[%s1782 + $0x58] sm:$0xf]
      %v1806 = vld [vmem:[%s1782 + $0x5c] sm:$0xf]
      %v1807 = vld [vmem:[%s1782 + $0x60] sm:$0xf]
      %v1808 = vld [vmem:[%s1782 + $0x64] sm:$0xf]
      %v1809 = vld [vmem:[%s1782 + $0x68] sm:$0xf]
      %v1810 = vld [vmem:[%s1782 + $0x6c] sm:$0xf]
      %v1811 = vld [vmem:[%s1782 + $0x70] sm:$0xf]
      %v1812 = vld [vmem:[%s1782 + $0x74] sm:$0xf]
      %v1813 = vld [vmem:[%s1782 + $0x78] sm:$0xf]
      %v1814 = vld [vmem:[%s1782 + $0x7c] sm:$0xf]
      %v1815 = vunpack.c.l.b16 %v1683
      %v1816 = vunpack.c.h.b16 %v1683
      %v1817 = vunpack.c.l.b16 %v1697
      %v1818 = vunpack.c.h.b16 %v1697
      %v1819 = vunpack.c.l.b16 %v1711
      %v1820 = vunpack.c.h.b16 %v1711
      %v1821 = vunpack.c.l.b16 %v1725
      %v1822 = vunpack.c.h.b16 %v1725
      %v1823 = vunpack.c.l.b16 %v1739
      %v1824 = vunpack.c.h.b16 %v1739
      %v1825 = vunpack.c.l.b16 %v1753
      %v1826 = vunpack.c.h.b16 %v1753
      %v1827 = vunpack.c.l.b16 %v1767
      %v1828 = vunpack.c.h.b16 %v1767
      %v1829 = vunpack.c.l.b16 %v1781
      %v1830 = vunpack.c.h.b16 %v1781
      %v1831 = vpack.c.b16 %v1817, %v1815
      %v1832 = vpack.c.b16 %v1818, %v1816
      %v1833 = vpack.c.b16 %v1821, %v1819
      %v1834 = vpack.c.b16 %v1822, %v1820
      %v1835 = vpack.c.b16 %v1825, %v1823
      %v1836 = vpack.c.b16 %v1826, %v1824
      %v1837 = vpack.c.b16 %v1829, %v1827
      %v1838 = vpack.c.b16 %v1830, %v1828
      %v1879 = vunpack.c.l.b16 %v1783
      %v1880 = vunpack.c.l.b16 %v1784
      %v1881 = vunpack.c.l.b16 %v1785
      %v1882 = vunpack.c.l.b16 %v1786
      %v1883 = vunpack.c.l.b16 %v1787
      %v1884 = vunpack.c.l.b16 %v1788
      %v1885 = vunpack.c.l.b16 %v1789
      %v1886 = vunpack.c.l.b16 %v1790
      %v1887 = vunpack.c.l.b16 %v1791
      %v1888 = vunpack.c.l.b16 %v1792
      %v1889 = vunpack.c.l.b16 %v1793
      %v1890 = vunpack.c.l.b16 %v1794
      %v1891 = vunpack.c.l.b16 %v1795
      %v1892 = vunpack.c.l.b16 %v1796
      %v1893 = vunpack.c.l.b16 %v1797
      %v1894 = vunpack.c.l.b16 %v1798
      %v1895 = vunpack.c.l.b16 %v1799
      %v1896 = vunpack.c.l.b16 %v1800
      %v1897 = vunpack.c.l.b16 %v1801
      %v1898 = vunpack.c.l.b16 %v1802
      %v1899 = vunpack.c.l.b16 %v1803
      %v1900 = vunpack.c.l.b16 %v1804
      %v1901 = vunpack.c.l.b16 %v1805
      %v1902 = vunpack.c.l.b16 %v1806
      %v1903 = vunpack.c.l.b16 %v1807
      %v1904 = vunpack.c.l.b16 %v1808
      %v1905 = vunpack.c.l.b16 %v1809
      %v1906 = vunpack.c.l.b16 %v1810
      %v1907 = vunpack.c.l.b16 %v1811
      %v1908 = vunpack.c.l.b16 %v1812
      %v1909 = vunpack.c.l.b16 %v1813
      %v1910 = vunpack.c.l.b16 %v1814
      %v1911 = vpack.c.b16 %v1880, %v1879
      %v1912 = vpack.c.b16 %v1882, %v1881
      %v1913 = vpack.c.b16 %v1884, %v1883
      %v1914 = vpack.c.b16 %v1886, %v1885
      %v1915 = vpack.c.b16 %v1888, %v1887
      %v1916 = vpack.c.b16 %v1890, %v1889
      %v1917 = vpack.c.b16 %v1892, %v1891
      %v1918 = vpack.c.b16 %v1894, %v1893
      %v1919 = vpack.c.b16 %v1896, %v1895
      %v1920 = vpack.c.b16 %v1898, %v1897
      %v1921 = vpack.c.b16 %v1900, %v1899
      %v1922 = vpack.c.b16 %v1902, %v1901
      %v1923 = vpack.c.b16 %v1904, %v1903
      %v1924 = vpack.c.b16 %v1906, %v1905
      %v1925 = vpack.c.b16 %v1908, %v1907
      %v1926 = vpack.c.b16 %v1910, %v1909
      %1943 = vmatprep.subr.bf16.mxu0 0
      %1944 = vmatpush1.bf16.msra.mxu0 %v1911
      %1945 = vmatprep.subr.bf16.mxu0 0
      %1946 = vmatpush1.bf16.msra.mxu0 %v1912
      %1947 = vmatprep.subr.bf16.mxu0 0
      %1948 = vmatpush1.bf16.msra.mxu0 %v1913
      %1949 = vmatprep.subr.bf16.mxu0 0
      %1950 = vmatpush1.bf16.msra.mxu0 %v1914
      %1951 = vmatprep.subr.bf16.mxu0 0
      %1952 = vmatpush1.bf16.msra.mxu0 %v1915
      %1953 = vmatprep.subr.bf16.mxu0 0
      %1954 = vmatpush1.bf16.msra.mxu0 %v1916
      %1955 = vmatprep.subr.bf16.mxu0 0
      %1956 = vmatpush1.bf16.msra.mxu0 %v1917
      %1957 = vmatprep.subr.bf16.mxu0 0
      %1958 = vmatpush1.bf16.msra.mxu0 %v1918
      %1959 = vmatprep.subr.bf16.mxu0 0
      %1960 = vmatpush1.bf16.msra.mxu0 %v1919
      %1961 = vmatprep.subr.bf16.mxu0 0
      %1962 = vmatpush1.bf16.msra.mxu0 %v1920
      %1963 = vmatprep.subr.bf16.mxu0 0
      %1964 = vmatpush1.bf16.msra.mxu0 %v1921
      %1965 = vmatprep.subr.bf16.mxu0 0
      %1966 = vmatpush1.bf16.msra.mxu0 %v1922
      %1967 = vmatprep.subr.bf16.mxu0 0
      %1968 = vmatpush1.bf16.msra.mxu0 %v1923
      %1969 = vmatprep.subr.bf16.mxu0 0
      %1970 = vmatpush1.bf16.msra.mxu0 %v1924
      %1971 = vmatprep.subr.bf16.mxu0 0
      %1972 = vmatpush1.bf16.msra.mxu0 %v1925
      %1973 = vmatprep.subr.bf16.mxu0 0
      %1974 = vmatpush1.bf16.msra.mxu0 %v1926
      %1975 = vmatprep.mubr.bf16.mxu0 %v1832
      %1976 = vmatmul.mubr.bf16.gmra.mrb[0].mxu0 %v1831
      %v1977 = vpop.f32.mrb[0].mxu0
      %v1978 = vadd.f32 0.0, %v1977
      %v1979 = vpop.f32.mrb[0].mxu0
      %v1980 = vpop.f32.mrb[0].mxu0
      %v1981 = vadd.f32 0.0, %v1980
      %v1982 = vpop.f32.mrb[0].mxu0
      %1983 = vmatprep.mubr.bf16.mxu0 %v1834
      %1984 = vmatmul.mubr.bf16.gmra.mrb[0].mxu0 %v1833
      %v1985 = vpop.f32.mrb[0].mxu0
      %v1986 = vadd.f32 0.0, %v1985
      %v1987 = vpop.f32.mrb[0].mxu0
      %v1988 = vpop.f32.mrb[0].mxu0
      %v1989 = vadd.f32 0.0, %v1988
      %v1990 = vpop.f32.mrb[0].mxu0
      %1991 = vmatprep.mubr.bf16.mxu0 %v1836
      %1992 = vmatmul.mubr.bf16.gmra.mrb[0].mxu0 %v1835
      %v1993 = vpop.f32.mrb[0].mxu0
      %v1994 = vadd.f32 0.0, %v1993
      %v1995 = vpop.f32.mrb[0].mxu0
      %v1996 = vpop.f32.mrb[0].mxu0
      %v1997 = vadd.f32 0.0, %v1996
      %v1998 = vpop.f32.mrb[0].mxu0
      %1999 = vmatprep.mubr.bf16.mxu0 %v1838
      %2000 = vmatmul.mubr.bf16.gmra.mrb[0].mxu0 %v1837
      %v2001 = vpop.f32.mrb[0].mxu0
      %v2002 = vadd.f32 0.0, %v2001
      %v2003 = vpop.f32.mrb[0].mxu0
      %v2004 = vpop.f32.mrb[0].mxu0
      %v2005 = vadd.f32 0.0, %v2004
      %v2006 = vpop.f32.mrb[0].mxu0
      %2007 = vdwg.mxu0
      %v2008 = vadd.f32 %v1646, %v1978
      %v2009 = vadd.f32 %v1647, %v1981
      %v2010 = vadd.f32 %v1648, %v1986
      %v2011 = vadd.f32 %v1649, %v1989
      %v2012 = vadd.f32 %v1650, %v1994
      %v2013 = vadd.f32 %v1651, %v1997
      %v2014 = vadd.f32 %v1652, %v2002
      %v2015 = vadd.f32 %v1653, %v2005
      %v2016 = vld [vmem:[%s2] sm:$0x1]
      %v2018 = vlaneseq
      %v2019 = vshrl.u32 %v2018, 7
      %v2020 = vsub.s32 0, %v2019
      %v2021 = vrot.slane %v2016, %v2020
      %v2023 = vmul.f32 %v2008, %v2021
      %v2024 = vmul.f32 %v2009, %v2021
      %v2025 = vmul.f32 %v2010, %v2021
      %v2026 = vmul.f32 %v2011, %v2021
      %v2027 = vmul.f32 %v2012, %v2021
      %v2028 = vmul.f32 %v2013, %v2021
      %v2029 = vmul.f32 %v2014, %v2021
      %v2030 = vmul.f32 %v2015, %v2021
      %v2031 = vld [vmem:[%s3] sm:$0x1]
      %v2033 = vlaneseq
      %v2034 = vshrl.u32 %v2033, 7
      %v2035 = vsub.s32 0, %v2034
      %v2036 = vrot.slane %v2031, %v2035
      %v2038 = vadd.f32 %v2023, %v2036
      %v2039 = vadd.f32 %v2024, %v2036
      %v2040 = vadd.f32 %v2025, %v2036
      %v2041 = vadd.f32 %v2026, %v2036
      %v2042 = vadd.f32 %v2027, %v2036
      %v2043 = vadd.f32 %v2028, %v2036
      %v2044 = vadd.f32 %v2029, %v2036
      %v2045 = vadd.f32 %v2030, %v2036
      %v2046 = vmax.f32 %v2038, 0.0
      %v2047 = vmax.f32 %v2039, 0.0
      %v2048 = vmax.f32 %v2040, 0.0
      %v2049 = vmax.f32 %v2041, 0.0
      %v2050 = vmax.f32 %v2042, 0.0
      %v2051 = vmax.f32 %v2043, 0.0
      %v2052 = vmax.f32 %v2044, 0.0
      %v2053 = vmax.f32 %v2045, 0.0
      %v2054 = vpack.c.bf16 %v2047, %v2046
      %v2055 = vpack.c.bf16 %v2049, %v2048
      %v2056 = vpack.c.bf16 %v2051, %v2050
      %v2057 = vpack.c.bf16 %v2053, %v2052
      %v2062 = vunpack.c.l.b16 %v2054
      %v2063 = vunpack.c.h.b16 %v2054
      %v2064 = vunpack.c.l.b16 %v2055
      %v2065 = vunpack.c.h.b16 %v2055
      %v2066 = vunpack.c.l.b16 %v2056
      %v2067 = vunpack.c.h.b16 %v2056
      %v2068 = vunpack.c.l.b16 %v2057
      %v2069 = vunpack.c.h.b16 %v2057
      %v2070 = vpack.c.b16 %v2062, %v2062
      %v2071 = vpack.c.b16 %v2063, %v2063
      %v2072 = vpack.c.b16 %v2064, %v2064
      %v2073 = vpack.c.b16 %v2065, %v2065
      %v2074 = vpack.c.b16 %v2066, %v2066
      %v2075 = vpack.c.b16 %v2067, %v2067
      %v2076 = vpack.c.b16 %v2068, %v2068
      %v2077 = vpack.c.b16 %v2069, %v2069
      %2086 = vst [vmem:[%s197] sm:$0xf] %v2070
      %2087 = vst [vmem:[%s197 + $0x4] sm:$0xf] %v2071
      %2088 = vst [vmem:[%s197 + $0x8] sm:$0xf] %v2072
      %2089 = vst [vmem:[%s197 + $0xc] sm:$0xf] %v2073
      %2090 = vst [vmem:[%s197 + $0x10] sm:$0xf] %v2074
      %2091 = vst [vmem:[%s197 + $0x14] sm:$0xf] %v2075
      %2092 = vst [vmem:[%s197 + $0x18] sm:$0xf] %v2076
      %2093 = vst [vmem:[%s197 + $0x1c] sm:$0xf] %v2077
      %s2094 = smul.u32 8, %s15
      %p2095 = scmp.lt.s32.totalorder %s2094, 15
      %s2096 = scalar_select %p2095, %s2094, 15
      %s2097 = smul.addr %s2096, 4
      %s2098 = scalar_lea.vmem %s4, %s2097
      // Predicated region
      $region37: #{bottleneck_forward.4} parent=35 // pred_check
        %p2099 = pneg %p122
      $region38: #{bottleneck_forward.4} parent=35 // pred_check_branch
        %2101 = sbr.rel (%p2099) target = $region40
      $region39: #{bottleneck_forward.4} parent=35 // pred_region
        %s2102 = smul.u32 8, %s15
      $region40: #{bottleneck_forward.4} parent=35 // pred_fallthru
        _
    $region36: #{bottleneck_forward.4} parent=5 // pred_fallthru
      _
    %p2103 = scmp.le.s32.totalorder 2, %s10
    // Predicated region
    $region41: #{bottleneck_forward.4} parent=5 // pred_check
      %p2104 = pneg %p2103
    $region42: #{bottleneck_forward.4} parent=5 // pred_check_branch
      %2106 = sbr.rel (%p2104) target = $region44
    $region43: #{bottleneck_forward.4} parent=5 // pred_region
      %s2107 = ssub.s32 %s10, 2
      // Predicated region
      $region45: #{bottleneck_forward.4} parent=43 // pred_check
        %p2108 = pneg %p128
      $region46: #{bottleneck_forward.4} parent=43 // pred_check_branch
        %2110 = sbr.rel (%p2108) target = $region48
      $region47: #{bottleneck_forward.4} parent=43 // pred_region
        %s2111 = smul.u32 8, %s16
        %p2112 = scmp.lt.s32.totalorder %s2111, 15
        %s2113 = scalar_select %p2112, %s2111, 15
        %s2114 = smul.addr %s2113, 4
        %s2115 = scalar_lea.vmem %s4, %s2114
      $region48: #{bottleneck_forward.4} parent=43 // pred_fallthru
        _
    $region44: #{bottleneck_forward.4} parent=5 // pred_fallthru
      _
  $region6: #{bottleneck_forward.4} parent=0 // loop_footer
    %s14 = sadd.s32 1, %s10
  $region7: #{bottleneck_forward.4} parent=0 // loop_footer_branch
    %9 = sbr.rel target = $region3
  $region8: #{bottleneck_forward.4} parent=0 // loop_exit
    _

</llo_original>
